<compile_context>
chip_gen: v6e
topology: v6e:2x2x1
jax: 0.10.0
libtpu: 0.0.40
codegen_flags: <defaults>
</compile_context>

<pallas_src>
import functools

import jax
import jax.numpy as jnp
from jax.experimental import pallas as pl
from jax.experimental.pallas import tpu as pltpu  # noqa: F401  (TPU tuning hooks)

# ----- scaled-down hyperparameters (consistent with the module) -----
VOCAB_SIZE = 65          # len(chars) for the Shakespeare charset
VOCAB_PAD  = 128         # lane-dense logits; sliced back to 65 in the wrapper
N_EMBD     = 32
N_HEAD     = 4
HEAD_SIZE  = N_EMBD // N_HEAD
BLOCK_SIZE = 16
N_LAYER    = 2
LN_EPS     = 1e-5

# rows of the packed small-vector slab (one (128,)-wide row per vector)
R_LN1G, R_LN1B, R_BO, R_LN2G, R_LN2B, R_B1, R_B2 = range(7)
VEC_ROWS_PER_LAYER = 7
R_LNFG = N_LAYER * VEC_ROWS_PER_LAYER
R_LNFB = R_LNFG + 1
R_BLM  = R_LNFG + 2
VEC_ROWS = R_BLM + 1


def _layernorm(x, g, b):
    mu = jnp.mean(x, axis=-1, keepdims=True)
    var = jnp.mean((x - mu) ** 2, axis=-1, keepdims=True)
    return (x - mu) * jax.lax.rsqrt(var + LN_EPS) * g + b


# ---------------- fused Pallas kernel (whole forward pass) ----------------
def fused_forward_kernel(idx_ref, tok_ref, pos_ref, wqkv_ref, wo_ref,
                         w1_ref, w2_ref, wlm_ref, vecs_ref,
                         o_ref, *, batch, seq):
    M = batch * seq                                  # fold B and T into one matmul M dim

    def vec(row, n=N_EMBD):
        return vecs_ref[row][:n]

    # --- token embedding as a one-hot matmul (MXU) + in-kernel positional add ---
    # NOTE: token ids >= VOCAB_SIZE would silently hit the zero-padded rows of
    # the table (zero embedding) rather than raising, like the one-hot gather.
    vocab_iota = jax.lax.broadcasted_iota(jnp.int32, (M, VOCAB_PAD), 1)
    onehot = (vocab_iota == idx_ref[...]).astype(jnp.float32)            # (M, 128)
    pos_full = jnp.concatenate([pos_ref[:seq]] * batch, axis=0)          # (M, C)
    x = jnp.dot(onehot, tok_ref[...], preferred_element_type=jnp.float32) + pos_full

    # --- block-diagonal causal ADDITIVE bias over flattened B*T rows, built ONCE ---
    ri = jax.lax.broadcasted_iota(jnp.int32, (M, M), 0)
    ci = jax.lax.broadcasted_iota(jnp.int32, (M, M), 1)
    if (seq & (seq - 1)) == 0:                       # power-of-two T: shift, no int divide
        sh = seq.bit_length() - 1
        same_batch = (ri >> sh) == (ci >> sh)
    else:
        same_batch = (ri // seq) == (ci // seq)
    bias = jnp.where(same_batch & (ci <= ri), 0.0, -1e30).astype(jnp.float32)  # (M, M)

    for l in range(N_LAYER):                         # unrolled; weights stay VMEM-resident
        base = l * VEC_ROWS_PER_LAYER
        # ----- multi-head causal self-attention -----
        xn = _layernorm(x, vec(base + R_LN1G), vec(base + R_LN1B))
        # ONE fused (M,C)@(C,128) matmul: [q*scale | k | v] (scale folded at pack time)
        qkv = jnp.dot(xn, wqkv_ref[l], preferred_element_type=jnp.float32)   # (M, 128)
        q = qkv[:, 0 * N_EMBD:1 * N_EMBD].reshape(M, N_HEAD, HEAD_SIZE)
        k = qkv[:, 1 * N_EMBD:2 * N_EMBD].reshape(M, N_HEAD, HEAD_SIZE)
        v = qkv[:, 2 * N_EMBD:3 * N_EMBD].reshape(M, N_HEAD, HEAD_SIZE)
        s = jnp.einsum('qhd,khd->hqk', q, k,
                       preferred_element_type=jnp.float32) + bias[None]      # (H, M, M)
        s = s - jnp.max(s, axis=-1, keepdims=True)
        e = jnp.exp(s)
        wei = e * pl.reciprocal(jnp.sum(e, axis=-1, keepdims=True), approx=True)
        # attention dropout is identity in eval mode
        oh = jnp.einsum('hqk,khd->qhd', wei, v,
                        preferred_element_type=jnp.float32)                  # (M, H, HS)
        # head concat is a reshape; output projection is ONE (M,C)@(C,C) matmul
        sa = jnp.dot(oh.reshape(M, N_EMBD), wo_ref[l],
                     preferred_element_type=jnp.float32) + vec(base + R_BO)
        x = x + sa                                   # residual 1

        # ----- feed-forward -----
        xn2 = _layernorm(x, vec(base + R_LN2G), vec(base + R_LN2B))
        h = jnp.dot(xn2, w1_ref[l], preferred_element_type=jnp.float32) \
            + vec(base + R_B1, 4 * N_EMBD)
        h = jnp.maximum(h, 0.0)
        x = x + jnp.dot(h, w2_ref[l], preferred_element_type=jnp.float32) \
            + vec(base + R_B2)                       # residual 2 (FFN dropout = identity)

    # ----- final layernorm + lm head (lane-dense 128-wide output) -----
    xn = _layernorm(x, vec(R_LNFG), vec(R_LNFB))
    o_ref[...] = (jnp.dot(xn, wlm_ref[...], preferred_element_type=jnp.float32)
                  + vec(R_BLM, VOCAB_PAD))


# ---------------- parameter packing for the fused kernel ----------------
def pack_params(p):
    pad_v = VOCAB_PAD - VOCAB_SIZE
    blocks = p["blocks"]
    scale = N_EMBD ** (-0.5)     # reference scales scores by n_embd (C), not head_size

    def row128(v):
        v = v.reshape(-1)
        return jnp.pad(v, (0, 128 - v.shape[0]))

    wqkv = []
    for b in blocks:
        w = jnp.concatenate([b["wq"] * scale, b["wk"], b["wv"]], axis=1)   # (C, 3C)
        wqkv.append(jnp.pad(w, ((0, 0), (0, 128 - 3 * N_EMBD))))           # (C, 128)
    wqkv = jnp.stack(wqkv)                                                 # (L, C, 128)

    rows = []
    for b in blocks:
        rows += [row128(b["ln1g"]), row128(b["ln1b"]), row128(b["bo"]),
                 row128(b["ln2g"]), row128(b["ln2b"]), row128(b["b1"]),
                 row128(b["b2"])]
    rows += [row128(p["lnfg"]), row128(p["lnfb"]), row128(p["blm"])]
    vecs = jnp.stack(rows)                                                 # (17, 128)
    assert vecs.shape == (VEC_ROWS, 128)

    return {
        "tok":  jnp.pad(p["tok_table"], ((0, pad_v), (0, 0))),             # (128, C)
        "pos":  p["pos_table"],                                            # (BLOCK_SIZE, C)
        "wqkv": wqkv,                                                      # (L, C, 128)
        "wo":   jnp.stack([b["wo"] for b in blocks]),                      # (L, C, C)
        "w1":   jnp.stack([b["w1"] for b in blocks]),                      # (L, C, 4C)
        "w2":   jnp.stack([b["w2"] for b in blocks]),                      # (L, 4C, C)
        "wlm":  jnp.pad(p["wlm"], ((0, 0), (0, pad_v))),                   # (C, 128)
        "vecs": vecs,                                                      # (17, 128)
    }


# ---------------- wrapper: single pallas_call for the whole forward ----------------
@jax.jit
def forward(idx, pp):
    """BigramLanguageModel.forward with targets=None -> logits (B, T, vocab)."""
    B, T = idx.shape
    M = B * T
    idx_col = idx.reshape(M, 1).astype(jnp.int32)
    kernel = functools.partial(fused_forward_kernel, batch=B, seq=T)
    # TODO(synk): if B*T scales up, add a ("parallel",) grid over the M dim
    # (>=128-row blocks) to use both v7x TensorCores and a per-batch (T,T) mask.
    logits_p = pl.pallas_call(
        kernel,
        out_shape=jax.ShapeDtypeStruct((M, VOCAB_PAD), jnp.float32),
    )(idx_col, pp["tok"], pp["pos"], pp["wqkv"], pp["wo"],
      pp["w1"], pp["w2"], pp["wlm"], pp["vecs"])
    return logits_p[:, :VOCAB_SIZE].reshape(B, T, VOCAB_SIZE)


# ---------------- deterministic parameter init ----------------
def init_params(key):
    def nrm(k, shape, s=0.02):
        return s * jax.random.normal(k, shape, dtype=jnp.float32)

    keys = jax.random.split(key, 4 + N_LAYER)
    params = {
        "tok_table": nrm(keys[0], (VOCAB_SIZE, N_EMBD)),
        "pos_table": nrm(keys[1], (BLOCK_SIZE, N_EMBD)),
        "lnfg": jnp.ones((1, N_EMBD), jnp.float32),
        "lnfb": jnp.zeros((1, N_EMBD), jnp.float32),
        "wlm": nrm(keys[2], (N_EMBD, VOCAB_SIZE)),
        "blm": jnp.zeros((1, VOCAB_SIZE), jnp.float32),
        "blocks": [],
    }
    for l in range(N_LAYER):
        bk = jax.random.split(keys[4 + l], 8)
        params["blocks"].append({
            "ln1g": jnp.ones((1, N_EMBD), jnp.float32),
            "ln1b": jnp.zeros((1, N_EMBD), jnp.float32),
            "wq": nrm(bk[0], (N_EMBD, N_EMBD)),
            "wk": nrm(bk[1], (N_EMBD, N_EMBD)),
            "wv": nrm(bk[2], (N_EMBD, N_EMBD)),
            "wo": nrm(bk[3], (N_EMBD, N_EMBD)),
            "bo": jnp.zeros((1, N_EMBD), jnp.float32),
            "ln2g": jnp.ones((1, N_EMBD), jnp.float32),
            "ln2b": jnp.zeros((1, N_EMBD), jnp.float32),
            "w1": nrm(bk[4], (N_EMBD, 4 * N_EMBD)),
            "b1": jnp.zeros((1, 4 * N_EMBD), jnp.float32),
            "w2": nrm(bk[5], (4 * N_EMBD, N_EMBD)),
            "b2": jnp.zeros((1, N_EMBD), jnp.float32),
        })
    return params


# ---------------- pure-JAX reference (for correctness check) ----------------
def _ln_ref(x, g, b):
    mu = x.mean(-1, keepdims=True)
    var = ((x - mu) ** 2).mean(-1, keepdims=True)
    return (x - mu) / jnp.sqrt(var + LN_EPS) * g + b


def ref_forward(idx, params):
    B, T = idx.shape
    x = jnp.take(params["tok_table"], idx, axis=0) + params["pos_table"][:T][None]
    mask = jnp.tril(jnp.ones((T, T), bool))
    for p in params["blocks"]:
        xn = _ln_ref(x, p["ln1g"][0], p["ln1b"][0])
        q = xn @ p["wq"]; k = xn @ p["wk"]; v = xn @ p["wv"]
        qh = q.reshape(B, T, N_HEAD, HEAD_SIZE).transpose(0, 2, 1, 3)
        kh = k.reshape(B, T, N_HEAD, HEAD_SIZE).transpose(0, 2, 1, 3)
        vh = v.reshape(B, T, N_HEAD, HEAD_SIZE).transpose(0, 2, 1, 3)
        wei = jnp.einsum("bhqd,bhkd->bhqk", qh, kh) * (N_EMBD ** -0.5)
        wei = jnp.where(mask, wei, -jnp.inf)
        wei = jax.nn.softmax(wei, -1)
        out = jnp.einsum("bhqk,bhkd->bhqd", wei, vh)
        out = out.transpose(0, 2, 1, 3).reshape(B, T, N_EMBD)
        x = x + out @ p["wo"] + p["bo"][0]
        xn2 = _ln_ref(x, p["ln2g"][0], p["ln2b"][0])
        h = jnp.maximum(xn2 @ p["w1"] + p["b1"][0], 0.0)
        x = x + h @ p["w2"] + p["b2"][0]
    x = _ln_ref(x, params["lnfg"][0], params["lnfb"][0])
    return x @ params["wlm"] + params["blm"][0]


if __name__ == "__main__":
    # TODO(synk): training-mode dropout, the cross-entropy loss path (targets != None),
    # and generate()'s torch.multinomial sampling are not implemented; this is the
    # eval-mode forward pass (targets=None).
    key = jax.random.PRNGKey(0)
    k_params, k_idx = jax.random.split(key)
    params = init_params(k_params)
    packed = pack_params(params)

    B, T = 2, BLOCK_SIZE
    idx = jax.random.randint(k_idx, (B, T), 0, VOCAB_SIZE, dtype=jnp.int32)

    logits = forward(idx, packed)
    logits = jax.block_until_ready(logits)

    ref = ref_forward(idx, params)
    assert logits.shape == (B, T, VOCAB_SIZE)
    # approx EUP reciprocal in the softmax -> slightly looser tolerance than exact divide
    assert jnp.allclose(logits, ref, atol=1e-3, rtol=1e-3), float(jnp.max(jnp.abs(logits - ref)))

    print("KERNEL_OK")
</pallas_src>

<mosaic_0001>
module attributes {stable_mosaic.version = 11 : i64} {
  func.func @fused_forward_kernel(%arg0: memref<32x1xi32, #tpu.memory_space<vmem>>, %arg1: memref<128x32xf32, #tpu.memory_space<vmem>>, %arg2: memref<16x32xf32, #tpu.memory_space<vmem>>, %arg3: memref<2x32x128xf32, #tpu.memory_space<vmem>>, %arg4: memref<2x32x32xf32, #tpu.memory_space<vmem>>, %arg5: memref<2x32x128xf32, #tpu.memory_space<vmem>>, %arg6: memref<2x128x32xf32, #tpu.memory_space<vmem>>, %arg7: memref<32x128xf32, #tpu.memory_space<vmem>>, %arg8: memref<17x128xf32, #tpu.memory_space<vmem>>, %arg9: memref<32x128xf32, #tpu.memory_space<vmem>>) attributes {dimension_semantics = [], scalar_prefetch = 0 : i64, scratch_operands = 0 : i64, tpu.core_type = #tpu.core_type<tc>} {
    %0 = tpu.iota {dimensions = array<i32: 1>} : vector<32x128xi32>
    %c0 = arith.constant 0 : index
    %c0_0 = arith.constant 0 : index
    %1 = vector.load %arg0[%c0, %c0_0] : memref<32x1xi32, #tpu.memory_space<vmem>>, vector<32x1xi32>
    %2 = vector.broadcast %1 : vector<32x1xi32> to vector<32x128xi32>
    %3 = arith.cmpi eq, %0, %2 : vector<32x128xi32>
    %4 = arith.extui %3 : vector<32x128xi1> to vector<32x128xi32>
    %5 = arith.sitofp %4 : vector<32x128xi32> to vector<32x128xf32>
    %c0_1 = arith.constant 0 : index
    %c0_2 = arith.constant 0 : index
    %6 = vector.load %arg2[%c0_1, %c0_2] : memref<16x32xf32, #tpu.memory_space<vmem>>, vector<16x32xf32>
    %7 = tpu.concatenate %6, %6 in 0 : vector<16x32xf32>, vector<16x32xf32> -> vector<32x32xf32>
    %c0_3 = arith.constant 0 : index
    %c0_4 = arith.constant 0 : index
    %8 = vector.load %arg1[%c0_3, %c0_4] : memref<128x32xf32, #tpu.memory_space<vmem>>, vector<128x32xf32>
    %cst = arith.constant dense<0.000000e+00> : vector<32x32xf32>
    %9 = tpu.matmul %5, %8, %cst {dimension_numbers = #tpu.dot_dimension_numbers<[1], [0], [0], [1], [0, 0, 1, 1], [], []>} : vector<32x128xf32>, vector<128x32xf32>, vector<32x32xf32> -> vector<32x32xf32>
    %10 = arith.addf %9, %7 : vector<32x32xf32>
    %11 = tpu.iota {dimensions = array<i32: 0>} : vector<32x32xi32>
    %12 = tpu.iota {dimensions = array<i32: 1>} : vector<32x32xi32>
    %c4_i32 = arith.constant 4 : i32
    %13 = vector.broadcast %c4_i32 : i32 to vector<32x32xi32>
    %14 = arith.shrsi %11, %13 : vector<32x32xi32>
    %c4_i32_5 = arith.constant 4 : i32
    %15 = vector.broadcast %c4_i32_5 : i32 to vector<32x32xi32>
    %16 = arith.shrsi %12, %15 : vector<32x32xi32>
    %17 = arith.cmpi eq, %14, %16 : vector<32x32xi32>
    %18 = arith.cmpi sle, %12, %11 : vector<32x32xi32>
    %19 = arith.andi %17, %18 : vector<32x32xi1>
    %cst_6 = arith.constant 0.000000e+00 : f32
    %cst_7 = arith.constant -1.000000e+30 : f32
    %20 = vector.broadcast %cst_6 : f32 to vector<32x32xf32>
    %21 = vector.broadcast %cst_7 : f32 to vector<32x32xf32>
    %22 = arith.select %19, %20, %21 : vector<32x32xi1>, vector<32x32xf32>
    %c0_8 = arith.constant 0 : index
    %c0_9 = arith.constant 0 : index
    %23 = vector.load %arg8[%c0_8, %c0_9] : memref<17x128xf32, #tpu.memory_space<vmem>>, vector<1x128xf32>
    %24 = vector.shape_cast %23 : vector<1x128xf32> to vector<128xf32>
    %25 = vector.extract_strided_slice %24 {offsets = [0], sizes = [32], strides = [1]} : vector<128xf32> to vector<32xf32>
    %c1 = arith.constant 1 : index
    %c0_10 = arith.constant 0 : index
    %26 = vector.load %arg8[%c1, %c0_10] : memref<17x128xf32, #tpu.memory_space<vmem>>, vector<1x128xf32>
    %27 = vector.shape_cast %26 : vector<1x128xf32> to vector<128xf32>
    %28 = vector.extract_strided_slice %27 {offsets = [0], sizes = [32], strides = [1]} : vector<128xf32> to vector<32xf32>
    %cst_11 = arith.constant dense<0.000000e+00> : vector<32xf32>
    %29 = vector.multi_reduction <add>, %10, %cst_11 [1] : vector<32x32xf32> to vector<32xf32>
    %30 = vector.shape_cast %29 : vector<32xf32> to vector<32x1xf32>
    %cst_12 = arith.constant 3.200000e+01 : f32
    %31 = vector.broadcast %cst_12 : f32 to vector<32x1xf32>
    %32 = arith.divf %30, %31 : vector<32x1xf32>
    %33 = vector.broadcast %32 : vector<32x1xf32> to vector<32x32xf32>
    %34 = arith.subf %10, %33 : vector<32x32xf32>
    %35 = arith.mulf %34, %34 : vector<32x32xf32>
    %cst_13 = arith.constant dense<0.000000e+00> : vector<32xf32>
    %36 = vector.multi_reduction <add>, %35, %cst_13 [1] : vector<32x32xf32> to vector<32xf32>
    %37 = vector.shape_cast %36 : vector<32xf32> to vector<32x1xf32>
    %cst_14 = arith.constant 3.200000e+01 : f32
    %38 = vector.broadcast %cst_14 : f32 to vector<32x1xf32>
    %39 = arith.divf %37, %38 : vector<32x1xf32>
    %40 = vector.broadcast %32 : vector<32x1xf32> to vector<32x32xf32>
    %41 = arith.subf %10, %40 : vector<32x32xf32>
    %cst_15 = arith.constant 9.99999974E-6 : f32
    %42 = vector.broadcast %cst_15 : f32 to vector<32x1xf32>
    %43 = arith.addf %39, %42 : vector<32x1xf32>
    %44 = math.rsqrt %43 : vector<32x1xf32>
    %45 = vector.broadcast %44 : vector<32x1xf32> to vector<32x32xf32>
    %46 = arith.mulf %41, %45 : vector<32x32xf32>
    %47 = vector.shape_cast %25 : vector<32xf32> to vector<1x32xf32>
    %48 = vector.broadcast %47 : vector<1x32xf32> to vector<32x32xf32>
    %49 = arith.mulf %46, %48 : vector<32x32xf32>
    %50 = vector.shape_cast %28 : vector<32xf32> to vector<1x32xf32>
    %51 = vector.broadcast %50 : vector<1x32xf32> to vector<32x32xf32>
    %52 = arith.addf %49, %51 : vector<32x32xf32>
    %c0_16 = arith.constant 0 : index
    %c0_17 = arith.constant 0 : index
    %c0_18 = arith.constant 0 : index
    %53 = vector.load %arg3[%c0_16, %c0_17, %c0_18] : memref<2x32x128xf32, #tpu.memory_space<vmem>>, vector<1x32x128xf32>
    %54 = vector.shape_cast %53 : vector<1x32x128xf32> to vector<32x128xf32>
    %cst_19 = arith.constant dense<0.000000e+00> : vector<32x128xf32>
    %55 = tpu.matmul %52, %54, %cst_19 {dimension_numbers = #tpu.dot_dimension_numbers<[1], [0], [0], [1], [0, 0, 1, 1], [], []>} : vector<32x32xf32>, vector<32x128xf32>, vector<32x128xf32> -> vector<32x128xf32>
    %56 = vector.extract_strided_slice %55 {offsets = [0, 0], sizes = [32, 32], strides = [1, 1]} : vector<32x128xf32> to vector<32x32xf32>
    %57 = vector.shape_cast %56 : vector<32x32xf32> to vector<32x4x8xf32>
    %58 = vector.extract_strided_slice %55 {offsets = [0, 32], sizes = [32, 32], strides = [1, 1]} : vector<32x128xf32> to vector<32x32xf32>
    %59 = vector.shape_cast %58 : vector<32x32xf32> to vector<32x4x8xf32>
    %60 = vector.extract_strided_slice %55 {offsets = [0, 64], sizes = [32, 32], strides = [1, 1]} : vector<32x128xf32> to vector<32x32xf32>
    %61 = vector.shape_cast %60 : vector<32x32xf32> to vector<32x4x8xf32>
    "tpu.trace_start"() <{level = 10 : i32, message = "qhd,khd->hqk"}> : () -> ()
    %cst_20 = arith.constant dense<0.000000e+00> : vector<4x32x32xf32>
    %62 = tpu.matmul %57, %59, %cst_20 {dimension_numbers = #tpu.dot_dimension_numbers<[2], [2], [0], [0], [0, 1, 0, 0, 1, 0], [1], [1]>} : vector<32x4x8xf32>, vector<32x4x8xf32>, vector<4x32x32xf32> -> vector<4x32x32xf32>
    "tpu.trace_stop"() : () -> ()
    %63 = vector.shape_cast %22 : vector<32x32xf32> to vector<1x32x32xf32>
    %64 = vector.broadcast %63 : vector<1x32x32xf32> to vector<4x32x32xf32>
    %65 = arith.addf %62, %64 : vector<4x32x32xf32>
    %cst_21 = arith.constant dense<0xFF800000> : vector<4x32xf32>
    %66 = vector.multi_reduction <maximumf>, %65, %cst_21 [2] : vector<4x32x32xf32> to vector<4x32xf32>
    %67 = vector.shape_cast %66 : vector<4x32xf32> to vector<4x32x1xf32>
    %68 = vector.broadcast %67 : vector<4x32x1xf32> to vector<4x32x32xf32>
    %69 = arith.subf %65, %68 : vector<4x32x32xf32>
    %70 = math.exp %69 : vector<4x32x32xf32>
    %cst_22 = arith.constant dense<0.000000e+00> : vector<4x32xf32>
    %71 = vector.multi_reduction <add>, %70, %cst_22 [2] : vector<4x32x32xf32> to vector<4x32xf32>
    %72 = vector.shape_cast %71 : vector<4x32xf32> to vector<4x32x1xf32>
    %73 = tpu.reciprocal %72 {approx = true} : vector<4x32x1xf32> -> vector<4x32x1xf32>
    %74 = vector.broadcast %73 : vector<4x32x1xf32> to vector<4x32x32xf32>
    %75 = arith.mulf %70, %74 : vector<4x32x32xf32>
    "tpu.trace_start"() <{level = 10 : i32, message = "hqk,khd->qhd"}> : () -> ()
    %cst_23 = arith.constant dense<0.000000e+00> : vector<4x8x32xf32>
    %76 = tpu.matmul %61, %75, %cst_23 {dimension_numbers = #tpu.dot_dimension_numbers<[0], [2], [2], [1], [0, 1, 0, 2, 1, 1], [1], [0]>} : vector<32x4x8xf32>, vector<4x32x32xf32>, vector<4x8x32xf32> -> vector<4x8x32xf32>
    %77 = tpu.transpose %76, [2, 0, 1] : vector<4x8x32xf32> -> vector<32x4x8xf32>
    "tpu.trace_stop"() : () -> ()
    %78 = vector.shape_cast %77 : vector<32x4x8xf32> to vector<32x32xf32>
    %c0_24 = arith.constant 0 : index
    %c0_25 = arith.constant 0 : index
    %c0_26 = arith.constant 0 : index
    %79 = vector.load %arg4[%c0_24, %c0_25, %c0_26] : memref<2x32x32xf32, #tpu.memory_space<vmem>>, vector<1x32x32xf32>
    %80 = vector.shape_cast %79 : vector<1x32x32xf32> to vector<32x32xf32>
    %cst_27 = arith.constant dense<0.000000e+00> : vector<32x32xf32>
    %81 = tpu.matmul %78, %80, %cst_27 {dimension_numbers = #tpu.dot_dimension_numbers<[1], [0], [0], [1], [0, 0, 1, 1], [], []>} : vector<32x32xf32>, vector<32x32xf32>, vector<32x32xf32> -> vector<32x32xf32>
    %c2 = arith.constant 2 : index
    %c0_28 = arith.constant 0 : index
    %82 = vector.load %arg8[%c2, %c0_28] : memref<17x128xf32, #tpu.memory_space<vmem>>, vector<1x128xf32>
    %83 = vector.shape_cast %82 : vector<1x128xf32> to vector<128xf32>
    %84 = vector.extract_strided_slice %83 {offsets = [0], sizes = [32], strides = [1]} : vector<128xf32> to vector<32xf32>
    %85 = vector.shape_cast %84 : vector<32xf32> to vector<1x32xf32>
    %86 = vector.broadcast %85 : vector<1x32xf32> to vector<32x32xf32>
    %87 = arith.addf %81, %86 : vector<32x32xf32>
    %88 = arith.addf %10, %87 : vector<32x32xf32>
    %c3 = arith.constant 3 : index
    %c0_29 = arith.constant 0 : index
    %89 = vector.load %arg8[%c3, %c0_29] : memref<17x128xf32, #tpu.memory_space<vmem>>, vector<1x128xf32>
    %90 = vector.shape_cast %89 : vector<1x128xf32> to vector<128xf32>
    %91 = vector.extract_strided_slice %90 {offsets = [0], sizes = [32], strides = [1]} : vector<128xf32> to vector<32xf32>
    %c4 = arith.constant 4 : index
    %c0_30 = arith.constant 0 : index
    %92 = vector.load %arg8[%c4, %c0_30] : memref<17x128xf32, #tpu.memory_space<vmem>>, vector<1x128xf32>
    %93 = vector.shape_cast %92 : vector<1x128xf32> to vector<128xf32>
    %94 = vector.extract_strided_slice %93 {offsets = [0], sizes = [32], strides = [1]} : vector<128xf32> to vector<32xf32>
    %cst_31 = arith.constant dense<0.000000e+00> : vector<32xf32>
    %95 = vector.multi_reduction <add>, %88, %cst_31 [1] : vector<32x32xf32> to vector<32xf32>
    %96 = vector.shape_cast %95 : vector<32xf32> to vector<32x1xf32>
    %cst_32 = arith.constant 3.200000e+01 : f32
    %97 = vector.broadcast %cst_32 : f32 to vector<32x1xf32>
    %98 = arith.divf %96, %97 : vector<32x1xf32>
    %99 = vector.broadcast %98 : vector<32x1xf32> to vector<32x32xf32>
    %100 = arith.subf %88, %99 : vector<32x32xf32>
    %101 = arith.mulf %100, %100 : vector<32x32xf32>
    %cst_33 = arith.constant dense<0.000000e+00> : vector<32xf32>
    %102 = vector.multi_reduction <add>, %101, %cst_33 [1] : vector<32x32xf32> to vector<32xf32>
    %103 = vector.shape_cast %102 : vector<32xf32> to vector<32x1xf32>
    %cst_34 = arith.constant 3.200000e+01 : f32
    %104 = vector.broadcast %cst_34 : f32 to vector<32x1xf32>
    %105 = arith.divf %103, %104 : vector<32x1xf32>
    %106 = vector.broadcast %98 : vector<32x1xf32> to vector<32x32xf32>
    %107 = arith.subf %88, %106 : vector<32x32xf32>
    %cst_35 = arith.constant 9.99999974E-6 : f32
    %108 = vector.broadcast %cst_35 : f32 to vector<32x1xf32>
    %109 = arith.addf %105, %108 : vector<32x1xf32>
    %110 = math.rsqrt %109 : vector<32x1xf32>
    %111 = vector.broadcast %110 : vector<32x1xf32> to vector<32x32xf32>
    %112 = arith.mulf %107, %111 : vector<32x32xf32>
    %113 = vector.shape_cast %91 : vector<32xf32> to vector<1x32xf32>
    %114 = vector.broadcast %113 : vector<1x32xf32> to vector<32x32xf32>
    %115 = arith.mulf %112, %114 : vector<32x32xf32>
    %116 = vector.shape_cast %94 : vector<32xf32> to vector<1x32xf32>
    %117 = vector.broadcast %116 : vector<1x32xf32> to vector<32x32xf32>
    %118 = arith.addf %115, %117 : vector<32x32xf32>
    %c0_36 = arith.constant 0 : index
    %c0_37 = arith.constant 0 : index
    %c0_38 = arith.constant 0 : index
    %119 = vector.load %arg5[%c0_36, %c0_37, %c0_38] : memref<2x32x128xf32, #tpu.memory_space<vmem>>, vector<1x32x128xf32>
    %120 = vector.shape_cast %119 : vector<1x32x128xf32> to vector<32x128xf32>
    %cst_39 = arith.constant dense<0.000000e+00> : vector<32x128xf32>
    %121 = tpu.matmul %118, %120, %cst_39 {dimension_numbers = #tpu.dot_dimension_numbers<[1], [0], [0], [1], [0, 0, 1, 1], [], []>} : vector<32x32xf32>, vector<32x128xf32>, vector<32x128xf32> -> vector<32x128xf32>
    %c5 = arith.constant 5 : index
    %c0_40 = arith.constant 0 : index
    %122 = vector.load %arg8[%c5, %c0_40] : memref<17x128xf32, #tpu.memory_space<vmem>>, vector<1x128xf32>
    %123 = vector.shape_cast %122 : vector<1x128xf32> to vector<128xf32>
    %124 = vector.shape_cast %123 : vector<128xf32> to vector<1x128xf32>
    %125 = vector.broadcast %124 : vector<1x128xf32> to vector<32x128xf32>
    %126 = arith.addf %121, %125 : vector<32x128xf32>
    %cst_41 = arith.constant 0.000000e+00 : f32
    %127 = vector.broadcast %cst_41 : f32 to vector<32x128xf32>
    %128 = arith.maximumf %126, %127 : vector<32x128xf32>
    %c0_42 = arith.constant 0 : index
    %c0_43 = arith.constant 0 : index
    %c0_44 = arith.constant 0 : index
    %129 = vector.load %arg6[%c0_42, %c0_43, %c0_44] : memref<2x128x32xf32, #tpu.memory_space<vmem>>, vector<1x128x32xf32>
    %130 = vector.shape_cast %129 : vector<1x128x32xf32> to vector<128x32xf32>
    %cst_45 = arith.constant dense<0.000000e+00> : vector<32x32xf32>
    %131 = tpu.matmul %128, %130, %cst_45 {dimension_numbers = #tpu.dot_dimension_numbers<[1], [0], [0], [1], [0, 0, 1, 1], [], []>} : vector<32x128xf32>, vector<128x32xf32>, vector<32x32xf32> -> vector<32x32xf32>
    %132 = arith.addf %88, %131 : vector<32x32xf32>
    %c6 = arith.constant 6 : index
    %c0_46 = arith.constant 0 : index
    %133 = vector.load %arg8[%c6, %c0_46] : memref<17x128xf32, #tpu.memory_space<vmem>>, vector<1x128xf32>
    %134 = vector.shape_cast %133 : vector<1x128xf32> to vector<128xf32>
    %135 = vector.extract_strided_slice %134 {offsets = [0], sizes = [32], strides = [1]} : vector<128xf32> to vector<32xf32>
    %136 = vector.shape_cast %135 : vector<32xf32> to vector<1x32xf32>
    %137 = vector.broadcast %136 : vector<1x32xf32> to vector<32x32xf32>
    %138 = arith.addf %132, %137 : vector<32x32xf32>
    %c7 = arith.constant 7 : index
    %c0_47 = arith.constant 0 : index
    %139 = vector.load %arg8[%c7, %c0_47] : memref<17x128xf32, #tpu.memory_space<vmem>>, vector<1x128xf32>
    %140 = vector.shape_cast %139 : vector<1x128xf32> to vector<128xf32>
    %141 = vector.extract_strided_slice %140 {offsets = [0], sizes = [32], strides = [1]} : vector<128xf32> to vector<32xf32>
    %c8 = arith.constant 8 : index
    %c0_48 = arith.constant 0 : index
    %142 = vector.load %arg8[%c8, %c0_48] : memref<17x128xf32, #tpu.memory_space<vmem>>, vector<1x128xf32>
    %143 = vector.shape_cast %142 : vector<1x128xf32> to vector<128xf32>
    %144 = vector.extract_strided_slice %143 {offsets = [0], sizes = [32], strides = [1]} : vector<128xf32> to vector<32xf32>
    %cst_49 = arith.constant dense<0.000000e+00> : vector<32xf32>
    %145 = vector.multi_reduction <add>, %138, %cst_49 [1] : vector<32x32xf32> to vector<32xf32>
    %146 = vector.shape_cast %145 : vector<32xf32> to vector<32x1xf32>
    %cst_50 = arith.constant 3.200000e+01 : f32
    %147 = vector.broadcast %cst_50 : f32 to vector<32x1xf32>
    %148 = arith.divf %146, %147 : vector<32x1xf32>
    %149 = vector.broadcast %148 : vector<32x1xf32> to vector<32x32xf32>
    %150 = arith.subf %138, %149 : vector<32x32xf32>
    %151 = arith.mulf %150, %150 : vector<32x32xf32>
    %cst_51 = arith.constant dense<0.000000e+00> : vector<32xf32>
    %152 = vector.multi_reduction <add>, %151, %cst_51 [1] : vector<32x32xf32> to vector<32xf32>
    %153 = vector.shape_cast %152 : vector<32xf32> to vector<32x1xf32>
    %cst_52 = arith.constant 3.200000e+01 : f32
    %154 = vector.broadcast %cst_52 : f32 to vector<32x1xf32>
    %155 = arith.divf %153, %154 : vector<32x1xf32>
    %156 = vector.broadcast %148 : vector<32x1xf32> to vector<32x32xf32>
    %157 = arith.subf %138, %156 : vector<32x32xf32>
    %cst_53 = arith.constant 9.99999974E-6 : f32
    %158 = vector.broadcast %cst_53 : f32 to vector<32x1xf32>
    %159 = arith.addf %155, %158 : vector<32x1xf32>
    %160 = math.rsqrt %159 : vector<32x1xf32>
    %161 = vector.broadcast %160 : vector<32x1xf32> to vector<32x32xf32>
    %162 = arith.mulf %157, %161 : vector<32x32xf32>
    %163 = vector.shape_cast %141 : vector<32xf32> to vector<1x32xf32>
    %164 = vector.broadcast %163 : vector<1x32xf32> to vector<32x32xf32>
    %165 = arith.mulf %162, %164 : vector<32x32xf32>
    %166 = vector.shape_cast %144 : vector<32xf32> to vector<1x32xf32>
    %167 = vector.broadcast %166 : vector<1x32xf32> to vector<32x32xf32>
    %168 = arith.addf %165, %167 : vector<32x32xf32>
    %c1_54 = arith.constant 1 : index
    %c0_55 = arith.constant 0 : index
    %c0_56 = arith.constant 0 : index
    %169 = vector.load %arg3[%c1_54, %c0_55, %c0_56] : memref<2x32x128xf32, #tpu.memory_space<vmem>>, vector<1x32x128xf32>
    %170 = vector.shape_cast %169 : vector<1x32x128xf32> to vector<32x128xf32>
    %cst_57 = arith.constant dense<0.000000e+00> : vector<32x128xf32>
    %171 = tpu.matmul %168, %170, %cst_57 {dimension_numbers = #tpu.dot_dimension_numbers<[1], [0], [0], [1], [0, 0, 1, 1], [], []>} : vector<32x32xf32>, vector<32x128xf32>, vector<32x128xf32> -> vector<32x128xf32>
    %172 = vector.extract_strided_slice %171 {offsets = [0, 0], sizes = [32, 32], strides = [1, 1]} : vector<32x128xf32> to vector<32x32xf32>
    %173 = vector.shape_cast %172 : vector<32x32xf32> to vector<32x4x8xf32>
    %174 = vector.extract_strided_slice %171 {offsets = [0, 32], sizes = [32, 32], strides = [1, 1]} : vector<32x128xf32> to vector<32x32xf32>
    %175 = vector.shape_cast %174 : vector<32x32xf32> to vector<32x4x8xf32>
    %176 = vector.extract_strided_slice %171 {offsets = [0, 64], sizes = [32, 32], strides = [1, 1]} : vector<32x128xf32> to vector<32x32xf32>
    %177 = vector.shape_cast %176 : vector<32x32xf32> to vector<32x4x8xf32>
    "tpu.trace_start"() <{level = 10 : i32, message = "qhd,khd->hqk"}> : () -> ()
    %cst_58 = arith.constant dense<0.000000e+00> : vector<4x32x32xf32>
    %178 = tpu.matmul %173, %175, %cst_58 {dimension_numbers = #tpu.dot_dimension_numbers<[2], [2], [0], [0], [0, 1, 0, 0, 1, 0], [1], [1]>} : vector<32x4x8xf32>, vector<32x4x8xf32>, vector<4x32x32xf32> -> vector<4x32x32xf32>
    "tpu.trace_stop"() : () -> ()
    %179 = vector.shape_cast %22 : vector<32x32xf32> to vector<1x32x32xf32>
    %180 = vector.broadcast %179 : vector<1x32x32xf32> to vector<4x32x32xf32>
    %181 = arith.addf %178, %180 : vector<4x32x32xf32>
    %cst_59 = arith.constant dense<0xFF800000> : vector<4x32xf32>
    %182 = vector.multi_reduction <maximumf>, %181, %cst_59 [2] : vector<4x32x32xf32> to vector<4x32xf32>
    %183 = vector.shape_cast %182 : vector<4x32xf32> to vector<4x32x1xf32>
    %184 = vector.broadcast %183 : vector<4x32x1xf32> to vector<4x32x32xf32>
    %185 = arith.subf %181, %184 : vector<4x32x32xf32>
    %186 = math.exp %185 : vector<4x32x32xf32>
    %cst_60 = arith.constant dense<0.000000e+00> : vector<4x32xf32>
    %187 = vector.multi_reduction <add>, %186, %cst_60 [2] : vector<4x32x32xf32> to vector<4x32xf32>
    %188 = vector.shape_cast %187 : vector<4x32xf32> to vector<4x32x1xf32>
    %189 = tpu.reciprocal %188 {approx = true} : vector<4x32x1xf32> -> vector<4x32x1xf32>
    %190 = vector.broadcast %189 : vector<4x32x1xf32> to vector<4x32x32xf32>
    %191 = arith.mulf %186, %190 : vector<4x32x32xf32>
    "tpu.trace_start"() <{level = 10 : i32, message = "hqk,khd->qhd"}> : () -> ()
    %cst_61 = arith.constant dense<0.000000e+00> : vector<4x8x32xf32>
    %192 = tpu.matmul %177, %191, %cst_61 {dimension_numbers = #tpu.dot_dimension_numbers<[0], [2], [2], [1], [0, 1, 0, 2, 1, 1], [1], [0]>} : vector<32x4x8xf32>, vector<4x32x32xf32>, vector<4x8x32xf32> -> vector<4x8x32xf32>
    %193 = tpu.transpose %192, [2, 0, 1] : vector<4x8x32xf32> -> vector<32x4x8xf32>
    "tpu.trace_stop"() : () -> ()
    %194 = vector.shape_cast %193 : vector<32x4x8xf32> to vector<32x32xf32>
    %c1_62 = arith.constant 1 : index
    %c0_63 = arith.constant 0 : index
    %c0_64 = arith.constant 0 : index
    %195 = vector.load %arg4[%c1_62, %c0_63, %c0_64] : memref<2x32x32xf32, #tpu.memory_space<vmem>>, vector<1x32x32xf32>
    %196 = vector.shape_cast %195 : vector<1x32x32xf32> to vector<32x32xf32>
    %cst_65 = arith.constant dense<0.000000e+00> : vector<32x32xf32>
    %197 = tpu.matmul %194, %196, %cst_65 {dimension_numbers = #tpu.dot_dimension_numbers<[1], [0], [0], [1], [0, 0, 1, 1], [], []>} : vector<32x32xf32>, vector<32x32xf32>, vector<32x32xf32> -> vector<32x32xf32>
    %c9 = arith.constant 9 : index
    %c0_66 = arith.constant 0 : index
    %198 = vector.load %arg8[%c9, %c0_66] : memref<17x128xf32, #tpu.memory_space<vmem>>, vector<1x128xf32>
    %199 = vector.shape_cast %198 : vector<1x128xf32> to vector<128xf32>
    %200 = vector.extract_strided_slice %199 {offsets = [0], sizes = [32], strides = [1]} : vector<128xf32> to vector<32xf32>
    %201 = vector.shape_cast %200 : vector<32xf32> to vector<1x32xf32>
    %202 = vector.broadcast %201 : vector<1x32xf32> to vector<32x32xf32>
    %203 = arith.addf %197, %202 : vector<32x32xf32>
    %204 = arith.addf %138, %203 : vector<32x32xf32>
    %c10 = arith.constant 10 : index
    %c0_67 = arith.constant 0 : index
    %205 = vector.load %arg8[%c10, %c0_67] : memref<17x128xf32, #tpu.memory_space<vmem>>, vector<1x128xf32>
    %206 = vector.shape_cast %205 : vector<1x128xf32> to vector<128xf32>
    %207 = vector.extract_strided_slice %206 {offsets = [0], sizes = [32], strides = [1]} : vector<128xf32> to vector<32xf32>
    %c11 = arith.constant 11 : index
    %c0_68 = arith.constant 0 : index
    %208 = vector.load %arg8[%c11, %c0_68] : memref<17x128xf32, #tpu.memory_space<vmem>>, vector<1x128xf32>
    %209 = vector.shape_cast %208 : vector<1x128xf32> to vector<128xf32>
    %210 = vector.extract_strided_slice %209 {offsets = [0], sizes = [32], strides = [1]} : vector<128xf32> to vector<32xf32>
    %cst_69 = arith.constant dense<0.000000e+00> : vector<32xf32>
    %211 = vector.multi_reduction <add>, %204, %cst_69 [1] : vector<32x32xf32> to vector<32xf32>
    %212 = vector.shape_cast %211 : vector<32xf32> to vector<32x1xf32>
    %cst_70 = arith.constant 3.200000e+01 : f32
    %213 = vector.broadcast %cst_70 : f32 to vector<32x1xf32>
    %214 = arith.divf %212, %213 : vector<32x1xf32>
    %215 = vector.broadcast %214 : vector<32x1xf32> to vector<32x32xf32>
    %216 = arith.subf %204, %215 : vector<32x32xf32>
    %217 = arith.mulf %216, %216 : vector<32x32xf32>
    %cst_71 = arith.constant dense<0.000000e+00> : vector<32xf32>
    %218 = vector.multi_reduction <add>, %217, %cst_71 [1] : vector<32x32xf32> to vector<32xf32>
    %219 = vector.shape_cast %218 : vector<32xf32> to vector<32x1xf32>
    %cst_72 = arith.constant 3.200000e+01 : f32
    %220 = vector.broadcast %cst_72 : f32 to vector<32x1xf32>
    %221 = arith.divf %219, %220 : vector<32x1xf32>
    %222 = vector.broadcast %214 : vector<32x1xf32> to vector<32x32xf32>
    %223 = arith.subf %204, %222 : vector<32x32xf32>
    %cst_73 = arith.constant 9.99999974E-6 : f32
    %224 = vector.broadcast %cst_73 : f32 to vector<32x1xf32>
    %225 = arith.addf %221, %224 : vector<32x1xf32>
    %226 = math.rsqrt %225 : vector<32x1xf32>
    %227 = vector.broadcast %226 : vector<32x1xf32> to vector<32x32xf32>
    %228 = arith.mulf %223, %227 : vector<32x32xf32>
    %229 = vector.shape_cast %207 : vector<32xf32> to vector<1x32xf32>
    %230 = vector.broadcast %229 : vector<1x32xf32> to vector<32x32xf32>
    %231 = arith.mulf %228, %230 : vector<32x32xf32>
    %232 = vector.shape_cast %210 : vector<32xf32> to vector<1x32xf32>
    %233 = vector.broadcast %232 : vector<1x32xf32> to vector<32x32xf32>
    %234 = arith.addf %231, %233 : vector<32x32xf32>
    %c1_74 = arith.constant 1 : index
    %c0_75 = arith.constant 0 : index
    %c0_76 = arith.constant 0 : index
    %235 = vector.load %arg5[%c1_74, %c0_75, %c0_76] : memref<2x32x128xf32, #tpu.memory_space<vmem>>, vector<1x32x128xf32>
    %236 = vector.shape_cast %235 : vector<1x32x128xf32> to vector<32x128xf32>
    %cst_77 = arith.constant dense<0.000000e+00> : vector<32x128xf32>
    %237 = tpu.matmul %234, %236, %cst_77 {dimension_numbers = #tpu.dot_dimension_numbers<[1], [0], [0], [1], [0, 0, 1, 1], [], []>} : vector<32x32xf32>, vector<32x128xf32>, vector<32x128xf32> -> vector<32x128xf32>
    %c12 = arith.constant 12 : index
    %c0_78 = arith.constant 0 : index
    %238 = vector.load %arg8[%c12, %c0_78] : memref<17x128xf32, #tpu.memory_space<vmem>>, vector<1x128xf32>
    %239 = vector.shape_cast %238 : vector<1x128xf32> to vector<128xf32>
    %240 = vector.shape_cast %239 : vector<128xf32> to vector<1x128xf32>
    %241 = vector.broadcast %240 : vector<1x128xf32> to vector<32x128xf32>
    %242 = arith.addf %237, %241 : vector<32x128xf32>
    %cst_79 = arith.constant 0.000000e+00 : f32
    %243 = vector.broadcast %cst_79 : f32 to vector<32x128xf32>
    %244 = arith.maximumf %242, %243 : vector<32x128xf32>
    %c1_80 = arith.constant 1 : index
    %c0_81 = arith.constant 0 : index
    %c0_82 = arith.constant 0 : index
    %245 = vector.load %arg6[%c1_80, %c0_81, %c0_82] : memref<2x128x32xf32, #tpu.memory_space<vmem>>, vector<1x128x32xf32>
    %246 = vector.shape_cast %245 : vector<1x128x32xf32> to vector<128x32xf32>
    %cst_83 = arith.constant dense<0.000000e+00> : vector<32x32xf32>
    %247 = tpu.matmul %244, %246, %cst_83 {dimension_numbers = #tpu.dot_dimension_numbers<[1], [0], [0], [1], [0, 0, 1, 1], [], []>} : vector<32x128xf32>, vector<128x32xf32>, vector<32x32xf32> -> vector<32x32xf32>
    %248 = arith.addf %204, %247 : vector<32x32xf32>
    %c13 = arith.constant 13 : index
    %c0_84 = arith.constant 0 : index
    %249 = vector.load %arg8[%c13, %c0_84] : memref<17x128xf32, #tpu.memory_space<vmem>>, vector<1x128xf32>
    %250 = vector.shape_cast %249 : vector<1x128xf32> to vector<128xf32>
    %251 = vector.extract_strided_slice %250 {offsets = [0], sizes = [32], strides = [1]} : vector<128xf32> to vector<32xf32>
    %252 = vector.shape_cast %251 : vector<32xf32> to vector<1x32xf32>
    %253 = vector.broadcast %252 : vector<1x32xf32> to vector<32x32xf32>
    %254 = arith.addf %248, %253 : vector<32x32xf32>
    %c14 = arith.constant 14 : index
    %c0_85 = arith.constant 0 : index
    %255 = vector.load %arg8[%c14, %c0_85] : memref<17x128xf32, #tpu.memory_space<vmem>>, vector<1x128xf32>
    %256 = vector.shape_cast %255 : vector<1x128xf32> to vector<128xf32>
    %257 = vector.extract_strided_slice %256 {offsets = [0], sizes = [32], strides = [1]} : vector<128xf32> to vector<32xf32>
    %c15 = arith.constant 15 : index
    %c0_86 = arith.constant 0 : index
    %258 = vector.load %arg8[%c15, %c0_86] : memref<17x128xf32, #tpu.memory_space<vmem>>, vector<1x128xf32>
    %259 = vector.shape_cast %258 : vector<1x128xf32> to vector<128xf32>
    %260 = vector.extract_strided_slice %259 {offsets = [0], sizes = [32], strides = [1]} : vector<128xf32> to vector<32xf32>
    %cst_87 = arith.constant dense<0.000000e+00> : vector<32xf32>
    %261 = vector.multi_reduction <add>, %254, %cst_87 [1] : vector<32x32xf32> to vector<32xf32>
    %262 = vector.shape_cast %261 : vector<32xf32> to vector<32x1xf32>
    %cst_88 = arith.constant 3.200000e+01 : f32
    %263 = vector.broadcast %cst_88 : f32 to vector<32x1xf32>
    %264 = arith.divf %262, %263 : vector<32x1xf32>
    %265 = vector.broadcast %264 : vector<32x1xf32> to vector<32x32xf32>
    %266 = arith.subf %254, %265 : vector<32x32xf32>
    %267 = arith.mulf %266, %266 : vector<32x32xf32>
    %cst_89 = arith.constant dense<0.000000e+00> : vector<32xf32>
    %268 = vector.multi_reduction <add>, %267, %cst_89 [1] : vector<32x32xf32> to vector<32xf32>
    %269 = vector.shape_cast %268 : vector<32xf32> to vector<32x1xf32>
    %cst_90 = arith.constant 3.200000e+01 : f32
    %270 = vector.broadcast %cst_90 : f32 to vector<32x1xf32>
    %271 = arith.divf %269, %270 : vector<32x1xf32>
    %272 = vector.broadcast %264 : vector<32x1xf32> to vector<32x32xf32>
    %273 = arith.subf %254, %272 : vector<32x32xf32>
    %cst_91 = arith.constant 9.99999974E-6 : f32
    %274 = vector.broadcast %cst_91 : f32 to vector<32x1xf32>
    %275 = arith.addf %271, %274 : vector<32x1xf32>
    %276 = math.rsqrt %275 : vector<32x1xf32>
    %277 = vector.broadcast %276 : vector<32x1xf32> to vector<32x32xf32>
    %278 = arith.mulf %273, %277 : vector<32x32xf32>
    %279 = vector.shape_cast %257 : vector<32xf32> to vector<1x32xf32>
    %280 = vector.broadcast %279 : vector<1x32xf32> to vector<32x32xf32>
    %281 = arith.mulf %278, %280 : vector<32x32xf32>
    %282 = vector.shape_cast %260 : vector<32xf32> to vector<1x32xf32>
    %283 = vector.broadcast %282 : vector<1x32xf32> to vector<32x32xf32>
    %284 = arith.addf %281, %283 : vector<32x32xf32>
    %c0_92 = arith.constant 0 : index
    %c0_93 = arith.constant 0 : index
    %285 = vector.load %arg7[%c0_92, %c0_93] : memref<32x128xf32, #tpu.memory_space<vmem>>, vector<32x128xf32>
    %cst_94 = arith.constant dense<0.000000e+00> : vector<32x128xf32>
    %286 = tpu.matmul %284, %285, %cst_94 {dimension_numbers = #tpu.dot_dimension_numbers<[1], [0], [0], [1], [0, 0, 1, 1], [], []>} : vector<32x32xf32>, vector<32x128xf32>, vector<32x128xf32> -> vector<32x128xf32>
    %c16 = arith.constant 16 : index
    %c0_95 = arith.constant 0 : index
    %287 = vector.load %arg8[%c16, %c0_95] : memref<17x128xf32, #tpu.memory_space<vmem>>, vector<1x128xf32>
    %288 = vector.shape_cast %287 : vector<1x128xf32> to vector<128xf32>
    %289 = vector.shape_cast %288 : vector<128xf32> to vector<1x128xf32>
    %290 = vector.broadcast %289 : vector<1x128xf32> to vector<32x128xf32>
    %291 = arith.addf %286, %290 : vector<32x128xf32>
    %c0_96 = arith.constant 0 : index
    %c0_97 = arith.constant 0 : index
    %292 = vector.load %arg9[%c0_96, %c0_97] : memref<32x128xf32, #tpu.memory_space<vmem>>, vector<32x128xf32>
    tpu.vector_store %arg9[%c0_96, %c0_97], %291 {strides = array<i32>} : memref<32x128xf32, #tpu.memory_space<vmem>>, vector<32x128xf32>,
    return
  }
}

</mosaic_0001>

<llo_original>
// kernel: forward.1
$region0: #{forward.1}
  #allocation0 [shape = 'u32[]', space=smem, size = 0x4, offset = 0x4, fixed_abs, tag = 'smem constant byte address 0x4 - core index']
  #allocation1 [shape = 'u32[144,128]{1,0:T(1,128)}', space=vmem, size = 0x12000, scoped, tag = 'internal scratch']
  %s0 = inlined_call_operand.vmem [shape: s32[32,1], index: 0, kind: input, shape index: {}]
  %s1 = inlined_call_operand.vmem [shape: f32[128,32], index: 1, kind: input, shape index: {}]
  %s2 = inlined_call_operand.vmem [shape: f32[16,32], index: 2, kind: input, shape index: {}]
  %s3 = inlined_call_operand.vmem [shape: f32[2,32,128], index: 3, kind: input, shape index: {}]
  %s4 = inlined_call_operand.vmem [shape: f32[2,32,32], index: 4, kind: input, shape index: {}]
  %s5 = inlined_call_operand.vmem [shape: f32[2,32,128], index: 5, kind: input, shape index: {}]
  %s6 = inlined_call_operand.vmem [shape: f32[2,128,32], index: 6, kind: input, shape index: {}]
  %s7 = inlined_call_operand.vmem [shape: f32[32,128], index: 7, kind: input, shape index: {}]
  %s8 = inlined_call_operand.vmem [shape: f32[17,128], index: 8, kind: input, shape index: {}]
  %s9 = inlined_call_operand.hbm [shape: f32[32,128], index: 9, kind: output, shape index: {}]
  %s10 = sld [smem:[#allocation0]]
  $region46: #{forward.1} parent=0
    _
  %s12 = ssub.s32 1, %s10
  %s13 = scalar_select 0, %s12, %s10
  $region1: #{forward.1} parent=0
    #allocation2 [shape = 'u8[16384]{0}', space=vmem, size = 0x4000, scoped, tag = 'output window, operand 0, single buffered']
    #allocation3 [shape = 's32[1]{0}', space=sflag, size = 0x4, scoped, tag = 'scoped memory for forward.1']
    %14 = vsyncpa [#allocation3], 0
    // Predicated region
    $region2: #{forward.1} parent=1 // pred_check
      _
    $region3: #{forward.1} parent=1 // pred_check_branch
      %16 = sbr.rel (0) target = $region5
    $region4: #{forward.1} parent=1 // pred_region
      _
    $region5: #{forward.1} parent=1 // pred_fallthru
      _
    // Predicated region
    $region6: #{forward.1} parent=1 // pred_check
      _
    $region7: #{forward.1} parent=1 // pred_check_branch
      %18 = sbr.rel (0) target = $region9
    $region8: #{forward.1} parent=1 // pred_region
      _
    $region9: #{forward.1} parent=1 // pred_fallthru
      _
    // Predicated region
    $region10: #{forward.1} parent=1 // pred_check
      _
    $region11: #{forward.1} parent=1 // pred_check_branch
      %20 = sbr.rel (0) target = $region13
    $region12: #{forward.1} parent=1 // pred_region
      _
    $region13: #{forward.1} parent=1 // pred_fallthru
      _
    // Predicated region
    $region14: #{forward.1} parent=1 // pred_check
      _
    $region15: #{forward.1} parent=1 // pred_check_branch
      %22 = sbr.rel (0) target = $region17
    $region16: #{forward.1} parent=1 // pred_region
      _
    $region17: #{forward.1} parent=1 // pred_fallthru
      _
    // Predicated region
    $region18: #{forward.1} parent=1 // pred_check
      _
    $region19: #{forward.1} parent=1 // pred_check_branch
      %24 = sbr.rel (0) target = $region21
    $region20: #{forward.1} parent=1 // pred_region
      _
    $region21: #{forward.1} parent=1 // pred_fallthru
      _
    // Predicated region
    $region22: #{forward.1} parent=1 // pred_check
      _
    $region23: #{forward.1} parent=1 // pred_check_branch
      %26 = sbr.rel (0) target = $region25
    $region24: #{forward.1} parent=1 // pred_region
      _
    $region25: #{forward.1} parent=1 // pred_fallthru
      _
    // Predicated region
    $region26: #{forward.1} parent=1 // pred_check
      _
    $region27: #{forward.1} parent=1 // pred_check_branch
      %28 = sbr.rel (0) target = $region29
    $region28: #{forward.1} parent=1 // pred_region
      _
    $region29: #{forward.1} parent=1 // pred_fallthru
      _
    // Predicated region
    $region30: #{forward.1} parent=1 // pred_check
      _
    $region31: #{forward.1} parent=1 // pred_check_branch
      %30 = sbr.rel (0) target = $region33
    $region32: #{forward.1} parent=1 // pred_region
      _
    $region33: #{forward.1} parent=1 // pred_fallthru
      _
    // Predicated region
    $region34: #{forward.1} parent=1 // pred_check
      _
    $region35: #{forward.1} parent=1 // pred_check_branch
      %32 = sbr.rel (0) target = $region37
    $region36: #{forward.1} parent=1 // pred_region
      _
    $region37: #{forward.1} parent=1 // pred_fallthru
      _
    %v33 = vlaneseq
    %v34 = vand.u32 %v33, 127
    %v35 = vld [vmem:[%s0] sm:$0xff]
    %v36 = vld [vmem:[%s0 + $0x8] sm:$0xff]
    %v37 = vld [vmem:[%s0 + $0x10] sm:$0xff]
    %v38 = vld [vmem:[%s0 + $0x18] sm:$0xff]
    %39 = vset.pattern.permute.xlu0 0
    %40 = vperm.xlu0 %39, %v35
    %v41 = vpop.permute.xlu0 %40
    %42 = vset.pattern.permute.xlu0 0
    %43 = vperm.xlu0 %42, %v36
    %v44 = vpop.permute.xlu0 %43
    %45 = vset.pattern.permute.xlu0 0
    %46 = vperm.xlu0 %45, %v37
    %v47 = vpop.permute.xlu0 %46
    %48 = vset.pattern.permute.xlu0 0
    %49 = vperm.xlu0 %48, %v38
    %v50 = vpop.permute.xlu0 %49
    %vm51 = vcmp.eq.s32.totalorder %v34, %v41
    %vm52 = vcmp.eq.s32.totalorder %v34, %v44
    %vm53 = vcmp.eq.s32.totalorder %v34, %v47
    %vm54 = vcmp.eq.s32.totalorder %v34, %v50
    %v55 = vsel %vm51, 1, 0
    %v56 = vsel %vm52, 1, 0
    %v57 = vsel %vm53, 1, 0
    %v58 = vsel %vm54, 1, 0
    %v59 = vcvt.s32.f32 %v55
    %v60 = vcvt.s32.f32 %v56
    %v61 = vcvt.s32.f32 %v57
    %v62 = vcvt.s32.f32 %v58
    %v63 = vld [vmem:[%s2] sm:$0xff]
    %v64 = vld [vmem:[%s2 + $0x8] sm:$0xff]
    %v65 = vld [vmem:[%s1] sm:$0xff]
    %v66 = vld [vmem:[%s1 + $0x8] sm:$0xff]
    %v67 = vld [vmem:[%s1 + $0x10] sm:$0xff]
    %v68 = vld [vmem:[%s1 + $0x18] sm:$0xff]
    %v69 = vld [vmem:[%s1 + $0x20] sm:$0xff]
    %v70 = vld [vmem:[%s1 + $0x28] sm:$0xff]
    %v71 = vld [vmem:[%s1 + $0x30] sm:$0xff]
    %v72 = vld [vmem:[%s1 + $0x38] sm:$0xff]
    %v73 = vld [vmem:[%s1 + $0x40] sm:$0xff]
    %v74 = vld [vmem:[%s1 + $0x48] sm:$0xff]
    %v75 = vld [vmem:[%s1 + $0x50] sm:$0xff]
    %v76 = vld [vmem:[%s1 + $0x58] sm:$0xff]
    %v77 = vld [vmem:[%s1 + $0x60] sm:$0xff]
    %v78 = vld [vmem:[%s1 + $0x68] sm:$0xff]
    %v79 = vld [vmem:[%s1 + $0x70] sm:$0xff]
    %v80 = vld [vmem:[%s1 + $0x78] sm:$0xff]
    %81 = vmatprep.subr.mxu0 0.0
    %82 = vmatpush1.msra.mxu0 %v80
    %83 = vmatprep.subr.mxu0 0.0
    %84 = vmatpush1.msra.mxu0 %v79
    %85 = vmatprep.subr.mxu0 0.0
    %86 = vmatpush1.msra.mxu0 %v78
    %87 = vmatprep.subr.mxu0 0.0
    %88 = vmatpush1.msra.mxu0 %v77
    %89 = vmatprep.subr.mxu0 0.0
    %90 = vmatpush1.msra.mxu0 %v76
    %91 = vmatprep.subr.mxu0 0.0
    %92 = vmatpush1.msra.mxu0 %v75
    %93 = vmatprep.subr.mxu0 0.0
    %94 = vmatpush1.msra.mxu0 %v74
    %95 = vmatprep.subr.mxu0 0.0
    %96 = vmatpush1.msra.mxu0 %v73
    %97 = vmatprep.subr.mxu0 0.0
    %98 = vmatpush1.msra.mxu0 %v72
    %99 = vmatprep.subr.mxu0 0.0
    %100 = vmatpush1.msra.mxu0 %v71
    %101 = vmatprep.subr.mxu0 0.0
    %102 = vmatpush1.msra.mxu0 %v70
    %103 = vmatprep.subr.mxu0 0.0
    %104 = vmatpush1.msra.mxu0 %v69
    %105 = vmatprep.subr.mxu0 0.0
    %106 = vmatpush1.msra.mxu0 %v68
    %107 = vmatprep.subr.mxu0 0.0
    %108 = vmatpush1.msra.mxu0 %v67
    %109 = vmatprep.subr.mxu0 0.0
    %110 = vmatpush1.msra.mxu0 %v66
    %111 = vmatprep.subr.mxu0 0.0
    %112 = vmatpush1.msra.mxu0 %v65
    %113 = vmatprep.subr.mxu0 0.0
    %114 = vmatpush2.msra.mxu0 0.0
    %115 = vmatprep.subr.mxu0 0.0
    %116 = vmatpush2.msra.mxu0 0.0
    %117 = vmatprep.subr.mxu0 0.0
    %118 = vmatpush2.msra.mxu0 0.0
    %119 = vmatprep.subr.mxu0 0.0
    %120 = vmatpush2.msra.mxu0 0.0
    %121 = vmatprep.subr.mxu0 0.0
    %122 = vmatpush2.msra.mxu0 0.0
    %123 = vmatprep.subr.mxu0 0.0
    %124 = vmatpush2.msra.mxu0 0.0
    %125 = vmatprep.subr.mxu0 0.0
    %126 = vmatpush2.msra.mxu0 0.0
    %127 = vmatprep.subr.mxu0 0.0
    %128 = vmatpush2.msra.mxu0 0.0
    %129 = vmatprep.subr.mxu0 0.0
    %130 = vmatpush2.msra.mxu0 0.0
    %131 = vmatprep.subr.mxu0 0.0
    %132 = vmatpush2.msra.mxu0 0.0
    %133 = vmatprep.subr.mxu0 0.0
    %134 = vmatpush2.msra.mxu0 0.0
    %135 = vmatprep.subr.mxu0 0.0
    %136 = vmatpush2.msra.mxu0 0.0
    %137 = vmatprep.subr.mxu0 0.0
    %138 = vmatpush2.msra.mxu0 0.0
    %139 = vmatprep.subr.mxu0 0.0
    %140 = vmatpush2.msra.mxu0 0.0
    %141 = vmatprep.subr.mxu0 0.0
    %142 = vmatpush2.msra.mxu0 0.0
    %143 = vmatprep.subr.mxu0 0.0
    %144 = vmatpush2.msra.mxu0 0.0
    %145 = vmatprep.mubr.f32.mxu0 0.0
    %146 = vmatmul.mubr.f32.gmra.mxu0 %v59
    %v147 = vpop.f32.mrf.mxu0
    %v148 = vadd.f32 %v63, %v147
    %v149 = vpop.f32.mrf.mxu0
    %150 = vmatprep.mubr.f32.mxu0 0.0
    %151 = vmatmul.mubr.f32.gmra.mxu0 %v60
    %v152 = vpop.f32.mrf.mxu0
    %v153 = vadd.f32 %v64, %v152
    %v154 = vpop.f32.mrf.mxu0
    %155 = vmatprep.mubr.f32.mxu0 0.0
    %156 = vmatmul.mubr.f32.gmra.mxu0 %v61
    %v157 = vpop.f32.mrf.mxu0
    %v158 = vadd.f32 %v63, %v157
    %v159 = vpop.f32.mrf.mxu0
    %160 = vmatprep.mubr.f32.mxu0 0.0
    %161 = vmatmul.mubr.f32.gmra.mxu0 %v62
    %v162 = vpop.f32.mrf.mxu0
    %v163 = vadd.f32 %v64, %v162
    %v164 = vpop.f32.mrf.mxu0
    %165 = vdwg.mxu0
    %v166 = vlaneseq
    %v167 = vshrl.u32 %v166, 7
    %v168 = vadd.s32 %v167, 8
    %v169 = vadd.s32 %v167, 16
    %v170 = vadd.s32 %v167, 24
    %v171 = vshra.s32 %v167, 4
    %v172 = vshra.s32 %v168, 4
    %v173 = vshra.s32 %v169, 4
    %v174 = vshra.s32 %v170, 4
    %v175 = vshra.s32 %v34, 4
    %vm176 = vcmp.eq.s32.totalorder %v171, %v175
    %vm177 = vcmp.eq.s32.totalorder %v172, %v175
    %vm178 = vcmp.eq.s32.totalorder %v173, %v175
    %vm179 = vcmp.eq.s32.totalorder %v174, %v175
    %vm180 = vcmp.le.s32.totalorder %v34, %v167
    %vm181 = vcmp.le.s32.totalorder %v34, %v168
    %vm182 = vcmp.le.s32.totalorder %v34, %v169
    %vm183 = vcmp.le.s32.totalorder %v34, %v170
    %vm184 = vmand %vm176, %vm180
    %vm185 = vmand %vm177, %vm181
    %vm186 = vmand %vm178, %vm182
    %vm187 = vmand %vm179, %vm183
    %v188 = vsel %vm184, 0.0, -1e+30
    %v189 = vsel %vm185, 0.0, -1e+30
    %v190 = vsel %vm186, 0.0, -1e+30
    %v191 = vsel %vm187, 0.0, -1e+30
    %v192 = vld [vmem:[%s8] sm:$0x1]
    %v193 = vld [vmem:[%s8 + $0x1] sm:$0x1]
    %vm194 = vcmask 261120
    %v195 = vsel %vm194, %v148, 0.0
    %196 = vadd.xlane.f32.xlu0 %v195
    %v197 = vpop.xlane.xlu0 %196
    %v198 = vsel %vm194, %v153, 0.0
    %199 = vadd.xlane.f32.xlu0 %v198
    %v200 = vpop.xlane.xlu0 %199
    %v201 = vsel %vm194, %v158, 0.0
    %202 = vadd.xlane.f32.xlu0 %v201
    %v203 = vpop.xlane.xlu0 %202
    %v204 = vsel %vm194, %v163, 0.0
    %205 = vadd.xlane.f32.xlu0 %v204
    %v206 = vpop.xlane.xlu0 %205
    %v207 = vrcp.pop 32.0
    %v208 = vmul.f32 %v197, %v207
    %v209 = vmul.f32 %v200, %v207
    %v210 = vmul.f32 %v203, %v207
    %v211 = vmul.f32 %v206, %v207
    %v212 = vsub.f32 %v148, %v208
    %v213 = vsub.f32 %v153, %v209
    %v214 = vsub.f32 %v158, %v210
    %v215 = vsub.f32 %v163, %v211
    %v216 = vmul.f32 %v212, %v212
    %v217 = vmul.f32 %v213, %v213
    %v218 = vmul.f32 %v214, %v214
    %v219 = vmul.f32 %v215, %v215
    %v220 = vsel %vm194, %v216, 0.0
    %221 = vadd.xlane.f32.xlu0 %v220
    %v222 = vpop.xlane.xlu0 %221
    %v223 = vsel %vm194, %v217, 0.0
    %224 = vadd.xlane.f32.xlu0 %v223
    %v225 = vpop.xlane.xlu0 %224
    %v226 = vsel %vm194, %v218, 0.0
    %227 = vadd.xlane.f32.xlu0 %v226
    %v228 = vpop.xlane.xlu0 %227
    %v229 = vsel %vm194, %v219, 0.0
    %230 = vadd.xlane.f32.xlu0 %v229
    %v231 = vpop.xlane.xlu0 %230
    %v232 = vmul.f32 %v222, %v207
    %v233 = vmul.f32 %v225, %v207
    %v234 = vmul.f32 %v228, %v207
    %v235 = vmul.f32 %v231, %v207
    %v236 = vadd.f32 %v232, 1e-05
    %v237 = vadd.f32 %v233, 1e-05
    %v238 = vadd.f32 %v234, 1e-05
    %v239 = vadd.f32 %v235, 1e-05
    %v240 = vrsqrt.pop %v236
    %v241 = vrsqrt.pop %v237
    %v242 = vrsqrt.pop %v238
    %v243 = vrsqrt.pop %v239
    %v244 = vmul.f32 %v212, %v240
    %v245 = vmul.f32 %v213, %v241
    %v246 = vmul.f32 %v214, %v242
    %v247 = vmul.f32 %v215, %v243
    %v248 = vlaneseq
    %v249 = vshrl.u32 %v248, 7
    %v250 = vsub.s32 0, %v249
    %v251 = vrot.slane %v192, %v250
    %v252 = vmul.f32 %v244, %v251
    %v253 = vmul.f32 %v245, %v251
    %v254 = vmul.f32 %v246, %v251
    %v255 = vmul.f32 %v247, %v251
    %v256 = vlaneseq
    %v257 = vshrl.u32 %v256, 7
    %v258 = vsub.s32 0, %v257
    %v259 = vrot.slane %v193, %v258
    %v260 = vadd.f32 %v252, %v259
    %v261 = vadd.f32 %v253, %v259
    %v262 = vadd.f32 %v254, %v259
    %v263 = vadd.f32 %v255, %v259
    %v264 = vld [vmem:[%s3] sm:$0xff]
    %v265 = vld [vmem:[%s3 + $0x8] sm:$0xff]
    %v266 = vld [vmem:[%s3 + $0x10] sm:$0xff]
    %v267 = vld [vmem:[%s3 + $0x18] sm:$0xff]
    %v269 = vsel %vm194, %v260, 0
    %v272 = vsel %vm194, %v261, 0
    %v275 = vsel %vm194, %v262, 0
    %v278 = vsel %vm194, %v263, 0
    %280 = vmatprep.subr.mxu0 0.0
    %281 = vmatpush1.msra.mxu0 0.0
    %282 = vmatprep.subr.mxu0 0.0
    %283 = vmatpush1.msra.mxu0 0.0
    %284 = vmatprep.subr.mxu0 0.0
    %285 = vmatpush1.msra.mxu0 0.0
    %286 = vmatprep.subr.mxu0 0.0
    %287 = vmatpush1.msra.mxu0 0.0
    %288 = vmatprep.subr.mxu0 0.0
    %289 = vmatpush1.msra.mxu0 0.0
    %290 = vmatprep.subr.mxu0 0.0
    %291 = vmatpush1.msra.mxu0 0.0
    %292 = vmatprep.subr.mxu0 0.0
    %293 = vmatpush1.msra.mxu0 0.0
    %294 = vmatprep.subr.mxu0 0.0
    %295 = vmatpush1.msra.mxu0 0.0
    %296 = vmatprep.subr.mxu0 0.0
    %297 = vmatpush1.msra.mxu0 0.0
    %298 = vmatprep.subr.mxu0 0.0
    %299 = vmatpush1.msra.mxu0 0.0
    %300 = vmatprep.subr.mxu0 0.0
    %301 = vmatpush1.msra.mxu0 0.0
    %302 = vmatprep.subr.mxu0 0.0
    %303 = vmatpush1.msra.mxu0 0.0
    %304 = vmatprep.subr.mxu0 0.0
    %305 = vmatpush1.msra.mxu0 %v267
    %306 = vmatprep.subr.mxu0 0.0
    %307 = vmatpush1.msra.mxu0 %v266
    %308 = vmatprep.subr.mxu0 0.0
    %309 = vmatpush1.msra.mxu0 %v265
    %310 = vmatprep.subr.mxu0 0.0
    %311 = vmatpush1.msra.mxu0 %v264
    %312 = vmatprep.subr.mxu0 0.0
    %313 = vmatpush2.msra.mxu0 0.0
    %314 = vmatprep.subr.mxu0 0.0
    %315 = vmatpush2.msra.mxu0 0.0
    %316 = vmatprep.subr.mxu0 0.0
    %317 = vmatpush2.msra.mxu0 0.0
    %318 = vmatprep.subr.mxu0 0.0
    %319 = vmatpush2.msra.mxu0 0.0
    %320 = vmatprep.subr.mxu0 0.0
    %321 = vmatpush2.msra.mxu0 0.0
    %322 = vmatprep.subr.mxu0 0.0
    %323 = vmatpush2.msra.mxu0 0.0
    %324 = vmatprep.subr.mxu0 0.0
    %325 = vmatpush2.msra.mxu0 0.0
    %326 = vmatprep.subr.mxu0 0.0
    %327 = vmatpush2.msra.mxu0 0.0
    %328 = vmatprep.subr.mxu0 0.0
    %329 = vmatpush2.msra.mxu0 0.0
    %330 = vmatprep.subr.mxu0 0.0
    %331 = vmatpush2.msra.mxu0 0.0
    %332 = vmatprep.subr.mxu0 0.0
    %333 = vmatpush2.msra.mxu0 0.0
    %334 = vmatprep.subr.mxu0 0.0
    %335 = vmatpush2.msra.mxu0 0.0
    %336 = vmatprep.subr.mxu0 0.0
    %337 = vmatpush2.msra.mxu0 0.0
    %338 = vmatprep.subr.mxu0 0.0
    %339 = vmatpush2.msra.mxu0 0.0
    %340 = vmatprep.subr.mxu0 0.0
    %341 = vmatpush2.msra.mxu0 0.0
    %342 = vmatprep.subr.mxu0 0.0
    %343 = vmatpush2.msra.mxu0 0.0
    %344 = vmatprep.mubr.f32.mxu0 0.0
    %345 = vmatmul.mubr.f32.gmra.mxu0 %v269
    %v346 = vpop.f32.mrf.mxu0
    %v347 = vadd.f32 0.0, %v346
    %v348 = vpop.f32.mrf.mxu0
    %349 = vmatprep.mubr.f32.mxu0 0.0
    %350 = vmatmul.mubr.f32.gmra.mxu0 %v272
    %v351 = vpop.f32.mrf.mxu0
    %v352 = vadd.f32 0.0, %v351
    %v353 = vpop.f32.mrf.mxu0
    %354 = vmatprep.mubr.f32.mxu0 0.0
    %355 = vmatmul.mubr.f32.gmra.mxu0 %v275
    %v356 = vpop.f32.mrf.mxu0
    %v357 = vadd.f32 0.0, %v356
    %v358 = vpop.f32.mrf.mxu0
    %359 = vmatprep.mubr.f32.mxu0 0.0
    %360 = vmatmul.mubr.f32.gmra.mxu0 %v278
    %v361 = vpop.f32.mrf.mxu0
    %v362 = vadd.f32 0.0, %v361
    %v363 = vpop.f32.mrf.mxu0
    %364 = vdwg.mxu0
    %369 = vrot.lane.b32.xlu0 %v347, 120
    %v370 = vpop.permute.xlu0 %369
    %371 = vrot.lane.b32.xlu0 %v352, 120
    %v372 = vpop.permute.xlu0 %371
    %373 = vrot.lane.b32.xlu0 %v357, 120
    %v374 = vpop.permute.xlu0 %373
    %375 = vrot.lane.b32.xlu0 %v362, 120
    %v376 = vpop.permute.xlu0 %375
    %377 = vrot.lane.b32.xlu0 %v347, 112
    %v378 = vpop.permute.xlu0 %377
    %379 = vrot.lane.b32.xlu0 %v352, 112
    %v380 = vpop.permute.xlu0 %379
    %381 = vrot.lane.b32.xlu0 %v357, 112
    %v382 = vpop.permute.xlu0 %381
    %383 = vrot.lane.b32.xlu0 %v362, 112
    %v384 = vpop.permute.xlu0 %383
    %385 = vrot.lane.b32.xlu0 %v347, 104
    %v386 = vpop.permute.xlu0 %385
    %387 = vrot.lane.b32.xlu0 %v352, 104
    %v388 = vpop.permute.xlu0 %387
    %389 = vrot.lane.b32.xlu0 %v357, 104
    %v390 = vpop.permute.xlu0 %389
    %391 = vrot.lane.b32.xlu0 %v362, 104
    %v392 = vpop.permute.xlu0 %391
    %393 = vrot.lane.b32.xlu0 %v347, 96
    %v394 = vpop.permute.xlu0 %393
    %395 = vrot.lane.b32.xlu0 %v352, 96
    %v396 = vpop.permute.xlu0 %395
    %397 = vrot.lane.b32.xlu0 %v357, 96
    %v398 = vpop.permute.xlu0 %397
    %399 = vrot.lane.b32.xlu0 %v362, 96
    %v400 = vpop.permute.xlu0 %399
    %401 = vrot.lane.b32.xlu0 %v370, 96
    %v402 = vpop.permute.xlu0 %401
    %403 = vrot.lane.b32.xlu0 %v372, 96
    %v404 = vpop.permute.xlu0 %403
    %405 = vrot.lane.b32.xlu0 %v374, 96
    %v406 = vpop.permute.xlu0 %405
    %407 = vrot.lane.b32.xlu0 %v376, 96
    %v408 = vpop.permute.xlu0 %407
    %409 = vrot.lane.b32.xlu0 %v378, 96
    %v410 = vpop.permute.xlu0 %409
    %411 = vrot.lane.b32.xlu0 %v380, 96
    %v412 = vpop.permute.xlu0 %411
    %413 = vrot.lane.b32.xlu0 %v382, 96
    %v414 = vpop.permute.xlu0 %413
    %415 = vrot.lane.b32.xlu0 %v384, 96
    %v416 = vpop.permute.xlu0 %415
    %417 = vrot.lane.b32.xlu0 %v386, 96
    %v418 = vpop.permute.xlu0 %417
    %419 = vrot.lane.b32.xlu0 %v388, 96
    %v420 = vpop.permute.xlu0 %419
    %421 = vrot.lane.b32.xlu0 %v390, 96
    %v422 = vpop.permute.xlu0 %421
    %423 = vrot.lane.b32.xlu0 %v392, 96
    %v424 = vpop.permute.xlu0 %423
    %441 = vxpose.xlu0.b32.start [1/16] %v394, 128
    %442 = vxpose.xlu0.b32.cont [2/16] %v396, 128
    %443 = vxpose.xlu0.b32.cont [3/16] %v398, 128
    %444 = vxpose.xlu0.b32.cont [4/16] %v400, 128
    %445 = vxpose.xlu0.b32.cont [5/16] 0.0, 128
    %446 = vxpose.xlu0.b32.cont [6/16] 0.0, 128
    %447 = vxpose.xlu0.b32.cont [7/16] 0.0, 128
    %448 = vxpose.xlu0.b32.cont [8/16] 0.0, 128
    %449 = vxpose.xlu0.b32.cont [9/16] 0.0, 128
    %450 = vxpose.xlu0.b32.cont [10/16] 0.0, 128
    %451 = vxpose.xlu0.b32.cont [11/16] 0.0, 128
    %452 = vxpose.xlu0.b32.cont [12/16] 0.0, 128
    %453 = vxpose.xlu0.b32.cont [13/16] 0.0, 128
    %454 = vxpose.xlu0.b32.cont [14/16] 0.0, 128
    %455 = vxpose.xlu0.b32.cont [15/16] 0.0, 128
    %456 = vxpose.xlu0.b32.end [16/16] 0.0, 128
    %v457 = vpop.trf.xlu0
    %v458 = vpop.trf.xlu0
    %v459 = vpop.trf.xlu0
    %v460 = vpop.trf.xlu0
    %v461 = vpop.trf.xlu0
    %v462 = vpop.trf.xlu0
    %v463 = vpop.trf.xlu0
    %v464 = vpop.trf.xlu0
    %v465 = vpop.trf.xlu0
    %v466 = vpop.trf.xlu0
    %v467 = vpop.trf.xlu0
    %v468 = vpop.trf.xlu0
    %v469 = vpop.trf.xlu0
    %v470 = vpop.trf.xlu0
    %v471 = vpop.trf.xlu0
    %v472 = vpop.trf.xlu0
    %473 = vxpose.xlu0.b32.start [1/16] %v402, 128
    %474 = vxpose.xlu0.b32.cont [2/16] %v404, 128
    %475 = vxpose.xlu0.b32.cont [3/16] %v406, 128
    %476 = vxpose.xlu0.b32.cont [4/16] %v408, 128
    %477 = vxpose.xlu0.b32.cont [5/16] 0.0, 128
    %478 = vxpose.xlu0.b32.cont [6/16] 0.0, 128
    %479 = vxpose.xlu0.b32.cont [7/16] 0.0, 128
    %480 = vxpose.xlu0.b32.cont [8/16] 0.0, 128
    %481 = vxpose.xlu0.b32.cont [9/16] 0.0, 128
    %482 = vxpose.xlu0.b32.cont [10/16] 0.0, 128
    %483 = vxpose.xlu0.b32.cont [11/16] 0.0, 128
    %484 = vxpose.xlu0.b32.cont [12/16] 0.0, 128
    %485 = vxpose.xlu0.b32.cont [13/16] 0.0, 128
    %486 = vxpose.xlu0.b32.cont [14/16] 0.0, 128
    %487 = vxpose.xlu0.b32.cont [15/16] 0.0, 128
    %488 = vxpose.xlu0.b32.end [16/16] 0.0, 128
    %v489 = vpop.trf.xlu0
    %v490 = vpop.trf.xlu0
    %v491 = vpop.trf.xlu0
    %v492 = vpop.trf.xlu0
    %v493 = vpop.trf.xlu0
    %v494 = vpop.trf.xlu0
    %v495 = vpop.trf.xlu0
    %v496 = vpop.trf.xlu0
    %v497 = vpop.trf.xlu0
    %v498 = vpop.trf.xlu0
    %v499 = vpop.trf.xlu0
    %v500 = vpop.trf.xlu0
    %v501 = vpop.trf.xlu0
    %v502 = vpop.trf.xlu0
    %v503 = vpop.trf.xlu0
    %v504 = vpop.trf.xlu0
    %505 = vxpose.xlu0.b32.start [1/16] %v410, 128
    %506 = vxpose.xlu0.b32.cont [2/16] %v412, 128
    %507 = vxpose.xlu0.b32.cont [3/16] %v414, 128
    %508 = vxpose.xlu0.b32.cont [4/16] %v416, 128
    %509 = vxpose.xlu0.b32.cont [5/16] 0.0, 128
    %510 = vxpose.xlu0.b32.cont [6/16] 0.0, 128
    %511 = vxpose.xlu0.b32.cont [7/16] 0.0, 128
    %512 = vxpose.xlu0.b32.cont [8/16] 0.0, 128
    %513 = vxpose.xlu0.b32.cont [9/16] 0.0, 128
    %514 = vxpose.xlu0.b32.cont [10/16] 0.0, 128
    %515 = vxpose.xlu0.b32.cont [11/16] 0.0, 128
    %516 = vxpose.xlu0.b32.cont [12/16] 0.0, 128
    %517 = vxpose.xlu0.b32.cont [13/16] 0.0, 128
    %518 = vxpose.xlu0.b32.cont [14/16] 0.0, 128
    %519 = vxpose.xlu0.b32.cont [15/16] 0.0, 128
    %520 = vxpose.xlu0.b32.end [16/16] 0.0, 128
    %v521 = vpop.trf.xlu0
    %v522 = vpop.trf.xlu0
    %v523 = vpop.trf.xlu0
    %v524 = vpop.trf.xlu0
    %v525 = vpop.trf.xlu0
    %v526 = vpop.trf.xlu0
    %v527 = vpop.trf.xlu0
    %v528 = vpop.trf.xlu0
    %v529 = vpop.trf.xlu0
    %v530 = vpop.trf.xlu0
    %v531 = vpop.trf.xlu0
    %v532 = vpop.trf.xlu0
    %v533 = vpop.trf.xlu0
    %v534 = vpop.trf.xlu0
    %v535 = vpop.trf.xlu0
    %v536 = vpop.trf.xlu0
    %537 = vxpose.xlu0.b32.start [1/16] %v418, 128
    %538 = vxpose.xlu0.b32.cont [2/16] %v420, 128
    %539 = vxpose.xlu0.b32.cont [3/16] %v422, 128
    %540 = vxpose.xlu0.b32.cont [4/16] %v424, 128
    %541 = vxpose.xlu0.b32.cont [5/16] 0.0, 128
    %542 = vxpose.xlu0.b32.cont [6/16] 0.0, 128
    %543 = vxpose.xlu0.b32.cont [7/16] 0.0, 128
    %544 = vxpose.xlu0.b32.cont [8/16] 0.0, 128
    %545 = vxpose.xlu0.b32.cont [9/16] 0.0, 128
    %546 = vxpose.xlu0.b32.cont [10/16] 0.0, 128
    %547 = vxpose.xlu0.b32.cont [11/16] 0.0, 128
    %548 = vxpose.xlu0.b32.cont [12/16] 0.0, 128
    %549 = vxpose.xlu0.b32.cont [13/16] 0.0, 128
    %550 = vxpose.xlu0.b32.cont [14/16] 0.0, 128
    %551 = vxpose.xlu0.b32.cont [15/16] 0.0, 128
    %552 = vxpose.xlu0.b32.end [16/16] 0.0, 128
    %v553 = vpop.trf.xlu0
    %v554 = vpop.trf.xlu0
    %v555 = vpop.trf.xlu0
    %v556 = vpop.trf.xlu0
    %v557 = vpop.trf.xlu0
    %v558 = vpop.trf.xlu0
    %v559 = vpop.trf.xlu0
    %v560 = vpop.trf.xlu0
    %v561 = vpop.trf.xlu0
    %v562 = vpop.trf.xlu0
    %v563 = vpop.trf.xlu0
    %v564 = vpop.trf.xlu0
    %v565 = vpop.trf.xlu0
    %v566 = vpop.trf.xlu0
    %v567 = vpop.trf.xlu0
    %v568 = vpop.trf.xlu0
    %vm569 = vcmask 64512
    %v570 = vsel %vm569, %v347, 0
    %v572 = vsel %vm569, %v352, 0
    %v574 = vsel %vm569, %v357, 0
    %v576 = vsel %vm569, %v362, 0
    %578 = vmatprep.subr.mxu0 0.0
    %579 = vmatpush1.msra.mxu0 0.0
    %580 = vmatprep.subr.mxu0 0.0
    %581 = vmatpush1.msra.mxu0 0.0
    %582 = vmatprep.subr.mxu0 0.0
    %583 = vmatpush1.msra.mxu0 0.0
    %584 = vmatprep.subr.mxu0 0.0
    %585 = vmatpush1.msra.mxu0 0.0
    %586 = vmatprep.subr.mxu0 0.0
    %587 = vmatpush1.msra.mxu0 0.0
    %588 = vmatprep.subr.mxu0 0.0
    %589 = vmatpush1.msra.mxu0 0.0
    %590 = vmatprep.subr.mxu0 0.0
    %591 = vmatpush1.msra.mxu0 0.0
    %592 = vmatprep.subr.mxu0 0.0
    %593 = vmatpush1.msra.mxu0 0.0
    %594 = vmatprep.subr.mxu0 0.0
    %595 = vmatpush1.msra.mxu0 0.0
    %596 = vmatprep.subr.mxu0 0.0
    %597 = vmatpush1.msra.mxu0 0.0
    %598 = vmatprep.subr.mxu0 0.0
    %599 = vmatpush1.msra.mxu0 0.0
    %600 = vmatprep.subr.mxu0 0.0
    %601 = vmatpush1.msra.mxu0 0.0
    %602 = vmatprep.subr.mxu0 0.0
    %603 = vmatpush1.msra.mxu0 0.0
    %604 = vmatprep.subr.mxu0 0.0
    %605 = vmatpush1.msra.mxu0 0.0
    %606 = vmatprep.subr.mxu0 0.0
    %607 = vmatpush1.msra.mxu0 0.0
    %608 = vmatprep.subr.mxu0 0.0
    %609 = vmatpush1.msra.mxu0 %v457
    %610 = vmatprep.subr.mxu0 0.0
    %611 = vmatpush2.msra.mxu0 0.0
    %612 = vmatprep.subr.mxu0 0.0
    %613 = vmatpush2.msra.mxu0 0.0
    %614 = vmatprep.subr.mxu0 0.0
    %615 = vmatpush2.msra.mxu0 0.0
    %616 = vmatprep.subr.mxu0 0.0
    %617 = vmatpush2.msra.mxu0 0.0
    %618 = vmatprep.subr.mxu0 0.0
    %619 = vmatpush2.msra.mxu0 0.0
    %620 = vmatprep.subr.mxu0 0.0
    %621 = vmatpush2.msra.mxu0 0.0
    %622 = vmatprep.subr.mxu0 0.0
    %623 = vmatpush2.msra.mxu0 0.0
    %624 = vmatprep.subr.mxu0 0.0
    %625 = vmatpush2.msra.mxu0 0.0
    %626 = vmatprep.subr.mxu0 0.0
    %627 = vmatpush2.msra.mxu0 0.0
    %628 = vmatprep.subr.mxu0 0.0
    %629 = vmatpush2.msra.mxu0 0.0
    %630 = vmatprep.subr.mxu0 0.0
    %631 = vmatpush2.msra.mxu0 0.0
    %632 = vmatprep.subr.mxu0 0.0
    %633 = vmatpush2.msra.mxu0 0.0
    %634 = vmatprep.subr.mxu0 0.0
    %635 = vmatpush2.msra.mxu0 0.0
    %636 = vmatprep.subr.mxu0 0.0
    %637 = vmatpush2.msra.mxu0 0.0
    %638 = vmatprep.subr.mxu0 0.0
    %639 = vmatpush2.msra.mxu0 0.0
    %640 = vmatprep.subr.mxu0 0.0
    %641 = vmatpush2.msra.mxu0 0.0
    %642 = vmatprep.mubr.f32.mxu0 0.0
    %643 = vmatmul.mubr.f32.gmra.mxu0 %v570
    %v644 = vpop.f32.mrf.mxu0
    %v645 = vadd.f32 %v188, %v644
    %v646 = vpop.f32.mrf.mxu0
    %647 = vmatprep.mubr.f32.mxu0 0.0
    %648 = vmatmul.mubr.f32.gmra.mxu0 %v572
    %v649 = vpop.f32.mrf.mxu0
    %v650 = vadd.f32 %v189, %v649
    %v651 = vpop.f32.mrf.mxu0
    %652 = vmatprep.mubr.f32.mxu0 0.0
    %653 = vmatmul.mubr.f32.gmra.mxu0 %v574
    %v654 = vpop.f32.mrf.mxu0
    %v655 = vadd.f32 %v190, %v654
    %v656 = vpop.f32.mrf.mxu0
    %657 = vmatprep.mubr.f32.mxu0 0.0
    %658 = vmatmul.mubr.f32.gmra.mxu0 %v576
    %v659 = vpop.f32.mrf.mxu0
    %v660 = vadd.f32 %v191, %v659
    %v661 = vpop.f32.mrf.mxu0
    %662 = vdwg.mxu0
    %v663 = vsel %vm569, %v370, 0
    %v665 = vsel %vm569, %v372, 0
    %v667 = vsel %vm569, %v374, 0
    %v669 = vsel %vm569, %v376, 0
    %671 = vmatprep.subr.mxu0 0.0
    %672 = vmatpush1.msra.mxu0 0.0
    %673 = vmatprep.subr.mxu0 0.0
    %674 = vmatpush1.msra.mxu0 0.0
    %675 = vmatprep.subr.mxu0 0.0
    %676 = vmatpush1.msra.mxu0 0.0
    %677 = vmatprep.subr.mxu0 0.0
    %678 = vmatpush1.msra.mxu0 0.0
    %679 = vmatprep.subr.mxu0 0.0
    %680 = vmatpush1.msra.mxu0 0.0
    %681 = vmatprep.subr.mxu0 0.0
    %682 = vmatpush1.msra.mxu0 0.0
    %683 = vmatprep.subr.mxu0 0.0
    %684 = vmatpush1.msra.mxu0 0.0
    %685 = vmatprep.subr.mxu0 0.0
    %686 = vmatpush1.msra.mxu0 0.0
    %687 = vmatprep.subr.mxu0 0.0
    %688 = vmatpush1.msra.mxu0 0.0
    %689 = vmatprep.subr.mxu0 0.0
    %690 = vmatpush1.msra.mxu0 0.0
    %691 = vmatprep.subr.mxu0 0.0
    %692 = vmatpush1.msra.mxu0 0.0
    %693 = vmatprep.subr.mxu0 0.0
    %694 = vmatpush1.msra.mxu0 0.0
    %695 = vmatprep.subr.mxu0 0.0
    %696 = vmatpush1.msra.mxu0 0.0
    %697 = vmatprep.subr.mxu0 0.0
    %698 = vmatpush1.msra.mxu0 0.0
    %699 = vmatprep.subr.mxu0 0.0
    %700 = vmatpush1.msra.mxu0 0.0
    %701 = vmatprep.subr.mxu0 0.0
    %702 = vmatpush1.msra.mxu0 %v489
    %703 = vmatprep.subr.mxu0 0.0
    %704 = vmatpush2.msra.mxu0 0.0
    %705 = vmatprep.subr.mxu0 0.0
    %706 = vmatpush2.msra.mxu0 0.0
    %707 = vmatprep.subr.mxu0 0.0
    %708 = vmatpush2.msra.mxu0 0.0
    %709 = vmatprep.subr.mxu0 0.0
    %710 = vmatpush2.msra.mxu0 0.0
    %711 = vmatprep.subr.mxu0 0.0
    %712 = vmatpush2.msra.mxu0 0.0
    %713 = vmatprep.subr.mxu0 0.0
    %714 = vmatpush2.msra.mxu0 0.0
    %715 = vmatprep.subr.mxu0 0.0
    %716 = vmatpush2.msra.mxu0 0.0
    %717 = vmatprep.subr.mxu0 0.0
    %718 = vmatpush2.msra.mxu0 0.0
    %719 = vmatprep.subr.mxu0 0.0
    %720 = vmatpush2.msra.mxu0 0.0
    %721 = vmatprep.subr.mxu0 0.0
    %722 = vmatpush2.msra.mxu0 0.0
    %723 = vmatprep.subr.mxu0 0.0
    %724 = vmatpush2.msra.mxu0 0.0
    %725 = vmatprep.subr.mxu0 0.0
    %726 = vmatpush2.msra.mxu0 0.0
    %727 = vmatprep.subr.mxu0 0.0
    %728 = vmatpush2.msra.mxu0 0.0
    %729 = vmatprep.subr.mxu0 0.0
    %730 = vmatpush2.msra.mxu0 0.0
    %731 = vmatprep.subr.mxu0 0.0
    %732 = vmatpush2.msra.mxu0 0.0
    %733 = vmatprep.subr.mxu0 0.0
    %734 = vmatpush2.msra.mxu0 0.0
    %735 = vmatprep.mubr.f32.mxu0 0.0
    %736 = vmatmul.mubr.f32.gmra.mxu0 %v663
    %v737 = vpop.f32.mrf.mxu0
    %v738 = vadd.f32 %v188, %v737
    %v739 = vpop.f32.mrf.mxu0
    %740 = vmatprep.mubr.f32.mxu0 0.0
    %741 = vmatmul.mubr.f32.gmra.mxu0 %v665
    %v742 = vpop.f32.mrf.mxu0
    %v743 = vadd.f32 %v189, %v742
    %v744 = vpop.f32.mrf.mxu0
    %745 = vmatprep.mubr.f32.mxu0 0.0
    %746 = vmatmul.mubr.f32.gmra.mxu0 %v667
    %v747 = vpop.f32.mrf.mxu0
    %v748 = vadd.f32 %v190, %v747
    %v749 = vpop.f32.mrf.mxu0
    %750 = vmatprep.mubr.f32.mxu0 0.0
    %751 = vmatmul.mubr.f32.gmra.mxu0 %v669
    %v752 = vpop.f32.mrf.mxu0
    %v753 = vadd.f32 %v191, %v752
    %v754 = vpop.f32.mrf.mxu0
    %755 = vdwg.mxu0
    %v756 = vsel %vm569, %v378, 0
    %v758 = vsel %vm569, %v380, 0
    %v760 = vsel %vm569, %v382, 0
    %v762 = vsel %vm569, %v384, 0
    %764 = vmatprep.subr.mxu0 0.0
    %765 = vmatpush1.msra.mxu0 0.0
    %766 = vmatprep.subr.mxu0 0.0
    %767 = vmatpush1.msra.mxu0 0.0
    %768 = vmatprep.subr.mxu0 0.0
    %769 = vmatpush1.msra.mxu0 0.0
    %770 = vmatprep.subr.mxu0 0.0
    %771 = vmatpush1.msra.mxu0 0.0
    %772 = vmatprep.subr.mxu0 0.0
    %773 = vmatpush1.msra.mxu0 0.0
    %774 = vmatprep.subr.mxu0 0.0
    %775 = vmatpush1.msra.mxu0 0.0
    %776 = vmatprep.subr.mxu0 0.0
    %777 = vmatpush1.msra.mxu0 0.0
    %778 = vmatprep.subr.mxu0 0.0
    %779 = vmatpush1.msra.mxu0 0.0
    %780 = vmatprep.subr.mxu0 0.0
    %781 = vmatpush1.msra.mxu0 0.0
    %782 = vmatprep.subr.mxu0 0.0
    %783 = vmatpush1.msra.mxu0 0.0
    %784 = vmatprep.subr.mxu0 0.0
    %785 = vmatpush1.msra.mxu0 0.0
    %786 = vmatprep.subr.mxu0 0.0
    %787 = vmatpush1.msra.mxu0 0.0
    %788 = vmatprep.subr.mxu0 0.0
    %789 = vmatpush1.msra.mxu0 0.0
    %790 = vmatprep.subr.mxu0 0.0
    %791 = vmatpush1.msra.mxu0 0.0
    %792 = vmatprep.subr.mxu0 0.0
    %793 = vmatpush1.msra.mxu0 0.0
    %794 = vmatprep.subr.mxu0 0.0
    %795 = vmatpush1.msra.mxu0 %v521
    %796 = vmatprep.subr.mxu0 0.0
    %797 = vmatpush2.msra.mxu0 0.0
    %798 = vmatprep.subr.mxu0 0.0
    %799 = vmatpush2.msra.mxu0 0.0
    %800 = vmatprep.subr.mxu0 0.0
    %801 = vmatpush2.msra.mxu0 0.0
    %802 = vmatprep.subr.mxu0 0.0
    %803 = vmatpush2.msra.mxu0 0.0
    %804 = vmatprep.subr.mxu0 0.0
    %805 = vmatpush2.msra.mxu0 0.0
    %806 = vmatprep.subr.mxu0 0.0
    %807 = vmatpush2.msra.mxu0 0.0
    %808 = vmatprep.subr.mxu0 0.0
    %809 = vmatpush2.msra.mxu0 0.0
    %810 = vmatprep.subr.mxu0 0.0
    %811 = vmatpush2.msra.mxu0 0.0
    %812 = vmatprep.subr.mxu0 0.0
    %813 = vmatpush2.msra.mxu0 0.0
    %814 = vmatprep.subr.mxu0 0.0
    %815 = vmatpush2.msra.mxu0 0.0
    %816 = vmatprep.subr.mxu0 0.0
    %817 = vmatpush2.msra.mxu0 0.0
    %818 = vmatprep.subr.mxu0 0.0
    %819 = vmatpush2.msra.mxu0 0.0
    %820 = vmatprep.subr.mxu0 0.0
    %821 = vmatpush2.msra.mxu0 0.0
    %822 = vmatprep.subr.mxu0 0.0
    %823 = vmatpush2.msra.mxu0 0.0
    %824 = vmatprep.subr.mxu0 0.0
    %825 = vmatpush2.msra.mxu0 0.0
    %826 = vmatprep.subr.mxu0 0.0
    %827 = vmatpush2.msra.mxu0 0.0
    %828 = vmatprep.mubr.f32.mxu0 0.0
    %829 = vmatmul.mubr.f32.gmra.mxu0 %v756
    %v830 = vpop.f32.mrf.mxu0
    %v831 = vadd.f32 %v188, %v830
    %v832 = vpop.f32.mrf.mxu0
    %833 = vmatprep.mubr.f32.mxu0 0.0
    %834 = vmatmul.mubr.f32.gmra.mxu0 %v758
    %v835 = vpop.f32.mrf.mxu0
    %v836 = vadd.f32 %v189, %v835
    %v837 = vpop.f32.mrf.mxu0
    %838 = vmatprep.mubr.f32.mxu0 0.0
    %839 = vmatmul.mubr.f32.gmra.mxu0 %v760
    %v840 = vpop.f32.mrf.mxu0
    %v841 = vadd.f32 %v190, %v840
    %v842 = vpop.f32.mrf.mxu0
    %843 = vmatprep.mubr.f32.mxu0 0.0
    %844 = vmatmul.mubr.f32.gmra.mxu0 %v762
    %v845 = vpop.f32.mrf.mxu0
    %v846 = vadd.f32 %v191, %v845
    %v847 = vpop.f32.mrf.mxu0
    %848 = vdwg.mxu0
    %v849 = vsel %vm569, %v386, 0
    %v851 = vsel %vm569, %v388, 0
    %v853 = vsel %vm569, %v390, 0
    %v855 = vsel %vm569, %v392, 0
    %857 = vmatprep.subr.mxu0 0.0
    %858 = vmatpush1.msra.mxu0 0.0
    %859 = vmatprep.subr.mxu0 0.0
    %860 = vmatpush1.msra.mxu0 0.0
    %861 = vmatprep.subr.mxu0 0.0
    %862 = vmatpush1.msra.mxu0 0.0
    %863 = vmatprep.subr.mxu0 0.0
    %864 = vmatpush1.msra.mxu0 0.0
    %865 = vmatprep.subr.mxu0 0.0
    %866 = vmatpush1.msra.mxu0 0.0
    %867 = vmatprep.subr.mxu0 0.0
    %868 = vmatpush1.msra.mxu0 0.0
    %869 = vmatprep.subr.mxu0 0.0
    %870 = vmatpush1.msra.mxu0 0.0
    %871 = vmatprep.subr.mxu0 0.0
    %872 = vmatpush1.msra.mxu0 0.0
    %873 = vmatprep.subr.mxu0 0.0
    %874 = vmatpush1.msra.mxu0 0.0
    %875 = vmatprep.subr.mxu0 0.0
    %876 = vmatpush1.msra.mxu0 0.0
    %877 = vmatprep.subr.mxu0 0.0
    %878 = vmatpush1.msra.mxu0 0.0
    %879 = vmatprep.subr.mxu0 0.0
    %880 = vmatpush1.msra.mxu0 0.0
    %881 = vmatprep.subr.mxu0 0.0
    %882 = vmatpush1.msra.mxu0 0.0
    %883 = vmatprep.subr.mxu0 0.0
    %884 = vmatpush1.msra.mxu0 0.0
    %885 = vmatprep.subr.mxu0 0.0
    %886 = vmatpush1.msra.mxu0 0.0
    %887 = vmatprep.subr.mxu0 0.0
    %888 = vmatpush1.msra.mxu0 %v553
    %889 = vmatprep.subr.mxu0 0.0
    %890 = vmatpush2.msra.mxu0 0.0
    %891 = vmatprep.subr.mxu0 0.0
    %892 = vmatpush2.msra.mxu0 0.0
    %893 = vmatprep.subr.mxu0 0.0
    %894 = vmatpush2.msra.mxu0 0.0
    %895 = vmatprep.subr.mxu0 0.0
    %896 = vmatpush2.msra.mxu0 0.0
    %897 = vmatprep.subr.mxu0 0.0
    %898 = vmatpush2.msra.mxu0 0.0
    %899 = vmatprep.subr.mxu0 0.0
    %900 = vmatpush2.msra.mxu0 0.0
    %901 = vmatprep.subr.mxu0 0.0
    %902 = vmatpush2.msra.mxu0 0.0
    %903 = vmatprep.subr.mxu0 0.0
    %904 = vmatpush2.msra.mxu0 0.0
    %905 = vmatprep.subr.mxu0 0.0
    %906 = vmatpush2.msra.mxu0 0.0
    %907 = vmatprep.subr.mxu0 0.0
    %908 = vmatpush2.msra.mxu0 0.0
    %909 = vmatprep.subr.mxu0 0.0
    %910 = vmatpush2.msra.mxu0 0.0
    %911 = vmatprep.subr.mxu0 0.0
    %912 = vmatpush2.msra.mxu0 0.0
    %913 = vmatprep.subr.mxu0 0.0
    %914 = vmatpush2.msra.mxu0 0.0
    %915 = vmatprep.subr.mxu0 0.0
    %916 = vmatpush2.msra.mxu0 0.0
    %917 = vmatprep.subr.mxu0 0.0
    %918 = vmatpush2.msra.mxu0 0.0
    %919 = vmatprep.subr.mxu0 0.0
    %920 = vmatpush2.msra.mxu0 0.0
    %921 = vmatprep.mubr.f32.mxu0 0.0
    %922 = vmatmul.mubr.f32.gmra.mxu0 %v849
    %v923 = vpop.f32.mrf.mxu0
    %v924 = vadd.f32 %v188, %v923
    %v925 = vpop.f32.mrf.mxu0
    %926 = vmatprep.mubr.f32.mxu0 0.0
    %927 = vmatmul.mubr.f32.gmra.mxu0 %v851
    %v928 = vpop.f32.mrf.mxu0
    %v929 = vadd.f32 %v189, %v928
    %v930 = vpop.f32.mrf.mxu0
    %931 = vmatprep.mubr.f32.mxu0 0.0
    %932 = vmatmul.mubr.f32.gmra.mxu0 %v853
    %v933 = vpop.f32.mrf.mxu0
    %v934 = vadd.f32 %v190, %v933
    %v935 = vpop.f32.mrf.mxu0
    %936 = vmatprep.mubr.f32.mxu0 0.0
    %937 = vmatmul.mubr.f32.gmra.mxu0 %v855
    %v938 = vpop.f32.mrf.mxu0
    %v939 = vadd.f32 %v191, %v938
    %v940 = vpop.f32.mrf.mxu0
    %941 = vdwg.mxu0
    %v942 = vsel %vm194, %v645, -inf
    %943 = vmax.xlane.f32.xlu0 %v942
    %v944 = vpop.xlane.xlu0 %943
    %v945 = vsel %vm194, %v650, -inf
    %946 = vmax.xlane.f32.xlu0 %v945
    %v947 = vpop.xlane.xlu0 %946
    %v948 = vsel %vm194, %v655, -inf
    %949 = vmax.xlane.f32.xlu0 %v948
    %v950 = vpop.xlane.xlu0 %949
    %v951 = vsel %vm194, %v660, -inf
    %952 = vmax.xlane.f32.xlu0 %v951
    %v953 = vpop.xlane.xlu0 %952
    %v954 = vsel %vm194, %v738, -inf
    %955 = vmax.xlane.f32.xlu0 %v954
    %v956 = vpop.xlane.xlu0 %955
    %v957 = vsel %vm194, %v743, -inf
    %958 = vmax.xlane.f32.xlu0 %v957
    %v959 = vpop.xlane.xlu0 %958
    %v960 = vsel %vm194, %v748, -inf
    %961 = vmax.xlane.f32.xlu0 %v960
    %v962 = vpop.xlane.xlu0 %961
    %v963 = vsel %vm194, %v753, -inf
    %964 = vmax.xlane.f32.xlu0 %v963
    %v965 = vpop.xlane.xlu0 %964
    %v966 = vsel %vm194, %v831, -inf
    %967 = vmax.xlane.f32.xlu0 %v966
    %v968 = vpop.xlane.xlu0 %967
    %v969 = vsel %vm194, %v836, -inf
    %970 = vmax.xlane.f32.xlu0 %v969
    %v971 = vpop.xlane.xlu0 %970
    %v972 = vsel %vm194, %v841, -inf
    %973 = vmax.xlane.f32.xlu0 %v972
    %v974 = vpop.xlane.xlu0 %973
    %v975 = vsel %vm194, %v846, -inf
    %976 = vmax.xlane.f32.xlu0 %v975
    %v977 = vpop.xlane.xlu0 %976
    %v978 = vsel %vm194, %v924, -inf
    %979 = vmax.xlane.f32.xlu0 %v978
    %v980 = vpop.xlane.xlu0 %979
    %v981 = vsel %vm194, %v929, -inf
    %982 = vmax.xlane.f32.xlu0 %v981
    %v983 = vpop.xlane.xlu0 %982
    %v984 = vsel %vm194, %v934, -inf
    %985 = vmax.xlane.f32.xlu0 %v984
    %v986 = vpop.xlane.xlu0 %985
    %v987 = vsel %vm194, %v939, -inf
    %988 = vmax.xlane.f32.xlu0 %v987
    %v989 = vpop.xlane.xlu0 %988
    %v990 = vsub.f32 %v645, %v944
    %v991 = vsub.f32 %v650, %v947
    %v992 = vsub.f32 %v655, %v950
    %v993 = vsub.f32 %v660, %v953
    %v994 = vsub.f32 %v738, %v956
    %v995 = vsub.f32 %v743, %v959
    %v996 = vsub.f32 %v748, %v962
    %v997 = vsub.f32 %v753, %v965
    %v998 = vsub.f32 %v831, %v968
    %v999 = vsub.f32 %v836, %v971
    %v1000 = vsub.f32 %v841, %v974
    %v1001 = vsub.f32 %v846, %v977
    %v1002 = vsub.f32 %v924, %v980
    %v1003 = vsub.f32 %v929, %v983
    %v1004 = vsub.f32 %v934, %v986
    %v1005 = vsub.f32 %v939, %v989
    %v1006 = vmul.f32 %v990, 1.442695
    %v1007 = vpow.pop %v1006
    %v1008 = vmul.f32 %v991, 1.442695
    %v1009 = vpow.pop %v1008
    %v1010 = vmul.f32 %v992, 1.442695
    %v1011 = vpow.pop %v1010
    %v1012 = vmul.f32 %v993, 1.442695
    %v1013 = vpow.pop %v1012
    %v1014 = vmul.f32 %v994, 1.442695
    %v1015 = vpow.pop %v1014
    %v1016 = vmul.f32 %v995, 1.442695
    %v1017 = vpow.pop %v1016
    %v1018 = vmul.f32 %v996, 1.442695
    %v1019 = vpow.pop %v1018
    %v1020 = vmul.f32 %v997, 1.442695
    %v1021 = vpow.pop %v1020
    %v1022 = vmul.f32 %v998, 1.442695
    %v1023 = vpow.pop %v1022
    %v1024 = vmul.f32 %v999, 1.442695
    %v1025 = vpow.pop %v1024
    %v1026 = vmul.f32 %v1000, 1.442695
    %v1027 = vpow.pop %v1026
    %v1028 = vmul.f32 %v1001, 1.442695
    %v1029 = vpow.pop %v1028
    %v1030 = vmul.f32 %v1002, 1.442695
    %v1031 = vpow.pop %v1030
    %v1032 = vmul.f32 %v1003, 1.442695
    %v1033 = vpow.pop %v1032
    %v1034 = vmul.f32 %v1004, 1.442695
    %v1035 = vpow.pop %v1034
    %v1036 = vmul.f32 %v1005, 1.442695
    %v1037 = vpow.pop %v1036
    %v1038 = vsel %vm194, %v1007, 0.0
    %1039 = vadd.xlane.f32.xlu0 %v1038
    %v1040 = vpop.xlane.xlu0 %1039
    %v1041 = vsel %vm194, %v1009, 0.0
    %1042 = vadd.xlane.f32.xlu0 %v1041
    %v1043 = vpop.xlane.xlu0 %1042
    %v1044 = vsel %vm194, %v1011, 0.0
    %1045 = vadd.xlane.f32.xlu0 %v1044
    %v1046 = vpop.xlane.xlu0 %1045
    %v1047 = vsel %vm194, %v1013, 0.0
    %1048 = vadd.xlane.f32.xlu0 %v1047
    %v1049 = vpop.xlane.xlu0 %1048
    %v1050 = vsel %vm194, %v1015, 0.0
    %1051 = vadd.xlane.f32.xlu0 %v1050
    %v1052 = vpop.xlane.xlu0 %1051
    %v1053 = vsel %vm194, %v1017, 0.0
    %1054 = vadd.xlane.f32.xlu0 %v1053
    %v1055 = vpop.xlane.xlu0 %1054
    %v1056 = vsel %vm194, %v1019, 0.0
    %1057 = vadd.xlane.f32.xlu0 %v1056
    %v1058 = vpop.xlane.xlu0 %1057
    %v1059 = vsel %vm194, %v1021, 0.0
    %1060 = vadd.xlane.f32.xlu0 %v1059
    %v1061 = vpop.xlane.xlu0 %1060
    %v1062 = vsel %vm194, %v1023, 0.0
    %1063 = vadd.xlane.f32.xlu0 %v1062
    %v1064 = vpop.xlane.xlu0 %1063
    %v1065 = vsel %vm194, %v1025, 0.0
    %1066 = vadd.xlane.f32.xlu0 %v1065
    %v1067 = vpop.xlane.xlu0 %1066
    %v1068 = vsel %vm194, %v1027, 0.0
    %1069 = vadd.xlane.f32.xlu0 %v1068
    %v1070 = vpop.xlane.xlu0 %1069
    %v1071 = vsel %vm194, %v1029, 0.0
    %1072 = vadd.xlane.f32.xlu0 %v1071
    %v1073 = vpop.xlane.xlu0 %1072
    %v1074 = vsel %vm194, %v1031, 0.0
    %1075 = vadd.xlane.f32.xlu0 %v1074
    %v1076 = vpop.xlane.xlu0 %1075
    %v1077 = vsel %vm194, %v1033, 0.0
    %1078 = vadd.xlane.f32.xlu0 %v1077
    %v1079 = vpop.xlane.xlu0 %1078
    %v1080 = vsel %vm194, %v1035, 0.0
    %1081 = vadd.xlane.f32.xlu0 %v1080
    %v1082 = vpop.xlane.xlu0 %1081
    %v1083 = vsel %vm194, %v1037, 0.0
    %1084 = vadd.xlane.f32.xlu0 %v1083
    %v1085 = vpop.xlane.xlu0 %1084
    %v1086 = vrcp.pop %v1040
    %v1087 = vrcp.pop %v1043
    %v1088 = vrcp.pop %v1046
    %v1089 = vrcp.pop %v1049
    %v1090 = vrcp.pop %v1052
    %v1091 = vrcp.pop %v1055
    %v1092 = vrcp.pop %v1058
    %v1093 = vrcp.pop %v1061
    %v1094 = vrcp.pop %v1064
    %v1095 = vrcp.pop %v1067
    %v1096 = vrcp.pop %v1070
    %v1097 = vrcp.pop %v1073
    %v1098 = vrcp.pop %v1076
    %v1099 = vrcp.pop %v1079
    %v1100 = vrcp.pop %v1082
    %v1101 = vrcp.pop %v1085
    %v1102 = vmul.f32 %v1007, %v1086
    %v1103 = vmul.f32 %v1009, %v1087
    %v1104 = vmul.f32 %v1011, %v1088
    %v1105 = vmul.f32 %v1013, %v1089
    %v1106 = vmul.f32 %v1015, %v1090
    %v1107 = vmul.f32 %v1017, %v1091
    %v1108 = vmul.f32 %v1019, %v1092
    %v1109 = vmul.f32 %v1021, %v1093
    %v1110 = vmul.f32 %v1023, %v1094
    %v1111 = vmul.f32 %v1025, %v1095
    %v1112 = vmul.f32 %v1027, %v1096
    %v1113 = vmul.f32 %v1029, %v1097
    %v1114 = vmul.f32 %v1031, %v1098
    %v1115 = vmul.f32 %v1033, %v1099
    %v1116 = vmul.f32 %v1035, %v1100
    %v1117 = vmul.f32 %v1037, %v1101
    %1118 = vrot.lane.b32.xlu0 %v347, 64
    %v1119 = vpop.permute.xlu0 %1118
    %1120 = vrot.lane.b32.xlu0 %v352, 64
    %v1121 = vpop.permute.xlu0 %1120
    %1122 = vrot.lane.b32.xlu0 %v357, 64
    %v1123 = vpop.permute.xlu0 %1122
    %1124 = vrot.lane.b32.xlu0 %v362, 64
    %v1125 = vpop.permute.xlu0 %1124
    %1126 = vrot.lane.b32.xlu0 %v370, 64
    %v1127 = vpop.permute.xlu0 %1126
    %1128 = vrot.lane.b32.xlu0 %v372, 64
    %v1129 = vpop.permute.xlu0 %1128
    %1130 = vrot.lane.b32.xlu0 %v374, 64
    %v1131 = vpop.permute.xlu0 %1130
    %1132 = vrot.lane.b32.xlu0 %v376, 64
    %v1133 = vpop.permute.xlu0 %1132
    %1134 = vrot.lane.b32.xlu0 %v378, 64
    %v1135 = vpop.permute.xlu0 %1134
    %1136 = vrot.lane.b32.xlu0 %v380, 64
    %v1137 = vpop.permute.xlu0 %1136
    %1138 = vrot.lane.b32.xlu0 %v382, 64
    %v1139 = vpop.permute.xlu0 %1138
    %1140 = vrot.lane.b32.xlu0 %v384, 64
    %v1141 = vpop.permute.xlu0 %1140
    %1142 = vrot.lane.b32.xlu0 %v386, 64
    %v1143 = vpop.permute.xlu0 %1142
    %1144 = vrot.lane.b32.xlu0 %v388, 64
    %v1145 = vpop.permute.xlu0 %1144
    %1146 = vrot.lane.b32.xlu0 %v390, 64
    %v1147 = vpop.permute.xlu0 %1146
    %1148 = vrot.lane.b32.xlu0 %v392, 64
    %v1149 = vpop.permute.xlu0 %1148
    %1166 = vxpose.xlu0.b32.start [1/16] %v1119, 128
    %1167 = vxpose.xlu0.b32.cont [2/16] %v1121, 128
    %1168 = vxpose.xlu0.b32.cont [3/16] %v1123, 128
    %1169 = vxpose.xlu0.b32.cont [4/16] %v1125, 128
    %1170 = vxpose.xlu0.b32.cont [5/16] 0.0, 128
    %1171 = vxpose.xlu0.b32.cont [6/16] 0.0, 128
    %1172 = vxpose.xlu0.b32.cont [7/16] 0.0, 128
    %1173 = vxpose.xlu0.b32.cont [8/16] 0.0, 128
    %1174 = vxpose.xlu0.b32.cont [9/16] 0.0, 128
    %1175 = vxpose.xlu0.b32.cont [10/16] 0.0, 128
    %1176 = vxpose.xlu0.b32.cont [11/16] 0.0, 128
    %1177 = vxpose.xlu0.b32.cont [12/16] 0.0, 128
    %1178 = vxpose.xlu0.b32.cont [13/16] 0.0, 128
    %1179 = vxpose.xlu0.b32.cont [14/16] 0.0, 128
    %1180 = vxpose.xlu0.b32.cont [15/16] 0.0, 128
    %1181 = vxpose.xlu0.b32.end [16/16] 0.0, 128
    %v1182 = vpop.trf.xlu0
    %v1183 = vpop.trf.xlu0
    %v1184 = vpop.trf.xlu0
    %v1185 = vpop.trf.xlu0
    %v1186 = vpop.trf.xlu0
    %v1187 = vpop.trf.xlu0
    %v1188 = vpop.trf.xlu0
    %v1189 = vpop.trf.xlu0
    %v1190 = vpop.trf.xlu0
    %v1191 = vpop.trf.xlu0
    %v1192 = vpop.trf.xlu0
    %v1193 = vpop.trf.xlu0
    %v1194 = vpop.trf.xlu0
    %v1195 = vpop.trf.xlu0
    %v1196 = vpop.trf.xlu0
    %v1197 = vpop.trf.xlu0
    %1198 = vxpose.xlu0.b32.start [1/16] %v1127, 128
    %1199 = vxpose.xlu0.b32.cont [2/16] %v1129, 128
    %1200 = vxpose.xlu0.b32.cont [3/16] %v1131, 128
    %1201 = vxpose.xlu0.b32.cont [4/16] %v1133, 128
    %1202 = vxpose.xlu0.b32.cont [5/16] 0.0, 128
    %1203 = vxpose.xlu0.b32.cont [6/16] 0.0, 128
    %1204 = vxpose.xlu0.b32.cont [7/16] 0.0, 128
    %1205 = vxpose.xlu0.b32.cont [8/16] 0.0, 128
    %1206 = vxpose.xlu0.b32.cont [9/16] 0.0, 128
    %1207 = vxpose.xlu0.b32.cont [10/16] 0.0, 128
    %1208 = vxpose.xlu0.b32.cont [11/16] 0.0, 128
    %1209 = vxpose.xlu0.b32.cont [12/16] 0.0, 128
    %1210 = vxpose.xlu0.b32.cont [13/16] 0.0, 128
    %1211 = vxpose.xlu0.b32.cont [14/16] 0.0, 128
    %1212 = vxpose.xlu0.b32.cont [15/16] 0.0, 128
    %1213 = vxpose.xlu0.b32.end [16/16] 0.0, 128
    %v1214 = vpop.trf.xlu0
    %v1215 = vpop.trf.xlu0
    %v1216 = vpop.trf.xlu0
    %v1217 = vpop.trf.xlu0
    %v1218 = vpop.trf.xlu0
    %v1219 = vpop.trf.xlu0
    %v1220 = vpop.trf.xlu0
    %v1221 = vpop.trf.xlu0
    %v1222 = vpop.trf.xlu0
    %v1223 = vpop.trf.xlu0
    %v1224 = vpop.trf.xlu0
    %v1225 = vpop.trf.xlu0
    %v1226 = vpop.trf.xlu0
    %v1227 = vpop.trf.xlu0
    %v1228 = vpop.trf.xlu0
    %v1229 = vpop.trf.xlu0
    %1230 = vxpose.xlu0.b32.start [1/16] %v1135, 128
    %1231 = vxpose.xlu0.b32.cont [2/16] %v1137, 128
    %1232 = vxpose.xlu0.b32.cont [3/16] %v1139, 128
    %1233 = vxpose.xlu0.b32.cont [4/16] %v1141, 128
    %1234 = vxpose.xlu0.b32.cont [5/16] 0.0, 128
    %1235 = vxpose.xlu0.b32.cont [6/16] 0.0, 128
    %1236 = vxpose.xlu0.b32.cont [7/16] 0.0, 128
    %1237 = vxpose.xlu0.b32.cont [8/16] 0.0, 128
    %1238 = vxpose.xlu0.b32.cont [9/16] 0.0, 128
    %1239 = vxpose.xlu0.b32.cont [10/16] 0.0, 128
    %1240 = vxpose.xlu0.b32.cont [11/16] 0.0, 128
    %1241 = vxpose.xlu0.b32.cont [12/16] 0.0, 128
    %1242 = vxpose.xlu0.b32.cont [13/16] 0.0, 128
    %1243 = vxpose.xlu0.b32.cont [14/16] 0.0, 128
    %1244 = vxpose.xlu0.b32.cont [15/16] 0.0, 128
    %1245 = vxpose.xlu0.b32.end [16/16] 0.0, 128
    %v1246 = vpop.trf.xlu0
    %v1247 = vpop.trf.xlu0
    %v1248 = vpop.trf.xlu0
    %v1249 = vpop.trf.xlu0
    %v1250 = vpop.trf.xlu0
    %v1251 = vpop.trf.xlu0
    %v1252 = vpop.trf.xlu0
    %v1253 = vpop.trf.xlu0
    %v1254 = vpop.trf.xlu0
    %v1255 = vpop.trf.xlu0
    %v1256 = vpop.trf.xlu0
    %v1257 = vpop.trf.xlu0
    %v1258 = vpop.trf.xlu0
    %v1259 = vpop.trf.xlu0
    %v1260 = vpop.trf.xlu0
    %v1261 = vpop.trf.xlu0
    %1262 = vxpose.xlu0.b32.start [1/16] %v1143, 128
    %1263 = vxpose.xlu0.b32.cont [2/16] %v1145, 128
    %1264 = vxpose.xlu0.b32.cont [3/16] %v1147, 128
    %1265 = vxpose.xlu0.b32.cont [4/16] %v1149, 128
    %1266 = vxpose.xlu0.b32.cont [5/16] 0.0, 128
    %1267 = vxpose.xlu0.b32.cont [6/16] 0.0, 128
    %1268 = vxpose.xlu0.b32.cont [7/16] 0.0, 128
    %1269 = vxpose.xlu0.b32.cont [8/16] 0.0, 128
    %1270 = vxpose.xlu0.b32.cont [9/16] 0.0, 128
    %1271 = vxpose.xlu0.b32.cont [10/16] 0.0, 128
    %1272 = vxpose.xlu0.b32.cont [11/16] 0.0, 128
    %1273 = vxpose.xlu0.b32.cont [12/16] 0.0, 128
    %1274 = vxpose.xlu0.b32.cont [13/16] 0.0, 128
    %1275 = vxpose.xlu0.b32.cont [14/16] 0.0, 128
    %1276 = vxpose.xlu0.b32.cont [15/16] 0.0, 128
    %1277 = vxpose.xlu0.b32.end [16/16] 0.0, 128
    %v1278 = vpop.trf.xlu0
    %v1279 = vpop.trf.xlu0
    %v1280 = vpop.trf.xlu0
    %v1281 = vpop.trf.xlu0
    %v1282 = vpop.trf.xlu0
    %v1283 = vpop.trf.xlu0
    %v1284 = vpop.trf.xlu0
    %v1285 = vpop.trf.xlu0
    %v1286 = vpop.trf.xlu0
    %v1287 = vpop.trf.xlu0
    %v1288 = vpop.trf.xlu0
    %v1289 = vpop.trf.xlu0
    %v1290 = vpop.trf.xlu0
    %v1291 = vpop.trf.xlu0
    %v1292 = vpop.trf.xlu0
    %v1293 = vpop.trf.xlu0
    %v1295 = vsel %vm194, %v1182, 0
    %v1298 = vsel %vm194, %v1102, 0
    %v1301 = vsel %vm194, %v1103, 0
    %v1304 = vsel %vm194, %v1104, 0
    %v1307 = vsel %vm194, %v1105, 0
    %1309 = vmatprep.subr.mxu0 0.0
    %1310 = vmatpush1.xpose.msra.mxu0 0.0
    %1311 = vmatprep.subr.mxu0 0.0
    %1312 = vmatpush1.xpose.msra.mxu0 0.0
    %1313 = vmatprep.subr.mxu0 0.0
    %1314 = vmatpush1.xpose.msra.mxu0 0.0
    %1315 = vmatprep.subr.mxu0 0.0
    %1316 = vmatpush1.xpose.msra.mxu0 0.0
    %1317 = vmatprep.subr.mxu0 0.0
    %1318 = vmatpush1.xpose.msra.mxu0 0.0
    %1319 = vmatprep.subr.mxu0 0.0
    %1320 = vmatpush1.xpose.msra.mxu0 0.0
    %1321 = vmatprep.subr.mxu0 0.0
    %1322 = vmatpush1.xpose.msra.mxu0 0.0
    %1323 = vmatprep.subr.mxu0 0.0
    %1324 = vmatpush1.xpose.msra.mxu0 0.0
    %1325 = vmatprep.subr.mxu0 0.0
    %1326 = vmatpush1.xpose.msra.mxu0 0.0
    %1327 = vmatprep.subr.mxu0 0.0
    %1328 = vmatpush1.xpose.msra.mxu0 0.0
    %1329 = vmatprep.subr.mxu0 0.0
    %1330 = vmatpush1.xpose.msra.mxu0 0.0
    %1331 = vmatprep.subr.mxu0 0.0
    %1332 = vmatpush1.xpose.msra.mxu0 0.0
    %1333 = vmatprep.subr.mxu0 0.0
    %1334 = vmatpush1.xpose.msra.mxu0 %v1307
    %1335 = vmatprep.subr.mxu0 0.0
    %1336 = vmatpush1.xpose.msra.mxu0 %v1304
    %1337 = vmatprep.subr.mxu0 0.0
    %1338 = vmatpush1.xpose.msra.mxu0 %v1301
    %1339 = vmatprep.subr.mxu0 0.0
    %1340 = vmatpush1.xpose.msra.mxu0 %v1298
    %1341 = vmatprep.subr.mxu0 0.0
    %1342 = vmatpush2.xpose.msra.mxu0 0.0
    %1343 = vmatprep.subr.mxu0 0.0
    %1344 = vmatpush2.xpose.msra.mxu0 0.0
    %1345 = vmatprep.subr.mxu0 0.0
    %1346 = vmatpush2.xpose.msra.mxu0 0.0
    %1347 = vmatprep.subr.mxu0 0.0
    %1348 = vmatpush2.xpose.msra.mxu0 0.0
    %1349 = vmatprep.subr.mxu0 0.0
    %1350 = vmatpush2.xpose.msra.mxu0 0.0
    %1351 = vmatprep.subr.mxu0 0.0
    %1352 = vmatpush2.xpose.msra.mxu0 0.0
    %1353 = vmatprep.subr.mxu0 0.0
    %1354 = vmatpush2.xpose.msra.mxu0 0.0
    %1355 = vmatprep.subr.mxu0 0.0
    %1356 = vmatpush2.xpose.msra.mxu0 0.0
    %1357 = vmatprep.subr.mxu0 0.0
    %1358 = vmatpush2.xpose.msra.mxu0 0.0
    %1359 = vmatprep.subr.mxu0 0.0
    %1360 = vmatpush2.xpose.msra.mxu0 0.0
    %1361 = vmatprep.subr.mxu0 0.0
    %1362 = vmatpush2.xpose.msra.mxu0 0.0
    %1363 = vmatprep.subr.mxu0 0.0
    %1364 = vmatpush2.xpose.msra.mxu0 0.0
    %1365 = vmatprep.subr.mxu0 0.0
    %1366 = vmatpush2.xpose.msra.mxu0 0.0
    %1367 = vmatprep.subr.mxu0 0.0
    %1368 = vmatpush2.xpose.msra.mxu0 0.0
    %1369 = vmatprep.subr.mxu0 0.0
    %1370 = vmatpush2.xpose.msra.mxu0 0.0
    %1371 = vmatprep.subr.mxu0 0.0
    %1372 = vmatpush2.xpose.msra.mxu0 0.0
    %1373 = vmatprep.mubr.f32.mxu0 0.0
    %1374 = vmatmul.mubr.f32.gmra.mxu0 %v1295
    %v1375 = vpop.f32.mrf.mxu0
    %v1376 = vadd.f32 0.0, %v1375
    %v1377 = vpop.f32.mrf.mxu0
    %1378 = vdwg.mxu0
    %v1380 = vsel %vm194, %v1214, 0
    %v1383 = vsel %vm194, %v1106, 0
    %v1386 = vsel %vm194, %v1107, 0
    %v1389 = vsel %vm194, %v1108, 0
    %v1392 = vsel %vm194, %v1109, 0
    %1394 = vmatprep.subr.mxu0 0.0
    %1395 = vmatpush1.xpose.msra.mxu0 0.0
    %1396 = vmatprep.subr.mxu0 0.0
    %1397 = vmatpush1.xpose.msra.mxu0 0.0
    %1398 = vmatprep.subr.mxu0 0.0
    %1399 = vmatpush1.xpose.msra.mxu0 0.0
    %1400 = vmatprep.subr.mxu0 0.0
    %1401 = vmatpush1.xpose.msra.mxu0 0.0
    %1402 = vmatprep.subr.mxu0 0.0
    %1403 = vmatpush1.xpose.msra.mxu0 0.0
    %1404 = vmatprep.subr.mxu0 0.0
    %1405 = vmatpush1.xpose.msra.mxu0 0.0
    %1406 = vmatprep.subr.mxu0 0.0
    %1407 = vmatpush1.xpose.msra.mxu0 0.0
    %1408 = vmatprep.subr.mxu0 0.0
    %1409 = vmatpush1.xpose.msra.mxu0 0.0
    %1410 = vmatprep.subr.mxu0 0.0
    %1411 = vmatpush1.xpose.msra.mxu0 0.0
    %1412 = vmatprep.subr.mxu0 0.0
    %1413 = vmatpush1.xpose.msra.mxu0 0.0
    %1414 = vmatprep.subr.mxu0 0.0
    %1415 = vmatpush1.xpose.msra.mxu0 0.0
    %1416 = vmatprep.subr.mxu0 0.0
    %1417 = vmatpush1.xpose.msra.mxu0 0.0
    %1418 = vmatprep.subr.mxu0 0.0
    %1419 = vmatpush1.xpose.msra.mxu0 %v1392
    %1420 = vmatprep.subr.mxu0 0.0
    %1421 = vmatpush1.xpose.msra.mxu0 %v1389
    %1422 = vmatprep.subr.mxu0 0.0
    %1423 = vmatpush1.xpose.msra.mxu0 %v1386
    %1424 = vmatprep.subr.mxu0 0.0
    %1425 = vmatpush1.xpose.msra.mxu0 %v1383
    %1426 = vmatprep.subr.mxu0 0.0
    %1427 = vmatpush2.xpose.msra.mxu0 0.0
    %1428 = vmatprep.subr.mxu0 0.0
    %1429 = vmatpush2.xpose.msra.mxu0 0.0
    %1430 = vmatprep.subr.mxu0 0.0
    %1431 = vmatpush2.xpose.msra.mxu0 0.0
    %1432 = vmatprep.subr.mxu0 0.0
    %1433 = vmatpush2.xpose.msra.mxu0 0.0
    %1434 = vmatprep.subr.mxu0 0.0
    %1435 = vmatpush2.xpose.msra.mxu0 0.0
    %1436 = vmatprep.subr.mxu0 0.0
    %1437 = vmatpush2.xpose.msra.mxu0 0.0
    %1438 = vmatprep.subr.mxu0 0.0
    %1439 = vmatpush2.xpose.msra.mxu0 0.0
    %1440 = vmatprep.subr.mxu0 0.0
    %1441 = vmatpush2.xpose.msra.mxu0 0.0
    %1442 = vmatprep.subr.mxu0 0.0
    %1443 = vmatpush2.xpose.msra.mxu0 0.0
    %1444 = vmatprep.subr.mxu0 0.0
    %1445 = vmatpush2.xpose.msra.mxu0 0.0
    %1446 = vmatprep.subr.mxu0 0.0
    %1447 = vmatpush2.xpose.msra.mxu0 0.0
    %1448 = vmatprep.subr.mxu0 0.0
    %1449 = vmatpush2.xpose.msra.mxu0 0.0
    %1450 = vmatprep.subr.mxu0 0.0
    %1451 = vmatpush2.xpose.msra.mxu0 0.0
    %1452 = vmatprep.subr.mxu0 0.0
    %1453 = vmatpush2.xpose.msra.mxu0 0.0
    %1454 = vmatprep.subr.mxu0 0.0
    %1455 = vmatpush2.xpose.msra.mxu0 0.0
    %1456 = vmatprep.subr.mxu0 0.0
    %1457 = vmatpush2.xpose.msra.mxu0 0.0
    %1458 = vmatprep.mubr.f32.mxu0 0.0
    %1459 = vmatmul.mubr.f32.gmra.mxu0 %v1380
    %v1460 = vpop.f32.mrf.mxu0
    %v1461 = vadd.f32 0.0, %v1460
    %v1462 = vpop.f32.mrf.mxu0
    %1463 = vdwg.mxu0
    %v1465 = vsel %vm194, %v1246, 0
    %v1468 = vsel %vm194, %v1110, 0
    %v1471 = vsel %vm194, %v1111, 0
    %v1474 = vsel %vm194, %v1112, 0
    %v1477 = vsel %vm194, %v1113, 0
    %1479 = vmatprep.subr.mxu0 0.0
    %1480 = vmatpush1.xpose.msra.mxu0 0.0
    %1481 = vmatprep.subr.mxu0 0.0
    %1482 = vmatpush1.xpose.msra.mxu0 0.0
    %1483 = vmatprep.subr.mxu0 0.0
    %1484 = vmatpush1.xpose.msra.mxu0 0.0
    %1485 = vmatprep.subr.mxu0 0.0
    %1486 = vmatpush1.xpose.msra.mxu0 0.0
    %1487 = vmatprep.subr.mxu0 0.0
    %1488 = vmatpush1.xpose.msra.mxu0 0.0
    %1489 = vmatprep.subr.mxu0 0.0
    %1490 = vmatpush1.xpose.msra.mxu0 0.0
    %1491 = vmatprep.subr.mxu0 0.0
    %1492 = vmatpush1.xpose.msra.mxu0 0.0
    %1493 = vmatprep.subr.mxu0 0.0
    %1494 = vmatpush1.xpose.msra.mxu0 0.0
    %1495 = vmatprep.subr.mxu0 0.0
    %1496 = vmatpush1.xpose.msra.mxu0 0.0
    %1497 = vmatprep.subr.mxu0 0.0
    %1498 = vmatpush1.xpose.msra.mxu0 0.0
    %1499 = vmatprep.subr.mxu0 0.0
    %1500 = vmatpush1.xpose.msra.mxu0 0.0
    %1501 = vmatprep.subr.mxu0 0.0
    %1502 = vmatpush1.xpose.msra.mxu0 0.0
    %1503 = vmatprep.subr.mxu0 0.0
    %1504 = vmatpush1.xpose.msra.mxu0 %v1477
    %1505 = vmatprep.subr.mxu0 0.0
    %1506 = vmatpush1.xpose.msra.mxu0 %v1474
    %1507 = vmatprep.subr.mxu0 0.0
    %1508 = vmatpush1.xpose.msra.mxu0 %v1471
    %1509 = vmatprep.subr.mxu0 0.0
    %1510 = vmatpush1.xpose.msra.mxu0 %v1468
    %1511 = vmatprep.subr.mxu0 0.0
    %1512 = vmatpush2.xpose.msra.mxu0 0.0
    %1513 = vmatprep.subr.mxu0 0.0
    %1514 = vmatpush2.xpose.msra.mxu0 0.0
    %1515 = vmatprep.subr.mxu0 0.0
    %1516 = vmatpush2.xpose.msra.mxu0 0.0
    %1517 = vmatprep.subr.mxu0 0.0
    %1518 = vmatpush2.xpose.msra.mxu0 0.0
    %1519 = vmatprep.subr.mxu0 0.0
    %1520 = vmatpush2.xpose.msra.mxu0 0.0
    %1521 = vmatprep.subr.mxu0 0.0
    %1522 = vmatpush2.xpose.msra.mxu0 0.0
    %1523 = vmatprep.subr.mxu0 0.0
    %1524 = vmatpush2.xpose.msra.mxu0 0.0
    %1525 = vmatprep.subr.mxu0 0.0
    %1526 = vmatpush2.xpose.msra.mxu0 0.0
    %1527 = vmatprep.subr.mxu0 0.0
    %1528 = vmatpush2.xpose.msra.mxu0 0.0
    %1529 = vmatprep.subr.mxu0 0.0
    %1530 = vmatpush2.xpose.msra.mxu0 0.0
    %1531 = vmatprep.subr.mxu0 0.0
    %1532 = vmatpush2.xpose.msra.mxu0 0.0
    %1533 = vmatprep.subr.mxu0 0.0
    %1534 = vmatpush2.xpose.msra.mxu0 0.0
    %1535 = vmatprep.subr.mxu0 0.0
    %1536 = vmatpush2.xpose.msra.mxu0 0.0
    %1537 = vmatprep.subr.mxu0 0.0
    %1538 = vmatpush2.xpose.msra.mxu0 0.0
    %1539 = vmatprep.subr.mxu0 0.0
    %1540 = vmatpush2.xpose.msra.mxu0 0.0
    %1541 = vmatprep.subr.mxu0 0.0
    %1542 = vmatpush2.xpose.msra.mxu0 0.0
    %1543 = vmatprep.mubr.f32.mxu0 0.0
    %1544 = vmatmul.mubr.f32.gmra.mxu0 %v1465
    %v1545 = vpop.f32.mrf.mxu0
    %v1546 = vadd.f32 0.0, %v1545
    %v1547 = vpop.f32.mrf.mxu0
    %1548 = vdwg.mxu0
    %v1550 = vsel %vm194, %v1278, 0
    %v1553 = vsel %vm194, %v1114, 0
    %v1556 = vsel %vm194, %v1115, 0
    %v1559 = vsel %vm194, %v1116, 0
    %v1562 = vsel %vm194, %v1117, 0
    %1564 = vmatprep.subr.mxu0 0.0
    %1565 = vmatpush1.xpose.msra.mxu0 0.0
    %1566 = vmatprep.subr.mxu0 0.0
    %1567 = vmatpush1.xpose.msra.mxu0 0.0
    %1568 = vmatprep.subr.mxu0 0.0
    %1569 = vmatpush1.xpose.msra.mxu0 0.0
    %1570 = vmatprep.subr.mxu0 0.0
    %1571 = vmatpush1.xpose.msra.mxu0 0.0
    %1572 = vmatprep.subr.mxu0 0.0
    %1573 = vmatpush1.xpose.msra.mxu0 0.0
    %1574 = vmatprep.subr.mxu0 0.0
    %1575 = vmatpush1.xpose.msra.mxu0 0.0
    %1576 = vmatprep.subr.mxu0 0.0
    %1577 = vmatpush1.xpose.msra.mxu0 0.0
    %1578 = vmatprep.subr.mxu0 0.0
    %1579 = vmatpush1.xpose.msra.mxu0 0.0
    %1580 = vmatprep.subr.mxu0 0.0
    %1581 = vmatpush1.xpose.msra.mxu0 0.0
    %1582 = vmatprep.subr.mxu0 0.0
    %1583 = vmatpush1.xpose.msra.mxu0 0.0
    %1584 = vmatprep.subr.mxu0 0.0
    %1585 = vmatpush1.xpose.msra.mxu0 0.0
    %1586 = vmatprep.subr.mxu0 0.0
    %1587 = vmatpush1.xpose.msra.mxu0 0.0
    %1588 = vmatprep.subr.mxu0 0.0
    %1589 = vmatpush1.xpose.msra.mxu0 %v1562
    %1590 = vmatprep.subr.mxu0 0.0
    %1591 = vmatpush1.xpose.msra.mxu0 %v1559
    %1592 = vmatprep.subr.mxu0 0.0
    %1593 = vmatpush1.xpose.msra.mxu0 %v1556
    %1594 = vmatprep.subr.mxu0 0.0
    %1595 = vmatpush1.xpose.msra.mxu0 %v1553
    %1596 = vmatprep.subr.mxu0 0.0
    %1597 = vmatpush2.xpose.msra.mxu0 0.0
    %1598 = vmatprep.subr.mxu0 0.0
    %1599 = vmatpush2.xpose.msra.mxu0 0.0
    %1600 = vmatprep.subr.mxu0 0.0
    %1601 = vmatpush2.xpose.msra.mxu0 0.0
    %1602 = vmatprep.subr.mxu0 0.0
    %1603 = vmatpush2.xpose.msra.mxu0 0.0
    %1604 = vmatprep.subr.mxu0 0.0
    %1605 = vmatpush2.xpose.msra.mxu0 0.0
    %1606 = vmatprep.subr.mxu0 0.0
    %1607 = vmatpush2.xpose.msra.mxu0 0.0
    %1608 = vmatprep.subr.mxu0 0.0
    %1609 = vmatpush2.xpose.msra.mxu0 0.0
    %1610 = vmatprep.subr.mxu0 0.0
    %1611 = vmatpush2.xpose.msra.mxu0 0.0
    %1612 = vmatprep.subr.mxu0 0.0
    %1613 = vmatpush2.xpose.msra.mxu0 0.0
    %1614 = vmatprep.subr.mxu0 0.0
    %1615 = vmatpush2.xpose.msra.mxu0 0.0
    %1616 = vmatprep.subr.mxu0 0.0
    %1617 = vmatpush2.xpose.msra.mxu0 0.0
    %1618 = vmatprep.subr.mxu0 0.0
    %1619 = vmatpush2.xpose.msra.mxu0 0.0
    %1620 = vmatprep.subr.mxu0 0.0
    %1621 = vmatpush2.xpose.msra.mxu0 0.0
    %1622 = vmatprep.subr.mxu0 0.0
    %1623 = vmatpush2.xpose.msra.mxu0 0.0
    %1624 = vmatprep.subr.mxu0 0.0
    %1625 = vmatpush2.xpose.msra.mxu0 0.0
    %1626 = vmatprep.subr.mxu0 0.0
    %1627 = vmatpush2.xpose.msra.mxu0 0.0
    %1628 = vmatprep.mubr.f32.mxu0 0.0
    %1629 = vmatmul.mubr.f32.gmra.mxu0 %v1550
    %v1630 = vpop.f32.mrf.mxu0
    %v1631 = vadd.f32 0.0, %v1630
    %v1632 = vpop.f32.mrf.mxu0
    %1633 = vdwg.mxu0
    %1634 = vxpose.xlu0.b32.start [1/16] %v1376, 128
    %1635 = vxpose.xlu0.b32.cont [2/16] 0.0, 128
    %1636 = vxpose.xlu0.b32.cont [3/16] 0.0, 128
    %1637 = vxpose.xlu0.b32.cont [4/16] 0.0, 128
    %1638 = vxpose.xlu0.b32.cont [5/16] 0.0, 128
    %1639 = vxpose.xlu0.b32.cont [6/16] 0.0, 128
    %1640 = vxpose.xlu0.b32.cont [7/16] 0.0, 128
    %1641 = vxpose.xlu0.b32.cont [8/16] 0.0, 128
    %1642 = vxpose.xlu0.b32.cont [9/16] 0.0, 128
    %1643 = vxpose.xlu0.b32.cont [10/16] 0.0, 128
    %1644 = vxpose.xlu0.b32.cont [11/16] 0.0, 128
    %1645 = vxpose.xlu0.b32.cont [12/16] 0.0, 128
    %1646 = vxpose.xlu0.b32.cont [13/16] 0.0, 128
    %1647 = vxpose.xlu0.b32.cont [14/16] 0.0, 128
    %1648 = vxpose.xlu0.b32.cont [15/16] 0.0, 128
    %1649 = vxpose.xlu0.b32.end [16/16] 0.0, 128
    %v1650 = vpop.trf.xlu0
    %v1651 = vpop.trf.xlu0
    %v1652 = vpop.trf.xlu0
    %v1653 = vpop.trf.xlu0
    %v1654 = vpop.trf.xlu0
    %v1655 = vpop.trf.xlu0
    %v1656 = vpop.trf.xlu0
    %v1657 = vpop.trf.xlu0
    %v1658 = vpop.trf.xlu0
    %v1659 = vpop.trf.xlu0
    %v1660 = vpop.trf.xlu0
    %v1661 = vpop.trf.xlu0
    %v1662 = vpop.trf.xlu0
    %v1663 = vpop.trf.xlu0
    %v1664 = vpop.trf.xlu0
    %v1665 = vpop.trf.xlu0
    %1666 = vxpose.xlu0.b32.start [1/16] %v1461, 128
    %1667 = vxpose.xlu0.b32.cont [2/16] 0.0, 128
    %1668 = vxpose.xlu0.b32.cont [3/16] 0.0, 128
    %1669 = vxpose.xlu0.b32.cont [4/16] 0.0, 128
    %1670 = vxpose.xlu0.b32.cont [5/16] 0.0, 128
    %1671 = vxpose.xlu0.b32.cont [6/16] 0.0, 128
    %1672 = vxpose.xlu0.b32.cont [7/16] 0.0, 128
    %1673 = vxpose.xlu0.b32.cont [8/16] 0.0, 128
    %1674 = vxpose.xlu0.b32.cont [9/16] 0.0, 128
    %1675 = vxpose.xlu0.b32.cont [10/16] 0.0, 128
    %1676 = vxpose.xlu0.b32.cont [11/16] 0.0, 128
    %1677 = vxpose.xlu0.b32.cont [12/16] 0.0, 128
    %1678 = vxpose.xlu0.b32.cont [13/16] 0.0, 128
    %1679 = vxpose.xlu0.b32.cont [14/16] 0.0, 128
    %1680 = vxpose.xlu0.b32.cont [15/16] 0.0, 128
    %1681 = vxpose.xlu0.b32.end [16/16] 0.0, 128
    %v1682 = vpop.trf.xlu0
    %v1683 = vpop.trf.xlu0
    %v1684 = vpop.trf.xlu0
    %v1685 = vpop.trf.xlu0
    %v1686 = vpop.trf.xlu0
    %v1687 = vpop.trf.xlu0
    %v1688 = vpop.trf.xlu0
    %v1689 = vpop.trf.xlu0
    %v1690 = vpop.trf.xlu0
    %v1691 = vpop.trf.xlu0
    %v1692 = vpop.trf.xlu0
    %v1693 = vpop.trf.xlu0
    %v1694 = vpop.trf.xlu0
    %v1695 = vpop.trf.xlu0
    %v1696 = vpop.trf.xlu0
    %v1697 = vpop.trf.xlu0
    %1698 = vxpose.xlu0.b32.start [1/16] %v1546, 128
    %1699 = vxpose.xlu0.b32.cont [2/16] 0.0, 128
    %1700 = vxpose.xlu0.b32.cont [3/16] 0.0, 128
    %1701 = vxpose.xlu0.b32.cont [4/16] 0.0, 128
    %1702 = vxpose.xlu0.b32.cont [5/16] 0.0, 128
    %1703 = vxpose.xlu0.b32.cont [6/16] 0.0, 128
    %1704 = vxpose.xlu0.b32.cont [7/16] 0.0, 128
    %1705 = vxpose.xlu0.b32.cont [8/16] 0.0, 128
    %1706 = vxpose.xlu0.b32.cont [9/16] 0.0, 128
    %1707 = vxpose.xlu0.b32.cont [10/16] 0.0, 128
    %1708 = vxpose.xlu0.b32.cont [11/16] 0.0, 128
    %1709 = vxpose.xlu0.b32.cont [12/16] 0.0, 128
    %1710 = vxpose.xlu0.b32.cont [13/16] 0.0, 128
    %1711 = vxpose.xlu0.b32.cont [14/16] 0.0, 128
    %1712 = vxpose.xlu0.b32.cont [15/16] 0.0, 128
    %1713 = vxpose.xlu0.b32.end [16/16] 0.0, 128
    %v1714 = vpop.trf.xlu0
    %v1715 = vpop.trf.xlu0
    %v1716 = vpop.trf.xlu0
    %v1717 = vpop.trf.xlu0
    %v1718 = vpop.trf.xlu0
    %v1719 = vpop.trf.xlu0
    %v1720 = vpop.trf.xlu0
    %v1721 = vpop.trf.xlu0
    %v1722 = vpop.trf.xlu0
    %v1723 = vpop.trf.xlu0
    %v1724 = vpop.trf.xlu0
    %v1725 = vpop.trf.xlu0
    %v1726 = vpop.trf.xlu0
    %v1727 = vpop.trf.xlu0
    %v1728 = vpop.trf.xlu0
    %v1729 = vpop.trf.xlu0
    %1730 = vxpose.xlu0.b32.start [1/16] %v1631, 128
    %1731 = vxpose.xlu0.b32.cont [2/16] 0.0, 128
    %1732 = vxpose.xlu0.b32.cont [3/16] 0.0, 128
    %1733 = vxpose.xlu0.b32.cont [4/16] 0.0, 128
    %1734 = vxpose.xlu0.b32.cont [5/16] 0.0, 128
    %1735 = vxpose.xlu0.b32.cont [6/16] 0.0, 128
    %1736 = vxpose.xlu0.b32.cont [7/16] 0.0, 128
    %1737 = vxpose.xlu0.b32.cont [8/16] 0.0, 128
    %1738 = vxpose.xlu0.b32.cont [9/16] 0.0, 128
    %1739 = vxpose.xlu0.b32.cont [10/16] 0.0, 128
    %1740 = vxpose.xlu0.b32.cont [11/16] 0.0, 128
    %1741 = vxpose.xlu0.b32.cont [12/16] 0.0, 128
    %1742 = vxpose.xlu0.b32.cont [13/16] 0.0, 128
    %1743 = vxpose.xlu0.b32.cont [14/16] 0.0, 128
    %1744 = vxpose.xlu0.b32.cont [15/16] 0.0, 128
    %1745 = vxpose.xlu0.b32.end [16/16] 0.0, 128
    %v1746 = vpop.trf.xlu0
    %v1747 = vpop.trf.xlu0
    %v1748 = vpop.trf.xlu0
    %v1749 = vpop.trf.xlu0
    %v1750 = vpop.trf.xlu0
    %v1751 = vpop.trf.xlu0
    %v1752 = vpop.trf.xlu0
    %v1753 = vpop.trf.xlu0
    %v1754 = vpop.trf.xlu0
    %v1755 = vpop.trf.xlu0
    %v1756 = vpop.trf.xlu0
    %v1757 = vpop.trf.xlu0
    %v1758 = vpop.trf.xlu0
    %v1759 = vpop.trf.xlu0
    %v1760 = vpop.trf.xlu0
    %v1761 = vpop.trf.xlu0
    %v1762 = vcombine.low %v1650, %v1714
    %v1763 = vcombine.high %v1650, %v1714
    %v1765 = vunpack.c.l.s4 1983009808
    %v1766 = vunpack.c.0.s8 %v1765
    %v1767 = vlaneseq
    %v1768 = vshrl.u32 %v1767, 7
    %v1769 = vsub.s32 %v1766, %v1768
    %v1770 = vrot.slane %v1762, %v1769
    %v1772 = vunpack.c.l.s4 1983009808
    %v1773 = vunpack.c.0.s8 %v1772
    %v1774 = vlaneseq
    %v1775 = vshrl.u32 %v1774, 7
    %v1776 = vsub.s32 %v1773, %v1775
    %v1777 = vrot.slane %v1763, %v1776
    %v1778 = vcombine.low %v1682, %v1746
    %v1779 = vcombine.high %v1682, %v1746
    %v1781 = vunpack.c.l.s4 1983009808
    %v1782 = vunpack.c.0.s8 %v1781
    %v1783 = vlaneseq
    %v1784 = vshrl.u32 %v1783, 7
    %v1785 = vsub.s32 %v1782, %v1784
    %v1786 = vrot.slane %v1778, %v1785
    %v1788 = vunpack.c.l.s4 1983009808
    %v1789 = vunpack.c.0.s8 %v1788
    %v1790 = vlaneseq
    %v1791 = vshrl.u32 %v1790, 7
    %v1792 = vsub.s32 %v1789, %v1791
    %v1793 = vrot.slane %v1779, %v1792
    %v1794 = vcombine.low %v1770, %v1786
    %v1795 = vcombine.high %v1770, %v1786
    %v1797 = vunpack.c.l.s4 1934713408
    %v1798 = vunpack.c.0.s8 %v1797
    %v1799 = vlaneseq
    %v1800 = vshrl.u32 %v1799, 7
    %v1801 = vsub.s32 %v1798, %v1800
    %v1802 = vrot.slane %v1794, %v1801
    %v1804 = vunpack.c.l.s4 1934713408
    %v1805 = vunpack.c.0.s8 %v1804
    %v1806 = vlaneseq
    %v1807 = vshrl.u32 %v1806, 7
    %v1808 = vsub.s32 %v1805, %v1807
    %v1809 = vrot.slane %v1795, %v1808
    %v1810 = vcombine.low %v1777, %v1793
    %v1811 = vcombine.high %v1777, %v1793
    %v1813 = vunpack.c.l.s4 1934713408
    %v1814 = vunpack.c.0.s8 %v1813
    %v1815 = vlaneseq
    %v1816 = vshrl.u32 %v1815, 7
    %v1817 = vsub.s32 %v1814, %v1816
    %v1818 = vrot.slane %v1810, %v1817
    %v1820 = vunpack.c.l.s4 1934713408
    %v1821 = vunpack.c.0.s8 %v1820
    %v1822 = vlaneseq
    %v1823 = vshrl.u32 %v1822, 7
    %v1824 = vsub.s32 %v1821, %v1823
    %v1825 = vrot.slane %v1811, %v1824
    %v1826 = vcombine.high %v1802, 0.0
    %v1827 = vcombine.high %v1809, 0.0
    %v1828 = vcombine.high %v1818, 0.0
    %v1829 = vcombine.high %v1825, 0.0
    %v1830 = vcombine.low %v1651, %v1715
    %v1831 = vcombine.high %v1651, %v1715
    %v1833 = vunpack.c.l.s4 1983009808
    %v1834 = vunpack.c.0.s8 %v1833
    %v1835 = vlaneseq
    %v1836 = vshrl.u32 %v1835, 7
    %v1837 = vsub.s32 %v1834, %v1836
    %v1838 = vrot.slane %v1830, %v1837
    %v1840 = vunpack.c.l.s4 1983009808
    %v1841 = vunpack.c.0.s8 %v1840
    %v1842 = vlaneseq
    %v1843 = vshrl.u32 %v1842, 7
    %v1844 = vsub.s32 %v1841, %v1843
    %v1845 = vrot.slane %v1831, %v1844
    %v1846 = vcombine.low %v1683, %v1747
    %v1847 = vcombine.high %v1683, %v1747
    %v1849 = vunpack.c.l.s4 1983009808
    %v1850 = vunpack.c.0.s8 %v1849
    %v1851 = vlaneseq
    %v1852 = vshrl.u32 %v1851, 7
    %v1853 = vsub.s32 %v1850, %v1852
    %v1854 = vrot.slane %v1846, %v1853
    %v1856 = vunpack.c.l.s4 1983009808
    %v1857 = vunpack.c.0.s8 %v1856
    %v1858 = vlaneseq
    %v1859 = vshrl.u32 %v1858, 7
    %v1860 = vsub.s32 %v1857, %v1859
    %v1861 = vrot.slane %v1847, %v1860
    %v1862 = vcombine.low %v1838, %v1854
    %v1863 = vcombine.high %v1838, %v1854
    %v1865 = vunpack.c.l.s4 1934713408
    %v1866 = vunpack.c.0.s8 %v1865
    %v1867 = vlaneseq
    %v1868 = vshrl.u32 %v1867, 7
    %v1869 = vsub.s32 %v1866, %v1868
    %v1870 = vrot.slane %v1862, %v1869
    %v1872 = vunpack.c.l.s4 1934713408
    %v1873 = vunpack.c.0.s8 %v1872
    %v1874 = vlaneseq
    %v1875 = vshrl.u32 %v1874, 7
    %v1876 = vsub.s32 %v1873, %v1875
    %v1877 = vrot.slane %v1863, %v1876
    %v1878 = vcombine.low %v1845, %v1861
    %v1879 = vcombine.high %v1845, %v1861
    %v1881 = vunpack.c.l.s4 1934713408
    %v1882 = vunpack.c.0.s8 %v1881
    %v1883 = vlaneseq
    %v1884 = vshrl.u32 %v1883, 7
    %v1885 = vsub.s32 %v1882, %v1884
    %v1886 = vrot.slane %v1878, %v1885
    %v1888 = vunpack.c.l.s4 1934713408
    %v1889 = vunpack.c.0.s8 %v1888
    %v1890 = vlaneseq
    %v1891 = vshrl.u32 %v1890, 7
    %v1892 = vsub.s32 %v1889, %v1891
    %v1893 = vrot.slane %v1879, %v1892
    %v1894 = vcombine.high %v1870, 0.0
    %v1895 = vcombine.high %v1877, 0.0
    %v1896 = vcombine.high %v1886, 0.0
    %v1897 = vcombine.high %v1893, 0.0
    %v1898 = vcombine.low %v1652, %v1716
    %v1899 = vcombine.high %v1652, %v1716
    %v1901 = vunpack.c.l.s4 1983009808
    %v1902 = vunpack.c.0.s8 %v1901
    %v1903 = vlaneseq
    %v1904 = vshrl.u32 %v1903, 7
    %v1905 = vsub.s32 %v1902, %v1904
    %v1906 = vrot.slane %v1898, %v1905
    %v1908 = vunpack.c.l.s4 1983009808
    %v1909 = vunpack.c.0.s8 %v1908
    %v1910 = vlaneseq
    %v1911 = vshrl.u32 %v1910, 7
    %v1912 = vsub.s32 %v1909, %v1911
    %v1913 = vrot.slane %v1899, %v1912
    %v1914 = vcombine.low %v1684, %v1748
    %v1915 = vcombine.high %v1684, %v1748
    %v1917 = vunpack.c.l.s4 1983009808
    %v1918 = vunpack.c.0.s8 %v1917
    %v1919 = vlaneseq
    %v1920 = vshrl.u32 %v1919, 7
    %v1921 = vsub.s32 %v1918, %v1920
    %v1922 = vrot.slane %v1914, %v1921
    %v1924 = vunpack.c.l.s4 1983009808
    %v1925 = vunpack.c.0.s8 %v1924
    %v1926 = vlaneseq
    %v1927 = vshrl.u32 %v1926, 7
    %v1928 = vsub.s32 %v1925, %v1927
    %v1929 = vrot.slane %v1915, %v1928
    %v1930 = vcombine.low %v1906, %v1922
    %v1931 = vcombine.high %v1906, %v1922
    %v1933 = vunpack.c.l.s4 1934713408
    %v1934 = vunpack.c.0.s8 %v1933
    %v1935 = vlaneseq
    %v1936 = vshrl.u32 %v1935, 7
    %v1937 = vsub.s32 %v1934, %v1936
    %v1938 = vrot.slane %v1930, %v1937
    %v1940 = vunpack.c.l.s4 1934713408
    %v1941 = vunpack.c.0.s8 %v1940
    %v1942 = vlaneseq
    %v1943 = vshrl.u32 %v1942, 7
    %v1944 = vsub.s32 %v1941, %v1943
    %v1945 = vrot.slane %v1931, %v1944
    %v1946 = vcombine.low %v1913, %v1929
    %v1947 = vcombine.high %v1913, %v1929
    %v1949 = vunpack.c.l.s4 1934713408
    %v1950 = vunpack.c.0.s8 %v1949
    %v1951 = vlaneseq
    %v1952 = vshrl.u32 %v1951, 7
    %v1953 = vsub.s32 %v1950, %v1952
    %v1954 = vrot.slane %v1946, %v1953
    %v1956 = vunpack.c.l.s4 1934713408
    %v1957 = vunpack.c.0.s8 %v1956
    %v1958 = vlaneseq
    %v1959 = vshrl.u32 %v1958, 7
    %v1960 = vsub.s32 %v1957, %v1959
    %v1961 = vrot.slane %v1947, %v1960
    %v1962 = vcombine.high %v1938, 0.0
    %v1963 = vcombine.high %v1945, 0.0
    %v1964 = vcombine.high %v1954, 0.0
    %v1965 = vcombine.high %v1961, 0.0
    %v1966 = vcombine.low %v1653, %v1717
    %v1967 = vcombine.high %v1653, %v1717
    %v1969 = vunpack.c.l.s4 1983009808
    %v1970 = vunpack.c.0.s8 %v1969
    %v1971 = vlaneseq
    %v1972 = vshrl.u32 %v1971, 7
    %v1973 = vsub.s32 %v1970, %v1972
    %v1974 = vrot.slane %v1966, %v1973
    %v1976 = vunpack.c.l.s4 1983009808
    %v1977 = vunpack.c.0.s8 %v1976
    %v1978 = vlaneseq
    %v1979 = vshrl.u32 %v1978, 7
    %v1980 = vsub.s32 %v1977, %v1979
    %v1981 = vrot.slane %v1967, %v1980
    %v1982 = vcombine.low %v1685, %v1749
    %v1983 = vcombine.high %v1685, %v1749
    %v1985 = vunpack.c.l.s4 1983009808
    %v1986 = vunpack.c.0.s8 %v1985
    %v1987 = vlaneseq
    %v1988 = vshrl.u32 %v1987, 7
    %v1989 = vsub.s32 %v1986, %v1988
    %v1990 = vrot.slane %v1982, %v1989
    %v1992 = vunpack.c.l.s4 1983009808
    %v1993 = vunpack.c.0.s8 %v1992
    %v1994 = vlaneseq
    %v1995 = vshrl.u32 %v1994, 7
    %v1996 = vsub.s32 %v1993, %v1995
    %v1997 = vrot.slane %v1983, %v1996
    %v1998 = vcombine.low %v1974, %v1990
    %v1999 = vcombine.high %v1974, %v1990
    %v2001 = vunpack.c.l.s4 1934713408
    %v2002 = vunpack.c.0.s8 %v2001
    %v2003 = vlaneseq
    %v2004 = vshrl.u32 %v2003, 7
    %v2005 = vsub.s32 %v2002, %v2004
    %v2006 = vrot.slane %v1998, %v2005
    %v2008 = vunpack.c.l.s4 1934713408
    %v2009 = vunpack.c.0.s8 %v2008
    %v2010 = vlaneseq
    %v2011 = vshrl.u32 %v2010, 7
    %v2012 = vsub.s32 %v2009, %v2011
    %v2013 = vrot.slane %v1999, %v2012
    %v2014 = vcombine.low %v1981, %v1997
    %v2015 = vcombine.high %v1981, %v1997
    %v2017 = vunpack.c.l.s4 1934713408
    %v2018 = vunpack.c.0.s8 %v2017
    %v2019 = vlaneseq
    %v2020 = vshrl.u32 %v2019, 7
    %v2021 = vsub.s32 %v2018, %v2020
    %v2022 = vrot.slane %v2014, %v2021
    %v2024 = vunpack.c.l.s4 1934713408
    %v2025 = vunpack.c.0.s8 %v2024
    %v2026 = vlaneseq
    %v2027 = vshrl.u32 %v2026, 7
    %v2028 = vsub.s32 %v2025, %v2027
    %v2029 = vrot.slane %v2015, %v2028
    %v2030 = vcombine.high %v2006, 0.0
    %v2031 = vcombine.high %v2013, 0.0
    %v2032 = vcombine.high %v2022, 0.0
    %v2033 = vcombine.high %v2029, 0.0
    %v2034 = vcombine.low %v1802, %v1809
    %v2036 = vunpack.c.l.s4 1983009808
    %v2037 = vunpack.c.0.s8 %v2036
    %v2038 = vlaneseq
    %v2039 = vshrl.u32 %v2038, 7
    %v2040 = vsub.s32 %v2037, %v2039
    %v2041 = vrot.slane %v2034, %v2040
    %v2042 = vcombine.low %v1826, %v1827
    %v2044 = vunpack.c.l.s4 1983009808
    %v2045 = vunpack.c.0.s8 %v2044
    %v2046 = vlaneseq
    %v2047 = vshrl.u32 %v2046, 7
    %v2048 = vsub.s32 %v2045, %v2047
    %v2049 = vrot.slane %v2042, %v2048
    %v2050 = vcombine.low %v1818, %v1825
    %v2052 = vunpack.c.l.s4 1983009808
    %v2053 = vunpack.c.0.s8 %v2052
    %v2054 = vlaneseq
    %v2055 = vshrl.u32 %v2054, 7
    %v2056 = vsub.s32 %v2053, %v2055
    %v2057 = vrot.slane %v2050, %v2056
    %v2058 = vcombine.low %v1828, %v1829
    %v2060 = vunpack.c.l.s4 1983009808
    %v2061 = vunpack.c.0.s8 %v2060
    %v2062 = vlaneseq
    %v2063 = vshrl.u32 %v2062, 7
    %v2064 = vsub.s32 %v2061, %v2063
    %v2065 = vrot.slane %v2058, %v2064
    %v2066 = vcombine.low %v2041, %v2049
    %v2067 = vcombine.high %v2041, %v2049
    %v2069 = vunpack.c.l.s4 1934713408
    %v2070 = vunpack.c.0.s8 %v2069
    %v2071 = vlaneseq
    %v2072 = vshrl.u32 %v2071, 7
    %v2073 = vsub.s32 %v2070, %v2072
    %v2074 = vrot.slane %v2066, %v2073
    %v2076 = vunpack.c.l.s4 1934713408
    %v2077 = vunpack.c.0.s8 %v2076
    %v2078 = vlaneseq
    %v2079 = vshrl.u32 %v2078, 7
    %v2080 = vsub.s32 %v2077, %v2079
    %v2081 = vrot.slane %v2067, %v2080
    %v2082 = vcombine.low %v2057, %v2065
    %v2083 = vcombine.high %v2057, %v2065
    %v2085 = vunpack.c.l.s4 1934713408
    %v2086 = vunpack.c.0.s8 %v2085
    %v2087 = vlaneseq
    %v2088 = vshrl.u32 %v2087, 7
    %v2089 = vsub.s32 %v2086, %v2088
    %v2090 = vrot.slane %v2082, %v2089
    %v2092 = vunpack.c.l.s4 1934713408
    %v2093 = vunpack.c.0.s8 %v2092
    %v2094 = vlaneseq
    %v2095 = vshrl.u32 %v2094, 7
    %v2096 = vsub.s32 %v2093, %v2095
    %v2097 = vrot.slane %v2083, %v2096
    %v2098 = vcombine.low %v2074, %v2090
    %v2099 = vcombine.high %v2074, %v2090
    %v2100 = vcombine.low %v2081, %v2097
    %v2101 = vcombine.high %v2081, %v2097
    %v2102 = vcombine.low %v1870, %v1877
    %v2104 = vunpack.c.l.s4 1983009808
    %v2105 = vunpack.c.0.s8 %v2104
    %v2106 = vlaneseq
    %v2107 = vshrl.u32 %v2106, 7
    %v2108 = vsub.s32 %v2105, %v2107
    %v2109 = vrot.slane %v2102, %v2108
    %v2110 = vcombine.low %v1894, %v1895
    %v2112 = vunpack.c.l.s4 1983009808
    %v2113 = vunpack.c.0.s8 %v2112
    %v2114 = vlaneseq
    %v2115 = vshrl.u32 %v2114, 7
    %v2116 = vsub.s32 %v2113, %v2115
    %v2117 = vrot.slane %v2110, %v2116
    %v2118 = vcombine.low %v1886, %v1893
    %v2120 = vunpack.c.l.s4 1983009808
    %v2121 = vunpack.c.0.s8 %v2120
    %v2122 = vlaneseq
    %v2123 = vshrl.u32 %v2122, 7
    %v2124 = vsub.s32 %v2121, %v2123
    %v2125 = vrot.slane %v2118, %v2124
    %v2126 = vcombine.low %v1896, %v1897
    %v2128 = vunpack.c.l.s4 1983009808
    %v2129 = vunpack.c.0.s8 %v2128
    %v2130 = vlaneseq
    %v2131 = vshrl.u32 %v2130, 7
    %v2132 = vsub.s32 %v2129, %v2131
    %v2133 = vrot.slane %v2126, %v2132
    %v2134 = vcombine.low %v2109, %v2117
    %v2135 = vcombine.high %v2109, %v2117
    %v2137 = vunpack.c.l.s4 1934713408
    %v2138 = vunpack.c.0.s8 %v2137
    %v2139 = vlaneseq
    %v2140 = vshrl.u32 %v2139, 7
    %v2141 = vsub.s32 %v2138, %v2140
    %v2142 = vrot.slane %v2134, %v2141
    %v2144 = vunpack.c.l.s4 1934713408
    %v2145 = vunpack.c.0.s8 %v2144
    %v2146 = vlaneseq
    %v2147 = vshrl.u32 %v2146, 7
    %v2148 = vsub.s32 %v2145, %v2147
    %v2149 = vrot.slane %v2135, %v2148
    %v2150 = vcombine.low %v2125, %v2133
    %v2151 = vcombine.high %v2125, %v2133
    %v2153 = vunpack.c.l.s4 1934713408
    %v2154 = vunpack.c.0.s8 %v2153
    %v2155 = vlaneseq
    %v2156 = vshrl.u32 %v2155, 7
    %v2157 = vsub.s32 %v2154, %v2156
    %v2158 = vrot.slane %v2150, %v2157
    %v2160 = vunpack.c.l.s4 1934713408
    %v2161 = vunpack.c.0.s8 %v2160
    %v2162 = vlaneseq
    %v2163 = vshrl.u32 %v2162, 7
    %v2164 = vsub.s32 %v2161, %v2163
    %v2165 = vrot.slane %v2151, %v2164
    %v2166 = vcombine.low %v2142, %v2158
    %v2167 = vcombine.high %v2142, %v2158
    %v2168 = vcombine.low %v2149, %v2165
    %v2169 = vcombine.high %v2149, %v2165
    %v2170 = vcombine.low %v1938, %v1945
    %v2172 = vunpack.c.l.s4 1983009808
    %v2173 = vunpack.c.0.s8 %v2172
    %v2174 = vlaneseq
    %v2175 = vshrl.u32 %v2174, 7
    %v2176 = vsub.s32 %v2173, %v2175
    %v2177 = vrot.slane %v2170, %v2176
    %v2178 = vcombine.low %v1962, %v1963
    %v2180 = vunpack.c.l.s4 1983009808
    %v2181 = vunpack.c.0.s8 %v2180
    %v2182 = vlaneseq
    %v2183 = vshrl.u32 %v2182, 7
    %v2184 = vsub.s32 %v2181, %v2183
    %v2185 = vrot.slane %v2178, %v2184
    %v2186 = vcombine.low %v1954, %v1961
    %v2188 = vunpack.c.l.s4 1983009808
    %v2189 = vunpack.c.0.s8 %v2188
    %v2190 = vlaneseq
    %v2191 = vshrl.u32 %v2190, 7
    %v2192 = vsub.s32 %v2189, %v2191
    %v2193 = vrot.slane %v2186, %v2192
    %v2194 = vcombine.low %v1964, %v1965
    %v2196 = vunpack.c.l.s4 1983009808
    %v2197 = vunpack.c.0.s8 %v2196
    %v2198 = vlaneseq
    %v2199 = vshrl.u32 %v2198, 7
    %v2200 = vsub.s32 %v2197, %v2199
    %v2201 = vrot.slane %v2194, %v2200
    %v2202 = vcombine.low %v2177, %v2185
    %v2203 = vcombine.high %v2177, %v2185
    %v2205 = vunpack.c.l.s4 1934713408
    %v2206 = vunpack.c.0.s8 %v2205
    %v2207 = vlaneseq
    %v2208 = vshrl.u32 %v2207, 7
    %v2209 = vsub.s32 %v2206, %v2208
    %v2210 = vrot.slane %v2202, %v2209
    %v2212 = vunpack.c.l.s4 1934713408
    %v2213 = vunpack.c.0.s8 %v2212
    %v2214 = vlaneseq
    %v2215 = vshrl.u32 %v2214, 7
    %v2216 = vsub.s32 %v2213, %v2215
    %v2217 = vrot.slane %v2203, %v2216
    %v2218 = vcombine.low %v2193, %v2201
    %v2219 = vcombine.high %v2193, %v2201
    %v2221 = vunpack.c.l.s4 1934713408
    %v2222 = vunpack.c.0.s8 %v2221
    %v2223 = vlaneseq
    %v2224 = vshrl.u32 %v2223, 7
    %v2225 = vsub.s32 %v2222, %v2224
    %v2226 = vrot.slane %v2218, %v2225
    %v2228 = vunpack.c.l.s4 1934713408
    %v2229 = vunpack.c.0.s8 %v2228
    %v2230 = vlaneseq
    %v2231 = vshrl.u32 %v2230, 7
    %v2232 = vsub.s32 %v2229, %v2231
    %v2233 = vrot.slane %v2219, %v2232
    %v2234 = vcombine.low %v2210, %v2226
    %v2235 = vcombine.high %v2210, %v2226
    %v2236 = vcombine.low %v2217, %v2233
    %v2237 = vcombine.high %v2217, %v2233
    %v2238 = vcombine.low %v2006, %v2013
    %v2240 = vunpack.c.l.s4 1983009808
    %v2241 = vunpack.c.0.s8 %v2240
    %v2242 = vlaneseq
    %v2243 = vshrl.u32 %v2242, 7
    %v2244 = vsub.s32 %v2241, %v2243
    %v2245 = vrot.slane %v2238, %v2244
    %v2246 = vcombine.low %v2030, %v2031
    %v2248 = vunpack.c.l.s4 1983009808
    %v2249 = vunpack.c.0.s8 %v2248
    %v2250 = vlaneseq
    %v2251 = vshrl.u32 %v2250, 7
    %v2252 = vsub.s32 %v2249, %v2251
    %v2253 = vrot.slane %v2246, %v2252
    %v2254 = vcombine.low %v2022, %v2029
    %v2256 = vunpack.c.l.s4 1983009808
    %v2257 = vunpack.c.0.s8 %v2256
    %v2258 = vlaneseq
    %v2259 = vshrl.u32 %v2258, 7
    %v2260 = vsub.s32 %v2257, %v2259
    %v2261 = vrot.slane %v2254, %v2260
    %v2262 = vcombine.low %v2032, %v2033
    %v2264 = vunpack.c.l.s4 1983009808
    %v2265 = vunpack.c.0.s8 %v2264
    %v2266 = vlaneseq
    %v2267 = vshrl.u32 %v2266, 7
    %v2268 = vsub.s32 %v2265, %v2267
    %v2269 = vrot.slane %v2262, %v2268
    %v2270 = vcombine.low %v2245, %v2253
    %v2271 = vcombine.high %v2245, %v2253
    %v2273 = vunpack.c.l.s4 1934713408
    %v2274 = vunpack.c.0.s8 %v2273
    %v2275 = vlaneseq
    %v2276 = vshrl.u32 %v2275, 7
    %v2277 = vsub.s32 %v2274, %v2276
    %v2278 = vrot.slane %v2270, %v2277
    %v2280 = vunpack.c.l.s4 1934713408
    %v2281 = vunpack.c.0.s8 %v2280
    %v2282 = vlaneseq
    %v2283 = vshrl.u32 %v2282, 7
    %v2284 = vsub.s32 %v2281, %v2283
    %v2285 = vrot.slane %v2271, %v2284
    %v2286 = vcombine.low %v2261, %v2269
    %v2287 = vcombine.high %v2261, %v2269
    %v2289 = vunpack.c.l.s4 1934713408
    %v2290 = vunpack.c.0.s8 %v2289
    %v2291 = vlaneseq
    %v2292 = vshrl.u32 %v2291, 7
    %v2293 = vsub.s32 %v2290, %v2292
    %v2294 = vrot.slane %v2286, %v2293
    %v2296 = vunpack.c.l.s4 1934713408
    %v2297 = vunpack.c.0.s8 %v2296
    %v2298 = vlaneseq
    %v2299 = vshrl.u32 %v2298, 7
    %v2300 = vsub.s32 %v2297, %v2299
    %v2301 = vrot.slane %v2287, %v2300
    %v2302 = vcombine.low %v2278, %v2294
    %v2303 = vcombine.high %v2278, %v2294
    %v2304 = vcombine.low %v2285, %v2301
    %v2305 = vcombine.high %v2285, %v2301
    %2310 = vrot.lane.b32.xlu0 %v2099, 8
    %v2311 = vpop.permute.xlu0 %2310
    %2312 = vrot.lane.b32.xlu0 %v2167, 8
    %v2313 = vpop.permute.xlu0 %2312
    %2314 = vrot.lane.b32.xlu0 %v2235, 8
    %v2315 = vpop.permute.xlu0 %2314
    %2316 = vrot.lane.b32.xlu0 %v2303, 8
    %v2317 = vpop.permute.xlu0 %2316
    %2326 = vrot.lane.b32.xlu0 %v2100, 16
    %v2327 = vpop.permute.xlu0 %2326
    %2328 = vrot.lane.b32.xlu0 %v2168, 16
    %v2329 = vpop.permute.xlu0 %2328
    %2330 = vrot.lane.b32.xlu0 %v2236, 16
    %v2331 = vpop.permute.xlu0 %2330
    %2332 = vrot.lane.b32.xlu0 %v2304, 16
    %v2333 = vpop.permute.xlu0 %2332
    %2342 = vrot.lane.b32.xlu0 %v2101, 24
    %v2343 = vpop.permute.xlu0 %2342
    %2344 = vrot.lane.b32.xlu0 %v2169, 24
    %v2345 = vpop.permute.xlu0 %2344
    %2346 = vrot.lane.b32.xlu0 %v2237, 24
    %v2347 = vpop.permute.xlu0 %2346
    %2348 = vrot.lane.b32.xlu0 %v2305, 24
    %v2349 = vpop.permute.xlu0 %2348
    %v2354 = vsel %vm569, %v2098, %v2311
    %v2355 = vsel %vm569, %v2166, %v2313
    %v2356 = vsel %vm569, %v2234, %v2315
    %v2357 = vsel %vm569, %v2302, %v2317
    %vm2358 = vcmask 130048
    %v2359 = vsel %vm2358, %v2354, %v2327
    %v2360 = vsel %vm2358, %v2355, %v2329
    %v2361 = vsel %vm2358, %v2356, %v2331
    %v2362 = vsel %vm2358, %v2357, %v2333
    %vm2363 = vcmask 195584
    %v2364 = vsel %vm2363, %v2359, %v2343
    %v2365 = vsel %vm2363, %v2360, %v2345
    %v2366 = vsel %vm2363, %v2361, %v2347
    %v2367 = vsel %vm2363, %v2362, %v2349
    %v2368 = vld [vmem:[%s4] sm:$0xff]
    %v2369 = vld [vmem:[%s4 + $0x8] sm:$0xff]
    %v2370 = vld [vmem:[%s4 + $0x10] sm:$0xff]
    %v2371 = vld [vmem:[%s4 + $0x18] sm:$0xff]
    %v2372 = vld [vmem:[%s8 + $0x2] sm:$0x1]
    %v2373 = vlaneseq
    %v2374 = vshrl.u32 %v2373, 7
    %v2375 = vsub.s32 0, %v2374
    %v2376 = vrot.slane %v2372, %v2375
    %v2378 = vsel %vm194, %v2364, 0
    %v2381 = vsel %vm194, %v2365, 0
    %v2384 = vsel %vm194, %v2366, 0
    %v2387 = vsel %vm194, %v2367, 0
    %2389 = vmatprep.subr.mxu0 0.0
    %2390 = vmatpush1.msra.mxu0 0.0
    %2391 = vmatprep.subr.mxu0 0.0
    %2392 = vmatpush1.msra.mxu0 0.0
    %2393 = vmatprep.subr.mxu0 0.0
    %2394 = vmatpush1.msra.mxu0 0.0
    %2395 = vmatprep.subr.mxu0 0.0
    %2396 = vmatpush1.msra.mxu0 0.0
    %2397 = vmatprep.subr.mxu0 0.0
    %2398 = vmatpush1.msra.mxu0 0.0
    %2399 = vmatprep.subr.mxu0 0.0
    %2400 = vmatpush1.msra.mxu0 0.0
    %2401 = vmatprep.subr.mxu0 0.0
    %2402 = vmatpush1.msra.mxu0 0.0
    %2403 = vmatprep.subr.mxu0 0.0
    %2404 = vmatpush1.msra.mxu0 0.0
    %2405 = vmatprep.subr.mxu0 0.0
    %2406 = vmatpush1.msra.mxu0 0.0
    %2407 = vmatprep.subr.mxu0 0.0
    %2408 = vmatpush1.msra.mxu0 0.0
    %2409 = vmatprep.subr.mxu0 0.0
    %2410 = vmatpush1.msra.mxu0 0.0
    %2411 = vmatprep.subr.mxu0 0.0
    %2412 = vmatpush1.msra.mxu0 0.0
    %2413 = vmatprep.subr.mxu0 0.0
    %2414 = vmatpush1.msra.mxu0 %v2371
    %2415 = vmatprep.subr.mxu0 0.0
    %2416 = vmatpush1.msra.mxu0 %v2370
    %2417 = vmatprep.subr.mxu0 0.0
    %2418 = vmatpush1.msra.mxu0 %v2369
    %2419 = vmatprep.subr.mxu0 0.0
    %2420 = vmatpush1.msra.mxu0 %v2368
    %2421 = vmatprep.subr.mxu0 0.0
    %2422 = vmatpush2.msra.mxu0 0.0
    %2423 = vmatprep.subr.mxu0 0.0
    %2424 = vmatpush2.msra.mxu0 0.0
    %2425 = vmatprep.subr.mxu0 0.0
    %2426 = vmatpush2.msra.mxu0 0.0
    %2427 = vmatprep.subr.mxu0 0.0
    %2428 = vmatpush2.msra.mxu0 0.0
    %2429 = vmatprep.subr.mxu0 0.0
    %2430 = vmatpush2.msra.mxu0 0.0
    %2431 = vmatprep.subr.mxu0 0.0
    %2432 = vmatpush2.msra.mxu0 0.0
    %2433 = vmatprep.subr.mxu0 0.0
    %2434 = vmatpush2.msra.mxu0 0.0
    %2435 = vmatprep.subr.mxu0 0.0
    %2436 = vmatpush2.msra.mxu0 0.0
    %2437 = vmatprep.subr.mxu0 0.0
    %2438 = vmatpush2.msra.mxu0 0.0
    %2439 = vmatprep.subr.mxu0 0.0
    %2440 = vmatpush2.msra.mxu0 0.0
    %2441 = vmatprep.subr.mxu0 0.0
    %2442 = vmatpush2.msra.mxu0 0.0
    %2443 = vmatprep.subr.mxu0 0.0
    %2444 = vmatpush2.msra.mxu0 0.0
    %2445 = vmatprep.subr.mxu0 0.0
    %2446 = vmatpush2.msra.mxu0 0.0
    %2447 = vmatprep.subr.mxu0 0.0
    %2448 = vmatpush2.msra.mxu0 0.0
    %2449 = vmatprep.subr.mxu0 0.0
    %2450 = vmatpush2.msra.mxu0 0.0
    %2451 = vmatprep.subr.mxu0 0.0
    %2452 = vmatpush2.msra.mxu0 0.0
    %2453 = vmatprep.mubr.f32.mxu0 0.0
    %2454 = vmatmul.mubr.f32.gmra.mxu0 %v2378
    %v2455 = vpop.f32.mrf.mxu0
    %v2456 = vadd.f32 %v2376, %v2455
    %v2457 = vpop.f32.mrf.mxu0
    %2458 = vmatprep.mubr.f32.mxu0 0.0
    %2459 = vmatmul.mubr.f32.gmra.mxu0 %v2381
    %v2460 = vpop.f32.mrf.mxu0
    %v2461 = vadd.f32 %v2376, %v2460
    %v2462 = vpop.f32.mrf.mxu0
    %2463 = vmatprep.mubr.f32.mxu0 0.0
    %2464 = vmatmul.mubr.f32.gmra.mxu0 %v2384
    %v2465 = vpop.f32.mrf.mxu0
    %v2466 = vadd.f32 %v2376, %v2465
    %v2467 = vpop.f32.mrf.mxu0
    %2468 = vmatprep.mubr.f32.mxu0 0.0
    %2469 = vmatmul.mubr.f32.gmra.mxu0 %v2387
    %v2470 = vpop.f32.mrf.mxu0
    %v2471 = vadd.f32 %v2376, %v2470
    %v2472 = vpop.f32.mrf.mxu0
    %2473 = vdwg.mxu0
    %v2474 = vadd.f32 %v148, %v2456
    %v2475 = vadd.f32 %v153, %v2461
    %v2476 = vadd.f32 %v158, %v2466
    %v2477 = vadd.f32 %v163, %v2471
    %v2478 = vld [vmem:[%s8 + $0x3] sm:$0x1]
    %v2479 = vld [vmem:[%s8 + $0x4] sm:$0x1]
    %v2480 = vsel %vm194, %v2474, 0.0
    %2481 = vadd.xlane.f32.xlu0 %v2480
    %v2482 = vpop.xlane.xlu0 %2481
    %v2483 = vsel %vm194, %v2475, 0.0
    %2484 = vadd.xlane.f32.xlu0 %v2483
    %v2485 = vpop.xlane.xlu0 %2484
    %v2486 = vsel %vm194, %v2476, 0.0
    %2487 = vadd.xlane.f32.xlu0 %v2486
    %v2488 = vpop.xlane.xlu0 %2487
    %v2489 = vsel %vm194, %v2477, 0.0
    %2490 = vadd.xlane.f32.xlu0 %v2489
    %v2491 = vpop.xlane.xlu0 %2490
    %v2492 = vmul.f32 %v2482, %v207
    %v2493 = vmul.f32 %v2485, %v207
    %v2494 = vmul.f32 %v2488, %v207
    %v2495 = vmul.f32 %v2491, %v207
    %v2496 = vsub.f32 %v2474, %v2492
    %v2497 = vsub.f32 %v2475, %v2493
    %v2498 = vsub.f32 %v2476, %v2494
    %v2499 = vsub.f32 %v2477, %v2495
    %v2500 = vmul.f32 %v2496, %v2496
    %v2501 = vmul.f32 %v2497, %v2497
    %v2502 = vmul.f32 %v2498, %v2498
    %v2503 = vmul.f32 %v2499, %v2499
    %v2504 = vsel %vm194, %v2500, 0.0
    %2505 = vadd.xlane.f32.xlu0 %v2504
    %v2506 = vpop.xlane.xlu0 %2505
    %v2507 = vsel %vm194, %v2501, 0.0
    %2508 = vadd.xlane.f32.xlu0 %v2507
    %v2509 = vpop.xlane.xlu0 %2508
    %v2510 = vsel %vm194, %v2502, 0.0
    %2511 = vadd.xlane.f32.xlu0 %v2510
    %v2512 = vpop.xlane.xlu0 %2511
    %v2513 = vsel %vm194, %v2503, 0.0
    %2514 = vadd.xlane.f32.xlu0 %v2513
    %v2515 = vpop.xlane.xlu0 %2514
    %v2516 = vmul.f32 %v2506, %v207
    %v2517 = vmul.f32 %v2509, %v207
    %v2518 = vmul.f32 %v2512, %v207
    %v2519 = vmul.f32 %v2515, %v207
    %v2520 = vadd.f32 %v2516, 1e-05
    %v2521 = vadd.f32 %v2517, 1e-05
    %v2522 = vadd.f32 %v2518, 1e-05
    %v2523 = vadd.f32 %v2519, 1e-05
    %v2524 = vrsqrt.pop %v2520
    %v2525 = vrsqrt.pop %v2521
    %v2526 = vrsqrt.pop %v2522
    %v2527 = vrsqrt.pop %v2523
    %v2528 = vmul.f32 %v2496, %v2524
    %v2529 = vmul.f32 %v2497, %v2525
    %v2530 = vmul.f32 %v2498, %v2526
    %v2531 = vmul.f32 %v2499, %v2527
    %v2532 = vlaneseq
    %v2533 = vshrl.u32 %v2532, 7
    %v2534 = vsub.s32 0, %v2533
    %v2535 = vrot.slane %v2478, %v2534
    %v2536 = vmul.f32 %v2528, %v2535
    %v2537 = vmul.f32 %v2529, %v2535
    %v2538 = vmul.f32 %v2530, %v2535
    %v2539 = vmul.f32 %v2531, %v2535
    %v2540 = vlaneseq
    %v2541 = vshrl.u32 %v2540, 7
    %v2542 = vsub.s32 0, %v2541
    %v2543 = vrot.slane %v2479, %v2542
    %v2544 = vadd.f32 %v2536, %v2543
    %v2545 = vadd.f32 %v2537, %v2543
    %v2546 = vadd.f32 %v2538, %v2543
    %v2547 = vadd.f32 %v2539, %v2543
    %v2548 = vld [vmem:[%s5] sm:$0xff]
    %v2549 = vld [vmem:[%s5 + $0x8] sm:$0xff]
    %v2550 = vld [vmem:[%s5 + $0x10] sm:$0xff]
    %v2551 = vld [vmem:[%s5 + $0x18] sm:$0xff]
    %v2552 = vld [vmem:[%s8 + $0x5] sm:$0x1]
    %v2553 = vlaneseq
    %v2554 = vshrl.u32 %v2553, 7
    %v2555 = vsub.s32 0, %v2554
    %v2556 = vrot.slane %v2552, %v2555
    %v2558 = vsel %vm194, %v2544, 0
    %v2561 = vsel %vm194, %v2545, 0
    %v2564 = vsel %vm194, %v2546, 0
    %v2567 = vsel %vm194, %v2547, 0
    %2569 = vmatprep.subr.mxu0 0.0
    %2570 = vmatpush1.msra.mxu0 0.0
    %2571 = vmatprep.subr.mxu0 0.0
    %2572 = vmatpush1.msra.mxu0 0.0
    %2573 = vmatprep.subr.mxu0 0.0
    %2574 = vmatpush1.msra.mxu0 0.0
    %2575 = vmatprep.subr.mxu0 0.0
    %2576 = vmatpush1.msra.mxu0 0.0
    %2577 = vmatprep.subr.mxu0 0.0
    %2578 = vmatpush1.msra.mxu0 0.0
    %2579 = vmatprep.subr.mxu0 0.0
    %2580 = vmatpush1.msra.mxu0 0.0
    %2581 = vmatprep.subr.mxu0 0.0
    %2582 = vmatpush1.msra.mxu0 0.0
    %2583 = vmatprep.subr.mxu0 0.0
    %2584 = vmatpush1.msra.mxu0 0.0
    %2585 = vmatprep.subr.mxu0 0.0
    %2586 = vmatpush1.msra.mxu0 0.0
    %2587 = vmatprep.subr.mxu0 0.0
    %2588 = vmatpush1.msra.mxu0 0.0
    %2589 = vmatprep.subr.mxu0 0.0
    %2590 = vmatpush1.msra.mxu0 0.0
    %2591 = vmatprep.subr.mxu0 0.0
    %2592 = vmatpush1.msra.mxu0 0.0
    %2593 = vmatprep.subr.mxu0 0.0
    %2594 = vmatpush1.msra.mxu0 %v2551
    %2595 = vmatprep.subr.mxu0 0.0
    %2596 = vmatpush1.msra.mxu0 %v2550
    %2597 = vmatprep.subr.mxu0 0.0
    %2598 = vmatpush1.msra.mxu0 %v2549
    %2599 = vmatprep.subr.mxu0 0.0
    %2600 = vmatpush1.msra.mxu0 %v2548
    %2601 = vmatprep.subr.mxu0 0.0
    %2602 = vmatpush2.msra.mxu0 0.0
    %2603 = vmatprep.subr.mxu0 0.0
    %2604 = vmatpush2.msra.mxu0 0.0
    %2605 = vmatprep.subr.mxu0 0.0
    %2606 = vmatpush2.msra.mxu0 0.0
    %2607 = vmatprep.subr.mxu0 0.0
    %2608 = vmatpush2.msra.mxu0 0.0
    %2609 = vmatprep.subr.mxu0 0.0
    %2610 = vmatpush2.msra.mxu0 0.0
    %2611 = vmatprep.subr.mxu0 0.0
    %2612 = vmatpush2.msra.mxu0 0.0
    %2613 = vmatprep.subr.mxu0 0.0
    %2614 = vmatpush2.msra.mxu0 0.0
    %2615 = vmatprep.subr.mxu0 0.0
    %2616 = vmatpush2.msra.mxu0 0.0
    %2617 = vmatprep.subr.mxu0 0.0
    %2618 = vmatpush2.msra.mxu0 0.0
    %2619 = vmatprep.subr.mxu0 0.0
    %2620 = vmatpush2.msra.mxu0 0.0
    %2621 = vmatprep.subr.mxu0 0.0
    %2622 = vmatpush2.msra.mxu0 0.0
    %2623 = vmatprep.subr.mxu0 0.0
    %2624 = vmatpush2.msra.mxu0 0.0
    %2625 = vmatprep.subr.mxu0 0.0
    %2626 = vmatpush2.msra.mxu0 0.0
    %2627 = vmatprep.subr.mxu0 0.0
    %2628 = vmatpush2.msra.mxu0 0.0
    %2629 = vmatprep.subr.mxu0 0.0
    %2630 = vmatpush2.msra.mxu0 0.0
    %2631 = vmatprep.subr.mxu0 0.0
    %2632 = vmatpush2.msra.mxu0 0.0
    %2633 = vmatprep.mubr.f32.mxu0 0.0
    %2634 = vmatmul.mubr.f32.gmra.mxu0 %v2558
    %v2635 = vpop.f32.mrf.mxu0
    %v2636 = vadd.f32 %v2556, %v2635
    %v2637 = vpop.f32.mrf.mxu0
    %2638 = vmatprep.mubr.f32.mxu0 0.0
    %2639 = vmatmul.mubr.f32.gmra.mxu0 %v2561
    %v2640 = vpop.f32.mrf.mxu0
    %v2641 = vadd.f32 %v2556, %v2640
    %v2642 = vpop.f32.mrf.mxu0
    %2643 = vmatprep.mubr.f32.mxu0 0.0
    %2644 = vmatmul.mubr.f32.gmra.mxu0 %v2564
    %v2645 = vpop.f32.mrf.mxu0
    %v2646 = vadd.f32 %v2556, %v2645
    %v2647 = vpop.f32.mrf.mxu0
    %2648 = vmatprep.mubr.f32.mxu0 0.0
    %2649 = vmatmul.mubr.f32.gmra.mxu0 %v2567
    %v2650 = vpop.f32.mrf.mxu0
    %v2651 = vadd.f32 %v2556, %v2650
    %v2652 = vpop.f32.mrf.mxu0
    %2653 = vdwg.mxu0
    %v2654 = vmax.f32 %v2636, 0.0
    %v2655 = vmax.f32 %v2641, 0.0
    %v2656 = vmax.f32 %v2646, 0.0
    %v2657 = vmax.f32 %v2651, 0.0
    %v2658 = vld [vmem:[%s6] sm:$0xff]
    %v2659 = vld [vmem:[%s6 + $0x8] sm:$0xff]
    %v2660 = vld [vmem:[%s6 + $0x10] sm:$0xff]
    %v2661 = vld [vmem:[%s6 + $0x18] sm:$0xff]
    %v2662 = vld [vmem:[%s6 + $0x20] sm:$0xff]
    %v2663 = vld [vmem:[%s6 + $0x28] sm:$0xff]
    %v2664 = vld [vmem:[%s6 + $0x30] sm:$0xff]
    %v2665 = vld [vmem:[%s6 + $0x38] sm:$0xff]
    %v2666 = vld [vmem:[%s6 + $0x40] sm:$0xff]
    %v2667 = vld [vmem:[%s6 + $0x48] sm:$0xff]
    %v2668 = vld [vmem:[%s6 + $0x50] sm:$0xff]
    %v2669 = vld [vmem:[%s6 + $0x58] sm:$0xff]
    %v2670 = vld [vmem:[%s6 + $0x60] sm:$0xff]
    %v2671 = vld [vmem:[%s6 + $0x68] sm:$0xff]
    %v2672 = vld [vmem:[%s6 + $0x70] sm:$0xff]
    %v2673 = vld [vmem:[%s6 + $0x78] sm:$0xff]
    %2674 = vmatprep.subr.mxu0 0.0
    %2675 = vmatpush1.msra.mxu0 %v2673
    %2676 = vmatprep.subr.mxu0 0.0
    %2677 = vmatpush1.msra.mxu0 %v2672
    %2678 = vmatprep.subr.mxu0 0.0
    %2679 = vmatpush1.msra.mxu0 %v2671
    %2680 = vmatprep.subr.mxu0 0.0
    %2681 = vmatpush1.msra.mxu0 %v2670
    %2682 = vmatprep.subr.mxu0 0.0
    %2683 = vmatpush1.msra.mxu0 %v2669
    %2684 = vmatprep.subr.mxu0 0.0
    %2685 = vmatpush1.msra.mxu0 %v2668
    %2686 = vmatprep.subr.mxu0 0.0
    %2687 = vmatpush1.msra.mxu0 %v2667
    %2688 = vmatprep.subr.mxu0 0.0
    %2689 = vmatpush1.msra.mxu0 %v2666
    %2690 = vmatprep.subr.mxu0 0.0
    %2691 = vmatpush1.msra.mxu0 %v2665
    %2692 = vmatprep.subr.mxu0 0.0
    %2693 = vmatpush1.msra.mxu0 %v2664
    %2694 = vmatprep.subr.mxu0 0.0
    %2695 = vmatpush1.msra.mxu0 %v2663
    %2696 = vmatprep.subr.mxu0 0.0
    %2697 = vmatpush1.msra.mxu0 %v2662
    %2698 = vmatprep.subr.mxu0 0.0
    %2699 = vmatpush1.msra.mxu0 %v2661
    %2700 = vmatprep.subr.mxu0 0.0
    %2701 = vmatpush1.msra.mxu0 %v2660
    %2702 = vmatprep.subr.mxu0 0.0
    %2703 = vmatpush1.msra.mxu0 %v2659
    %2704 = vmatprep.subr.mxu0 0.0
    %2705 = vmatpush1.msra.mxu0 %v2658
    %2706 = vmatprep.subr.mxu0 0.0
    %2707 = vmatpush2.msra.mxu0 0.0
    %2708 = vmatprep.subr.mxu0 0.0
    %2709 = vmatpush2.msra.mxu0 0.0
    %2710 = vmatprep.subr.mxu0 0.0
    %2711 = vmatpush2.msra.mxu0 0.0
    %2712 = vmatprep.subr.mxu0 0.0
    %2713 = vmatpush2.msra.mxu0 0.0
    %2714 = vmatprep.subr.mxu0 0.0
    %2715 = vmatpush2.msra.mxu0 0.0
    %2716 = vmatprep.subr.mxu0 0.0
    %2717 = vmatpush2.msra.mxu0 0.0
    %2718 = vmatprep.subr.mxu0 0.0
    %2719 = vmatpush2.msra.mxu0 0.0
    %2720 = vmatprep.subr.mxu0 0.0
    %2721 = vmatpush2.msra.mxu0 0.0
    %2722 = vmatprep.subr.mxu0 0.0
    %2723 = vmatpush2.msra.mxu0 0.0
    %2724 = vmatprep.subr.mxu0 0.0
    %2725 = vmatpush2.msra.mxu0 0.0
    %2726 = vmatprep.subr.mxu0 0.0
    %2727 = vmatpush2.msra.mxu0 0.0
    %2728 = vmatprep.subr.mxu0 0.0
    %2729 = vmatpush2.msra.mxu0 0.0
    %2730 = vmatprep.subr.mxu0 0.0
    %2731 = vmatpush2.msra.mxu0 0.0
    %2732 = vmatprep.subr.mxu0 0.0
    %2733 = vmatpush2.msra.mxu0 0.0
    %2734 = vmatprep.subr.mxu0 0.0
    %2735 = vmatpush2.msra.mxu0 0.0
    %2736 = vmatprep.subr.mxu0 0.0
    %2737 = vmatpush2.msra.mxu0 0.0
    %2738 = vmatprep.mubr.f32.mxu0 0.0
    %2739 = vmatmul.mubr.f32.gmra.mxu0 %v2654
    %v2740 = vpop.f32.mrf.mxu0
    %v2741 = vadd.f32 0.0, %v2740
    %v2742 = vpop.f32.mrf.mxu0
    %2743 = vmatprep.mubr.f32.mxu0 0.0
    %2744 = vmatmul.mubr.f32.gmra.mxu0 %v2655
    %v2745 = vpop.f32.mrf.mxu0
    %v2746 = vadd.f32 0.0, %v2745
    %v2747 = vpop.f32.mrf.mxu0
    %2748 = vmatprep.mubr.f32.mxu0 0.0
    %2749 = vmatmul.mubr.f32.gmra.mxu0 %v2656
    %v2750 = vpop.f32.mrf.mxu0
    %v2751 = vadd.f32 0.0, %v2750
    %v2752 = vpop.f32.mrf.mxu0
    %2753 = vmatprep.mubr.f32.mxu0 0.0
    %2754 = vmatmul.mubr.f32.gmra.mxu0 %v2657
    %v2755 = vpop.f32.mrf.mxu0
    %v2756 = vadd.f32 0.0, %v2755
    %v2757 = vpop.f32.mrf.mxu0
    %2758 = vdwg.mxu0
    %v2759 = vadd.f32 %v2474, %v2741
    %v2760 = vadd.f32 %v2475, %v2746
    %v2761 = vadd.f32 %v2476, %v2751
    %v2762 = vadd.f32 %v2477, %v2756
    %v2763 = vld [vmem:[%s8 + $0x6] sm:$0x1]
    %v2764 = vlaneseq
    %v2765 = vshrl.u32 %v2764, 7
    %v2766 = vsub.s32 0, %v2765
    %v2767 = vrot.slane %v2763, %v2766
    %v2768 = vadd.f32 %v2759, %v2767
    %v2769 = vadd.f32 %v2760, %v2767
    %v2770 = vadd.f32 %v2761, %v2767
    %v2771 = vadd.f32 %v2762, %v2767
    %v2772 = vld [vmem:[%s8 + $0x7] sm:$0x1]
    %v2773 = vld [vmem:[%s8 + $0x8] sm:$0x1]
    %v2774 = vsel %vm194, %v2768, 0.0
    %2775 = vadd.xlane.f32.xlu0 %v2774
    %v2776 = vpop.xlane.xlu0 %2775
    %v2777 = vsel %vm194, %v2769, 0.0
    %2778 = vadd.xlane.f32.xlu0 %v2777
    %v2779 = vpop.xlane.xlu0 %2778
    %v2780 = vsel %vm194, %v2770, 0.0
    %2781 = vadd.xlane.f32.xlu0 %v2780
    %v2782 = vpop.xlane.xlu0 %2781
    %v2783 = vsel %vm194, %v2771, 0.0
    %2784 = vadd.xlane.f32.xlu0 %v2783
    %v2785 = vpop.xlane.xlu0 %2784
    %v2786 = vmul.f32 %v2776, %v207
    %v2787 = vmul.f32 %v2779, %v207
    %v2788 = vmul.f32 %v2782, %v207
    %v2789 = vmul.f32 %v2785, %v207
    %v2790 = vsub.f32 %v2768, %v2786
    %v2791 = vsub.f32 %v2769, %v2787
    %v2792 = vsub.f32 %v2770, %v2788
    %v2793 = vsub.f32 %v2771, %v2789
    %v2794 = vmul.f32 %v2790, %v2790
    %v2795 = vmul.f32 %v2791, %v2791
    %v2796 = vmul.f32 %v2792, %v2792
    %v2797 = vmul.f32 %v2793, %v2793
    %v2798 = vsel %vm194, %v2794, 0.0
    %2799 = vadd.xlane.f32.xlu0 %v2798
    %v2800 = vpop.xlane.xlu0 %2799
    %v2801 = vsel %vm194, %v2795, 0.0
    %2802 = vadd.xlane.f32.xlu0 %v2801
    %v2803 = vpop.xlane.xlu0 %2802
    %v2804 = vsel %vm194, %v2796, 0.0
    %2805 = vadd.xlane.f32.xlu0 %v2804
    %v2806 = vpop.xlane.xlu0 %2805
    %v2807 = vsel %vm194, %v2797, 0.0
    %2808 = vadd.xlane.f32.xlu0 %v2807
    %v2809 = vpop.xlane.xlu0 %2808
    %v2810 = vmul.f32 %v2800, %v207
    %v2811 = vmul.f32 %v2803, %v207
    %v2812 = vmul.f32 %v2806, %v207
    %v2813 = vmul.f32 %v2809, %v207
    %v2814 = vadd.f32 %v2810, 1e-05
    %v2815 = vadd.f32 %v2811, 1e-05
    %v2816 = vadd.f32 %v2812, 1e-05
    %v2817 = vadd.f32 %v2813, 1e-05
    %v2818 = vrsqrt.pop %v2814
    %v2819 = vrsqrt.pop %v2815
    %v2820 = vrsqrt.pop %v2816
    %v2821 = vrsqrt.pop %v2817
    %v2822 = vmul.f32 %v2790, %v2818
    %v2823 = vmul.f32 %v2791, %v2819
    %v2824 = vmul.f32 %v2792, %v2820
    %v2825 = vmul.f32 %v2793, %v2821
    %v2826 = vlaneseq
    %v2827 = vshrl.u32 %v2826, 7
    %v2828 = vsub.s32 0, %v2827
    %v2829 = vrot.slane %v2772, %v2828
    %v2830 = vmul.f32 %v2822, %v2829
    %v2831 = vmul.f32 %v2823, %v2829
    %v2832 = vmul.f32 %v2824, %v2829
    %v2833 = vmul.f32 %v2825, %v2829
    %v2834 = vlaneseq
    %v2835 = vshrl.u32 %v2834, 7
    %v2836 = vsub.s32 0, %v2835
    %v2837 = vrot.slane %v2773, %v2836
    %v2838 = vadd.f32 %v2830, %v2837
    %v2839 = vadd.f32 %v2831, %v2837
    %v2840 = vadd.f32 %v2832, %v2837
    %v2841 = vadd.f32 %v2833, %v2837
    %s2842 = scalar_lea.vmem %s3, 32
    %v2843 = vld [vmem:[%s2842] sm:$0xff]
    %v2844 = vld [vmem:[%s2842 + $0x8] sm:$0xff]
    %v2845 = vld [vmem:[%s2842 + $0x10] sm:$0xff]
    %v2846 = vld [vmem:[%s2842 + $0x18] sm:$0xff]
    %v2848 = vsel %vm194, %v2838, 0
    %v2851 = vsel %vm194, %v2839, 0
    %v2854 = vsel %vm194, %v2840, 0
    %v2857 = vsel %vm194, %v2841, 0
    %2859 = vmatprep.subr.mxu0 0.0
    %2860 = vmatpush1.msra.mxu0 0.0
    %2861 = vmatprep.subr.mxu0 0.0
    %2862 = vmatpush1.msra.mxu0 0.0
    %2863 = vmatprep.subr.mxu0 0.0
    %2864 = vmatpush1.msra.mxu0 0.0
    %2865 = vmatprep.subr.mxu0 0.0
    %2866 = vmatpush1.msra.mxu0 0.0
    %2867 = vmatprep.subr.mxu0 0.0
    %2868 = vmatpush1.msra.mxu0 0.0
    %2869 = vmatprep.subr.mxu0 0.0
    %2870 = vmatpush1.msra.mxu0 0.0
    %2871 = vmatprep.subr.mxu0 0.0
    %2872 = vmatpush1.msra.mxu0 0.0
    %2873 = vmatprep.subr.mxu0 0.0
    %2874 = vmatpush1.msra.mxu0 0.0
    %2875 = vmatprep.subr.mxu0 0.0
    %2876 = vmatpush1.msra.mxu0 0.0
    %2877 = vmatprep.subr.mxu0 0.0
    %2878 = vmatpush1.msra.mxu0 0.0
    %2879 = vmatprep.subr.mxu0 0.0
    %2880 = vmatpush1.msra.mxu0 0.0
    %2881 = vmatprep.subr.mxu0 0.0
    %2882 = vmatpush1.msra.mxu0 0.0
    %2883 = vmatprep.subr.mxu0 0.0
    %2884 = vmatpush1.msra.mxu0 %v2846
    %2885 = vmatprep.subr.mxu0 0.0
    %2886 = vmatpush1.msra.mxu0 %v2845
    %2887 = vmatprep.subr.mxu0 0.0
    %2888 = vmatpush1.msra.mxu0 %v2844
    %2889 = vmatprep.subr.mxu0 0.0
    %2890 = vmatpush1.msra.mxu0 %v2843
    %2891 = vmatprep.subr.mxu0 0.0
    %2892 = vmatpush2.msra.mxu0 0.0
    %2893 = vmatprep.subr.mxu0 0.0
    %2894 = vmatpush2.msra.mxu0 0.0
    %2895 = vmatprep.subr.mxu0 0.0
    %2896 = vmatpush2.msra.mxu0 0.0
    %2897 = vmatprep.subr.mxu0 0.0
    %2898 = vmatpush2.msra.mxu0 0.0
    %2899 = vmatprep.subr.mxu0 0.0
    %2900 = vmatpush2.msra.mxu0 0.0
    %2901 = vmatprep.subr.mxu0 0.0
    %2902 = vmatpush2.msra.mxu0 0.0
    %2903 = vmatprep.subr.mxu0 0.0
    %2904 = vmatpush2.msra.mxu0 0.0
    %2905 = vmatprep.subr.mxu0 0.0
    %2906 = vmatpush2.msra.mxu0 0.0
    %2907 = vmatprep.subr.mxu0 0.0
    %2908 = vmatpush2.msra.mxu0 0.0
    %2909 = vmatprep.subr.mxu0 0.0
    %2910 = vmatpush2.msra.mxu0 0.0
    %2911 = vmatprep.subr.mxu0 0.0
    %2912 = vmatpush2.msra.mxu0 0.0
    %2913 = vmatprep.subr.mxu0 0.0
    %2914 = vmatpush2.msra.mxu0 0.0
    %2915 = vmatprep.subr.mxu0 0.0
    %2916 = vmatpush2.msra.mxu0 0.0
    %2917 = vmatprep.subr.mxu0 0.0
    %2918 = vmatpush2.msra.mxu0 0.0
    %2919 = vmatprep.subr.mxu0 0.0
    %2920 = vmatpush2.msra.mxu0 0.0
    %2921 = vmatprep.subr.mxu0 0.0
    %2922 = vmatpush2.msra.mxu0 0.0
    %2923 = vmatprep.mubr.f32.mxu0 0.0
    %2924 = vmatmul.mubr.f32.gmra.mxu0 %v2848
    %v2925 = vpop.f32.mrf.mxu0
    %v2926 = vadd.f32 0.0, %v2925
    %v2927 = vpop.f32.mrf.mxu0
    %2928 = vmatprep.mubr.f32.mxu0 0.0
    %2929 = vmatmul.mubr.f32.gmra.mxu0 %v2851
    %v2930 = vpop.f32.mrf.mxu0
    %v2931 = vadd.f32 0.0, %v2930
    %v2932 = vpop.f32.mrf.mxu0
    %2933 = vmatprep.mubr.f32.mxu0 0.0
    %2934 = vmatmul.mubr.f32.gmra.mxu0 %v2854
    %v2935 = vpop.f32.mrf.mxu0
    %v2936 = vadd.f32 0.0, %v2935
    %v2937 = vpop.f32.mrf.mxu0
    %2938 = vmatprep.mubr.f32.mxu0 0.0
    %2939 = vmatmul.mubr.f32.gmra.mxu0 %v2857
    %v2940 = vpop.f32.mrf.mxu0
    %v2941 = vadd.f32 0.0, %v2940
    %v2942 = vpop.f32.mrf.mxu0
    %2943 = vdwg.mxu0
    %2948 = vrot.lane.b32.xlu0 %v2926, 120
    %v2949 = vpop.permute.xlu0 %2948
    %2950 = vrot.lane.b32.xlu0 %v2931, 120
    %v2951 = vpop.permute.xlu0 %2950
    %2952 = vrot.lane.b32.xlu0 %v2936, 120
    %v2953 = vpop.permute.xlu0 %2952
    %2954 = vrot.lane.b32.xlu0 %v2941, 120
    %v2955 = vpop.permute.xlu0 %2954
    %2956 = vrot.lane.b32.xlu0 %v2926, 112
    %v2957 = vpop.permute.xlu0 %2956
    %2958 = vrot.lane.b32.xlu0 %v2931, 112
    %v2959 = vpop.permute.xlu0 %2958
    %2960 = vrot.lane.b32.xlu0 %v2936, 112
    %v2961 = vpop.permute.xlu0 %2960
    %2962 = vrot.lane.b32.xlu0 %v2941, 112
    %v2963 = vpop.permute.xlu0 %2962
    %2964 = vrot.lane.b32.xlu0 %v2926, 104
    %v2965 = vpop.permute.xlu0 %2964
    %2966 = vrot.lane.b32.xlu0 %v2931, 104
    %v2967 = vpop.permute.xlu0 %2966
    %2968 = vrot.lane.b32.xlu0 %v2936, 104
    %v2969 = vpop.permute.xlu0 %2968
    %2970 = vrot.lane.b32.xlu0 %v2941, 104
    %v2971 = vpop.permute.xlu0 %2970
    %2972 = vrot.lane.b32.xlu0 %v2926, 96
    %v2973 = vpop.permute.xlu0 %2972
    %2974 = vrot.lane.b32.xlu0 %v2931, 96
    %v2975 = vpop.permute.xlu0 %2974
    %2976 = vrot.lane.b32.xlu0 %v2936, 96
    %v2977 = vpop.permute.xlu0 %2976
    %2978 = vrot.lane.b32.xlu0 %v2941, 96
    %v2979 = vpop.permute.xlu0 %2978
    %2980 = vrot.lane.b32.xlu0 %v2949, 96
    %v2981 = vpop.permute.xlu0 %2980
    %2982 = vrot.lane.b32.xlu0 %v2951, 96
    %v2983 = vpop.permute.xlu0 %2982
    %2984 = vrot.lane.b32.xlu0 %v2953, 96
    %v2985 = vpop.permute.xlu0 %2984
    %2986 = vrot.lane.b32.xlu0 %v2955, 96
    %v2987 = vpop.permute.xlu0 %2986
    %2988 = vrot.lane.b32.xlu0 %v2957, 96
    %v2989 = vpop.permute.xlu0 %2988
    %2990 = vrot.lane.b32.xlu0 %v2959, 96
    %v2991 = vpop.permute.xlu0 %2990
    %2992 = vrot.lane.b32.xlu0 %v2961, 96
    %v2993 = vpop.permute.xlu0 %2992
    %2994 = vrot.lane.b32.xlu0 %v2963, 96
    %v2995 = vpop.permute.xlu0 %2994
    %2996 = vrot.lane.b32.xlu0 %v2965, 96
    %v2997 = vpop.permute.xlu0 %2996
    %2998 = vrot.lane.b32.xlu0 %v2967, 96
    %v2999 = vpop.permute.xlu0 %2998
    %3000 = vrot.lane.b32.xlu0 %v2969, 96
    %v3001 = vpop.permute.xlu0 %3000
    %3002 = vrot.lane.b32.xlu0 %v2971, 96
    %v3003 = vpop.permute.xlu0 %3002
    %3020 = vxpose.xlu0.b32.start [1/16] %v2973, 128
    %3021 = vxpose.xlu0.b32.cont [2/16] %v2975, 128
    %3022 = vxpose.xlu0.b32.cont [3/16] %v2977, 128
    %3023 = vxpose.xlu0.b32.cont [4/16] %v2979, 128
    %3024 = vxpose.xlu0.b32.cont [5/16] 0.0, 128
    %3025 = vxpose.xlu0.b32.cont [6/16] 0.0, 128
    %3026 = vxpose.xlu0.b32.cont [7/16] 0.0, 128
    %3027 = vxpose.xlu0.b32.cont [8/16] 0.0, 128
    %3028 = vxpose.xlu0.b32.cont [9/16] 0.0, 128
    %3029 = vxpose.xlu0.b32.cont [10/16] 0.0, 128
    %3030 = vxpose.xlu0.b32.cont [11/16] 0.0, 128
    %3031 = vxpose.xlu0.b32.cont [12/16] 0.0, 128
    %3032 = vxpose.xlu0.b32.cont [13/16] 0.0, 128
    %3033 = vxpose.xlu0.b32.cont [14/16] 0.0, 128
    %3034 = vxpose.xlu0.b32.cont [15/16] 0.0, 128
    %3035 = vxpose.xlu0.b32.end [16/16] 0.0, 128
    %v3036 = vpop.trf.xlu0
    %v3037 = vpop.trf.xlu0
    %v3038 = vpop.trf.xlu0
    %v3039 = vpop.trf.xlu0
    %v3040 = vpop.trf.xlu0
    %v3041 = vpop.trf.xlu0
    %v3042 = vpop.trf.xlu0
    %v3043 = vpop.trf.xlu0
    %v3044 = vpop.trf.xlu0
    %v3045 = vpop.trf.xlu0
    %v3046 = vpop.trf.xlu0
    %v3047 = vpop.trf.xlu0
    %v3048 = vpop.trf.xlu0
    %v3049 = vpop.trf.xlu0
    %v3050 = vpop.trf.xlu0
    %v3051 = vpop.trf.xlu0
    %3052 = vxpose.xlu0.b32.start [1/16] %v2981, 128
    %3053 = vxpose.xlu0.b32.cont [2/16] %v2983, 128
    %3054 = vxpose.xlu0.b32.cont [3/16] %v2985, 128
    %3055 = vxpose.xlu0.b32.cont [4/16] %v2987, 128
    %3056 = vxpose.xlu0.b32.cont [5/16] 0.0, 128
    %3057 = vxpose.xlu0.b32.cont [6/16] 0.0, 128
    %3058 = vxpose.xlu0.b32.cont [7/16] 0.0, 128
    %3059 = vxpose.xlu0.b32.cont [8/16] 0.0, 128
    %3060 = vxpose.xlu0.b32.cont [9/16] 0.0, 128
    %3061 = vxpose.xlu0.b32.cont [10/16] 0.0, 128
    %3062 = vxpose.xlu0.b32.cont [11/16] 0.0, 128
    %3063 = vxpose.xlu0.b32.cont [12/16] 0.0, 128
    %3064 = vxpose.xlu0.b32.cont [13/16] 0.0, 128
    %3065 = vxpose.xlu0.b32.cont [14/16] 0.0, 128
    %3066 = vxpose.xlu0.b32.cont [15/16] 0.0, 128
    %3067 = vxpose.xlu0.b32.end [16/16] 0.0, 128
    %v3068 = vpop.trf.xlu0
    %v3069 = vpop.trf.xlu0
    %v3070 = vpop.trf.xlu0
    %v3071 = vpop.trf.xlu0
    %v3072 = vpop.trf.xlu0
    %v3073 = vpop.trf.xlu0
    %v3074 = vpop.trf.xlu0
    %v3075 = vpop.trf.xlu0
    %v3076 = vpop.trf.xlu0
    %v3077 = vpop.trf.xlu0
    %v3078 = vpop.trf.xlu0
    %v3079 = vpop.trf.xlu0
    %v3080 = vpop.trf.xlu0
    %v3081 = vpop.trf.xlu0
    %v3082 = vpop.trf.xlu0
    %v3083 = vpop.trf.xlu0
    %3084 = vxpose.xlu0.b32.start [1/16] %v2989, 128
    %3085 = vxpose.xlu0.b32.cont [2/16] %v2991, 128
    %3086 = vxpose.xlu0.b32.cont [3/16] %v2993, 128
    %3087 = vxpose.xlu0.b32.cont [4/16] %v2995, 128
    %3088 = vxpose.xlu0.b32.cont [5/16] 0.0, 128
    %3089 = vxpose.xlu0.b32.cont [6/16] 0.0, 128
    %3090 = vxpose.xlu0.b32.cont [7/16] 0.0, 128
    %3091 = vxpose.xlu0.b32.cont [8/16] 0.0, 128
    %3092 = vxpose.xlu0.b32.cont [9/16] 0.0, 128
    %3093 = vxpose.xlu0.b32.cont [10/16] 0.0, 128
    %3094 = vxpose.xlu0.b32.cont [11/16] 0.0, 128
    %3095 = vxpose.xlu0.b32.cont [12/16] 0.0, 128
    %3096 = vxpose.xlu0.b32.cont [13/16] 0.0, 128
    %3097 = vxpose.xlu0.b32.cont [14/16] 0.0, 128
    %3098 = vxpose.xlu0.b32.cont [15/16] 0.0, 128
    %3099 = vxpose.xlu0.b32.end [16/16] 0.0, 128
    %v3100 = vpop.trf.xlu0
    %v3101 = vpop.trf.xlu0
    %v3102 = vpop.trf.xlu0
    %v3103 = vpop.trf.xlu0
    %v3104 = vpop.trf.xlu0
    %v3105 = vpop.trf.xlu0
    %v3106 = vpop.trf.xlu0
    %v3107 = vpop.trf.xlu0
    %v3108 = vpop.trf.xlu0
    %v3109 = vpop.trf.xlu0
    %v3110 = vpop.trf.xlu0
    %v3111 = vpop.trf.xlu0
    %v3112 = vpop.trf.xlu0
    %v3113 = vpop.trf.xlu0
    %v3114 = vpop.trf.xlu0
    %v3115 = vpop.trf.xlu0
    %3116 = vxpose.xlu0.b32.start [1/16] %v2997, 128
    %3117 = vxpose.xlu0.b32.cont [2/16] %v2999, 128
    %3118 = vxpose.xlu0.b32.cont [3/16] %v3001, 128
    %3119 = vxpose.xlu0.b32.cont [4/16] %v3003, 128
    %3120 = vxpose.xlu0.b32.cont [5/16] 0.0, 128
    %3121 = vxpose.xlu0.b32.cont [6/16] 0.0, 128
    %3122 = vxpose.xlu0.b32.cont [7/16] 0.0, 128
    %3123 = vxpose.xlu0.b32.cont [8/16] 0.0, 128
    %3124 = vxpose.xlu0.b32.cont [9/16] 0.0, 128
    %3125 = vxpose.xlu0.b32.cont [10/16] 0.0, 128
    %3126 = vxpose.xlu0.b32.cont [11/16] 0.0, 128
    %3127 = vxpose.xlu0.b32.cont [12/16] 0.0, 128
    %3128 = vxpose.xlu0.b32.cont [13/16] 0.0, 128
    %3129 = vxpose.xlu0.b32.cont [14/16] 0.0, 128
    %3130 = vxpose.xlu0.b32.cont [15/16] 0.0, 128
    %3131 = vxpose.xlu0.b32.end [16/16] 0.0, 128
    %v3132 = vpop.trf.xlu0
    %v3133 = vpop.trf.xlu0
    %v3134 = vpop.trf.xlu0
    %v3135 = vpop.trf.xlu0
    %v3136 = vpop.trf.xlu0
    %v3137 = vpop.trf.xlu0
    %v3138 = vpop.trf.xlu0
    %v3139 = vpop.trf.xlu0
    %v3140 = vpop.trf.xlu0
    %v3141 = vpop.trf.xlu0
    %v3142 = vpop.trf.xlu0
    %v3143 = vpop.trf.xlu0
    %v3144 = vpop.trf.xlu0
    %v3145 = vpop.trf.xlu0
    %v3146 = vpop.trf.xlu0
    %v3147 = vpop.trf.xlu0
    %v3148 = vsel %vm569, %v2926, 0
    %v3150 = vsel %vm569, %v2931, 0
    %v3152 = vsel %vm569, %v2936, 0
    %v3154 = vsel %vm569, %v2941, 0
    %3156 = vmatprep.subr.mxu0 0.0
    %3157 = vmatpush1.msra.mxu0 0.0
    %3158 = vmatprep.subr.mxu0 0.0
    %3159 = vmatpush1.msra.mxu0 0.0
    %3160 = vmatprep.subr.mxu0 0.0
    %3161 = vmatpush1.msra.mxu0 0.0
    %3162 = vmatprep.subr.mxu0 0.0
    %3163 = vmatpush1.msra.mxu0 0.0
    %3164 = vmatprep.subr.mxu0 0.0
    %3165 = vmatpush1.msra.mxu0 0.0
    %3166 = vmatprep.subr.mxu0 0.0
    %3167 = vmatpush1.msra.mxu0 0.0
    %3168 = vmatprep.subr.mxu0 0.0
    %3169 = vmatpush1.msra.mxu0 0.0
    %3170 = vmatprep.subr.mxu0 0.0
    %3171 = vmatpush1.msra.mxu0 0.0
    %3172 = vmatprep.subr.mxu0 0.0
    %3173 = vmatpush1.msra.mxu0 0.0
    %3174 = vmatprep.subr.mxu0 0.0
    %3175 = vmatpush1.msra.mxu0 0.0
    %3176 = vmatprep.subr.mxu0 0.0
    %3177 = vmatpush1.msra.mxu0 0.0
    %3178 = vmatprep.subr.mxu0 0.0
    %3179 = vmatpush1.msra.mxu0 0.0
    %3180 = vmatprep.subr.mxu0 0.0
    %3181 = vmatpush1.msra.mxu0 0.0
    %3182 = vmatprep.subr.mxu0 0.0
    %3183 = vmatpush1.msra.mxu0 0.0
    %3184 = vmatprep.subr.mxu0 0.0
    %3185 = vmatpush1.msra.mxu0 0.0
    %3186 = vmatprep.subr.mxu0 0.0
    %3187 = vmatpush1.msra.mxu0 %v3036
    %3188 = vmatprep.subr.mxu0 0.0
    %3189 = vmatpush2.msra.mxu0 0.0
    %3190 = vmatprep.subr.mxu0 0.0
    %3191 = vmatpush2.msra.mxu0 0.0
    %3192 = vmatprep.subr.mxu0 0.0
    %3193 = vmatpush2.msra.mxu0 0.0
    %3194 = vmatprep.subr.mxu0 0.0
    %3195 = vmatpush2.msra.mxu0 0.0
    %3196 = vmatprep.subr.mxu0 0.0
    %3197 = vmatpush2.msra.mxu0 0.0
    %3198 = vmatprep.subr.mxu0 0.0
    %3199 = vmatpush2.msra.mxu0 0.0
    %3200 = vmatprep.subr.mxu0 0.0
    %3201 = vmatpush2.msra.mxu0 0.0
    %3202 = vmatprep.subr.mxu0 0.0
    %3203 = vmatpush2.msra.mxu0 0.0
    %3204 = vmatprep.subr.mxu0 0.0
    %3205 = vmatpush2.msra.mxu0 0.0
    %3206 = vmatprep.subr.mxu0 0.0
    %3207 = vmatpush2.msra.mxu0 0.0
    %3208 = vmatprep.subr.mxu0 0.0
    %3209 = vmatpush2.msra.mxu0 0.0
    %3210 = vmatprep.subr.mxu0 0.0
    %3211 = vmatpush2.msra.mxu0 0.0
    %3212 = vmatprep.subr.mxu0 0.0
    %3213 = vmatpush2.msra.mxu0 0.0
    %3214 = vmatprep.subr.mxu0 0.0
    %3215 = vmatpush2.msra.mxu0 0.0
    %3216 = vmatprep.subr.mxu0 0.0
    %3217 = vmatpush2.msra.mxu0 0.0
    %3218 = vmatprep.subr.mxu0 0.0
    %3219 = vmatpush2.msra.mxu0 0.0
    %3220 = vmatprep.mubr.f32.mxu0 0.0
    %3221 = vmatmul.mubr.f32.gmra.mxu0 %v3148
    %v3222 = vpop.f32.mrf.mxu0
    %v3223 = vadd.f32 %v188, %v3222
    %v3224 = vpop.f32.mrf.mxu0
    %3225 = vmatprep.mubr.f32.mxu0 0.0
    %3226 = vmatmul.mubr.f32.gmra.mxu0 %v3150
    %v3227 = vpop.f32.mrf.mxu0
    %v3228 = vadd.f32 %v189, %v3227
    %v3229 = vpop.f32.mrf.mxu0
    %3230 = vmatprep.mubr.f32.mxu0 0.0
    %3231 = vmatmul.mubr.f32.gmra.mxu0 %v3152
    %v3232 = vpop.f32.mrf.mxu0
    %v3233 = vadd.f32 %v190, %v3232
    %v3234 = vpop.f32.mrf.mxu0
    %3235 = vmatprep.mubr.f32.mxu0 0.0
    %3236 = vmatmul.mubr.f32.gmra.mxu0 %v3154
    %v3237 = vpop.f32.mrf.mxu0
    %v3238 = vadd.f32 %v191, %v3237
    %v3239 = vpop.f32.mrf.mxu0
    %3240 = vdwg.mxu0
    %v3241 = vsel %vm569, %v2949, 0
    %v3243 = vsel %vm569, %v2951, 0
    %v3245 = vsel %vm569, %v2953, 0
    %v3247 = vsel %vm569, %v2955, 0
    %3249 = vmatprep.subr.mxu0 0.0
    %3250 = vmatpush1.msra.mxu0 0.0
    %3251 = vmatprep.subr.mxu0 0.0
    %3252 = vmatpush1.msra.mxu0 0.0
    %3253 = vmatprep.subr.mxu0 0.0
    %3254 = vmatpush1.msra.mxu0 0.0
    %3255 = vmatprep.subr.mxu0 0.0
    %3256 = vmatpush1.msra.mxu0 0.0
    %3257 = vmatprep.subr.mxu0 0.0
    %3258 = vmatpush1.msra.mxu0 0.0
    %3259 = vmatprep.subr.mxu0 0.0
    %3260 = vmatpush1.msra.mxu0 0.0
    %3261 = vmatprep.subr.mxu0 0.0
    %3262 = vmatpush1.msra.mxu0 0.0
    %3263 = vmatprep.subr.mxu0 0.0
    %3264 = vmatpush1.msra.mxu0 0.0
    %3265 = vmatprep.subr.mxu0 0.0
    %3266 = vmatpush1.msra.mxu0 0.0
    %3267 = vmatprep.subr.mxu0 0.0
    %3268 = vmatpush1.msra.mxu0 0.0
    %3269 = vmatprep.subr.mxu0 0.0
    %3270 = vmatpush1.msra.mxu0 0.0
    %3271 = vmatprep.subr.mxu0 0.0
    %3272 = vmatpush1.msra.mxu0 0.0
    %3273 = vmatprep.subr.mxu0 0.0
    %3274 = vmatpush1.msra.mxu0 0.0
    %3275 = vmatprep.subr.mxu0 0.0
    %3276 = vmatpush1.msra.mxu0 0.0
    %3277 = vmatprep.subr.mxu0 0.0
    %3278 = vmatpush1.msra.mxu0 0.0
    %3279 = vmatprep.subr.mxu0 0.0
    %3280 = vmatpush1.msra.mxu0 %v3068
    %3281 = vmatprep.subr.mxu0 0.0
    %3282 = vmatpush2.msra.mxu0 0.0
    %3283 = vmatprep.subr.mxu0 0.0
    %3284 = vmatpush2.msra.mxu0 0.0
    %3285 = vmatprep.subr.mxu0 0.0
    %3286 = vmatpush2.msra.mxu0 0.0
    %3287 = vmatprep.subr.mxu0 0.0
    %3288 = vmatpush2.msra.mxu0 0.0
    %3289 = vmatprep.subr.mxu0 0.0
    %3290 = vmatpush2.msra.mxu0 0.0
    %3291 = vmatprep.subr.mxu0 0.0
    %3292 = vmatpush2.msra.mxu0 0.0
    %3293 = vmatprep.subr.mxu0 0.0
    %3294 = vmatpush2.msra.mxu0 0.0
    %3295 = vmatprep.subr.mxu0 0.0
    %3296 = vmatpush2.msra.mxu0 0.0
    %3297 = vmatprep.subr.mxu0 0.0
    %3298 = vmatpush2.msra.mxu0 0.0
    %3299 = vmatprep.subr.mxu0 0.0
    %3300 = vmatpush2.msra.mxu0 0.0
    %3301 = vmatprep.subr.mxu0 0.0
    %3302 = vmatpush2.msra.mxu0 0.0
    %3303 = vmatprep.subr.mxu0 0.0
    %3304 = vmatpush2.msra.mxu0 0.0
    %3305 = vmatprep.subr.mxu0 0.0
    %3306 = vmatpush2.msra.mxu0 0.0
    %3307 = vmatprep.subr.mxu0 0.0
    %3308 = vmatpush2.msra.mxu0 0.0
    %3309 = vmatprep.subr.mxu0 0.0
    %3310 = vmatpush2.msra.mxu0 0.0
    %3311 = vmatprep.subr.mxu0 0.0
    %3312 = vmatpush2.msra.mxu0 0.0
    %3313 = vmatprep.mubr.f32.mxu0 0.0
    %3314 = vmatmul.mubr.f32.gmra.mxu0 %v3241
    %v3315 = vpop.f32.mrf.mxu0
    %v3316 = vadd.f32 %v188, %v3315
    %v3317 = vpop.f32.mrf.mxu0
    %3318 = vmatprep.mubr.f32.mxu0 0.0
    %3319 = vmatmul.mubr.f32.gmra.mxu0 %v3243
    %v3320 = vpop.f32.mrf.mxu0
    %v3321 = vadd.f32 %v189, %v3320
    %v3322 = vpop.f32.mrf.mxu0
    %3323 = vmatprep.mubr.f32.mxu0 0.0
    %3324 = vmatmul.mubr.f32.gmra.mxu0 %v3245
    %v3325 = vpop.f32.mrf.mxu0
    %v3326 = vadd.f32 %v190, %v3325
    %v3327 = vpop.f32.mrf.mxu0
    %3328 = vmatprep.mubr.f32.mxu0 0.0
    %3329 = vmatmul.mubr.f32.gmra.mxu0 %v3247
    %v3330 = vpop.f32.mrf.mxu0
    %v3331 = vadd.f32 %v191, %v3330
    %v3332 = vpop.f32.mrf.mxu0
    %3333 = vdwg.mxu0
    %v3334 = vsel %vm569, %v2957, 0
    %v3336 = vsel %vm569, %v2959, 0
    %v3338 = vsel %vm569, %v2961, 0
    %v3340 = vsel %vm569, %v2963, 0
    %3342 = vmatprep.subr.mxu0 0.0
    %3343 = vmatpush1.msra.mxu0 0.0
    %3344 = vmatprep.subr.mxu0 0.0
    %3345 = vmatpush1.msra.mxu0 0.0
    %3346 = vmatprep.subr.mxu0 0.0
    %3347 = vmatpush1.msra.mxu0 0.0
    %3348 = vmatprep.subr.mxu0 0.0
    %3349 = vmatpush1.msra.mxu0 0.0
    %3350 = vmatprep.subr.mxu0 0.0
    %3351 = vmatpush1.msra.mxu0 0.0
    %3352 = vmatprep.subr.mxu0 0.0
    %3353 = vmatpush1.msra.mxu0 0.0
    %3354 = vmatprep.subr.mxu0 0.0
    %3355 = vmatpush1.msra.mxu0 0.0
    %3356 = vmatprep.subr.mxu0 0.0
    %3357 = vmatpush1.msra.mxu0 0.0
    %3358 = vmatprep.subr.mxu0 0.0
    %3359 = vmatpush1.msra.mxu0 0.0
    %3360 = vmatprep.subr.mxu0 0.0
    %3361 = vmatpush1.msra.mxu0 0.0
    %3362 = vmatprep.subr.mxu0 0.0
    %3363 = vmatpush1.msra.mxu0 0.0
    %3364 = vmatprep.subr.mxu0 0.0
    %3365 = vmatpush1.msra.mxu0 0.0
    %3366 = vmatprep.subr.mxu0 0.0
    %3367 = vmatpush1.msra.mxu0 0.0
    %3368 = vmatprep.subr.mxu0 0.0
    %3369 = vmatpush1.msra.mxu0 0.0
    %3370 = vmatprep.subr.mxu0 0.0
    %3371 = vmatpush1.msra.mxu0 0.0
    %3372 = vmatprep.subr.mxu0 0.0
    %3373 = vmatpush1.msra.mxu0 %v3100
    %3374 = vmatprep.subr.mxu0 0.0
    %3375 = vmatpush2.msra.mxu0 0.0
    %3376 = vmatprep.subr.mxu0 0.0
    %3377 = vmatpush2.msra.mxu0 0.0
    %3378 = vmatprep.subr.mxu0 0.0
    %3379 = vmatpush2.msra.mxu0 0.0
    %3380 = vmatprep.subr.mxu0 0.0
    %3381 = vmatpush2.msra.mxu0 0.0
    %3382 = vmatprep.subr.mxu0 0.0
    %3383 = vmatpush2.msra.mxu0 0.0
    %3384 = vmatprep.subr.mxu0 0.0
    %3385 = vmatpush2.msra.mxu0 0.0
    %3386 = vmatprep.subr.mxu0 0.0
    %3387 = vmatpush2.msra.mxu0 0.0
    %3388 = vmatprep.subr.mxu0 0.0
    %3389 = vmatpush2.msra.mxu0 0.0
    %3390 = vmatprep.subr.mxu0 0.0
    %3391 = vmatpush2.msra.mxu0 0.0
    %3392 = vmatprep.subr.mxu0 0.0
    %3393 = vmatpush2.msra.mxu0 0.0
    %3394 = vmatprep.subr.mxu0 0.0
    %3395 = vmatpush2.msra.mxu0 0.0
    %3396 = vmatprep.subr.mxu0 0.0
    %3397 = vmatpush2.msra.mxu0 0.0
    %3398 = vmatprep.subr.mxu0 0.0
    %3399 = vmatpush2.msra.mxu0 0.0
    %3400 = vmatprep.subr.mxu0 0.0
    %3401 = vmatpush2.msra.mxu0 0.0
    %3402 = vmatprep.subr.mxu0 0.0
    %3403 = vmatpush2.msra.mxu0 0.0
    %3404 = vmatprep.subr.mxu0 0.0
    %3405 = vmatpush2.msra.mxu0 0.0
    %3406 = vmatprep.mubr.f32.mxu0 0.0
    %3407 = vmatmul.mubr.f32.gmra.mxu0 %v3334
    %v3408 = vpop.f32.mrf.mxu0
    %v3409 = vadd.f32 %v188, %v3408
    %v3410 = vpop.f32.mrf.mxu0
    %3411 = vmatprep.mubr.f32.mxu0 0.0
    %3412 = vmatmul.mubr.f32.gmra.mxu0 %v3336
    %v3413 = vpop.f32.mrf.mxu0
    %v3414 = vadd.f32 %v189, %v3413
    %v3415 = vpop.f32.mrf.mxu0
    %3416 = vmatprep.mubr.f32.mxu0 0.0
    %3417 = vmatmul.mubr.f32.gmra.mxu0 %v3338
    %v3418 = vpop.f32.mrf.mxu0
    %v3419 = vadd.f32 %v190, %v3418
    %v3420 = vpop.f32.mrf.mxu0
    %3421 = vmatprep.mubr.f32.mxu0 0.0
    %3422 = vmatmul.mubr.f32.gmra.mxu0 %v3340
    %v3423 = vpop.f32.mrf.mxu0
    %v3424 = vadd.f32 %v191, %v3423
    %v3425 = vpop.f32.mrf.mxu0
    %3426 = vdwg.mxu0
    %v3427 = vsel %vm569, %v2965, 0
    %v3429 = vsel %vm569, %v2967, 0
    %v3431 = vsel %vm569, %v2969, 0
    %v3433 = vsel %vm569, %v2971, 0
    %3435 = vmatprep.subr.mxu0 0.0
    %3436 = vmatpush1.msra.mxu0 0.0
    %3437 = vmatprep.subr.mxu0 0.0
    %3438 = vmatpush1.msra.mxu0 0.0
    %3439 = vmatprep.subr.mxu0 0.0
    %3440 = vmatpush1.msra.mxu0 0.0
    %3441 = vmatprep.subr.mxu0 0.0
    %3442 = vmatpush1.msra.mxu0 0.0
    %3443 = vmatprep.subr.mxu0 0.0
    %3444 = vmatpush1.msra.mxu0 0.0
    %3445 = vmatprep.subr.mxu0 0.0
    %3446 = vmatpush1.msra.mxu0 0.0
    %3447 = vmatprep.subr.mxu0 0.0
    %3448 = vmatpush1.msra.mxu0 0.0
    %3449 = vmatprep.subr.mxu0 0.0
    %3450 = vmatpush1.msra.mxu0 0.0
    %3451 = vmatprep.subr.mxu0 0.0
    %3452 = vmatpush1.msra.mxu0 0.0
    %3453 = vmatprep.subr.mxu0 0.0
    %3454 = vmatpush1.msra.mxu0 0.0
    %3455 = vmatprep.subr.mxu0 0.0
    %3456 = vmatpush1.msra.mxu0 0.0
    %3457 = vmatprep.subr.mxu0 0.0
    %3458 = vmatpush1.msra.mxu0 0.0
    %3459 = vmatprep.subr.mxu0 0.0
    %3460 = vmatpush1.msra.mxu0 0.0
    %3461 = vmatprep.subr.mxu0 0.0
    %3462 = vmatpush1.msra.mxu0 0.0
    %3463 = vmatprep.subr.mxu0 0.0
    %3464 = vmatpush1.msra.mxu0 0.0
    %3465 = vmatprep.subr.mxu0 0.0
    %3466 = vmatpush1.msra.mxu0 %v3132
    %3467 = vmatprep.subr.mxu0 0.0
    %3468 = vmatpush2.msra.mxu0 0.0
    %3469 = vmatprep.subr.mxu0 0.0
    %3470 = vmatpush2.msra.mxu0 0.0
    %3471 = vmatprep.subr.mxu0 0.0
    %3472 = vmatpush2.msra.mxu0 0.0
    %3473 = vmatprep.subr.mxu0 0.0
    %3474 = vmatpush2.msra.mxu0 0.0
    %3475 = vmatprep.subr.mxu0 0.0
    %3476 = vmatpush2.msra.mxu0 0.0
    %3477 = vmatprep.subr.mxu0 0.0
    %3478 = vmatpush2.msra.mxu0 0.0
    %3479 = vmatprep.subr.mxu0 0.0
    %3480 = vmatpush2.msra.mxu0 0.0
    %3481 = vmatprep.subr.mxu0 0.0
    %3482 = vmatpush2.msra.mxu0 0.0
    %3483 = vmatprep.subr.mxu0 0.0
    %3484 = vmatpush2.msra.mxu0 0.0
    %3485 = vmatprep.subr.mxu0 0.0
    %3486 = vmatpush2.msra.mxu0 0.0
    %3487 = vmatprep.subr.mxu0 0.0
    %3488 = vmatpush2.msra.mxu0 0.0
    %3489 = vmatprep.subr.mxu0 0.0
    %3490 = vmatpush2.msra.mxu0 0.0
    %3491 = vmatprep.subr.mxu0 0.0
    %3492 = vmatpush2.msra.mxu0 0.0
    %3493 = vmatprep.subr.mxu0 0.0
    %3494 = vmatpush2.msra.mxu0 0.0
    %3495 = vmatprep.subr.mxu0 0.0
    %3496 = vmatpush2.msra.mxu0 0.0
    %3497 = vmatprep.subr.mxu0 0.0
    %3498 = vmatpush2.msra.mxu0 0.0
    %3499 = vmatprep.mubr.f32.mxu0 0.0
    %3500 = vmatmul.mubr.f32.gmra.mxu0 %v3427
    %v3501 = vpop.f32.mrf.mxu0
    %v3502 = vadd.f32 %v188, %v3501
    %v3503 = vpop.f32.mrf.mxu0
    %3504 = vmatprep.mubr.f32.mxu0 0.0
    %3505 = vmatmul.mubr.f32.gmra.mxu0 %v3429
    %v3506 = vpop.f32.mrf.mxu0
    %v3507 = vadd.f32 %v189, %v3506
    %v3508 = vpop.f32.mrf.mxu0
    %3509 = vmatprep.mubr.f32.mxu0 0.0
    %3510 = vmatmul.mubr.f32.gmra.mxu0 %v3431
    %v3511 = vpop.f32.mrf.mxu0
    %v3512 = vadd.f32 %v190, %v3511
    %v3513 = vpop.f32.mrf.mxu0
    %3514 = vmatprep.mubr.f32.mxu0 0.0
    %3515 = vmatmul.mubr.f32.gmra.mxu0 %v3433
    %v3516 = vpop.f32.mrf.mxu0
    %v3517 = vadd.f32 %v191, %v3516
    %v3518 = vpop.f32.mrf.mxu0
    %3519 = vdwg.mxu0
    %v3520 = vsel %vm194, %v3223, -inf
    %3521 = vmax.xlane.f32.xlu0 %v3520
    %v3522 = vpop.xlane.xlu0 %3521
    %v3523 = vsel %vm194, %v3228, -inf
    %3524 = vmax.xlane.f32.xlu0 %v3523
    %v3525 = vpop.xlane.xlu0 %3524
    %v3526 = vsel %vm194, %v3233, -inf
    %3527 = vmax.xlane.f32.xlu0 %v3526
    %v3528 = vpop.xlane.xlu0 %3527
    %v3529 = vsel %vm194, %v3238, -inf
    %3530 = vmax.xlane.f32.xlu0 %v3529
    %v3531 = vpop.xlane.xlu0 %3530
    %v3532 = vsel %vm194, %v3316, -inf
    %3533 = vmax.xlane.f32.xlu0 %v3532
    %v3534 = vpop.xlane.xlu0 %3533
    %v3535 = vsel %vm194, %v3321, -inf
    %3536 = vmax.xlane.f32.xlu0 %v3535
    %v3537 = vpop.xlane.xlu0 %3536
    %v3538 = vsel %vm194, %v3326, -inf
    %3539 = vmax.xlane.f32.xlu0 %v3538
    %v3540 = vpop.xlane.xlu0 %3539
    %v3541 = vsel %vm194, %v3331, -inf
    %3542 = vmax.xlane.f32.xlu0 %v3541
    %v3543 = vpop.xlane.xlu0 %3542
    %v3544 = vsel %vm194, %v3409, -inf
    %3545 = vmax.xlane.f32.xlu0 %v3544
    %v3546 = vpop.xlane.xlu0 %3545
    %v3547 = vsel %vm194, %v3414, -inf
    %3548 = vmax.xlane.f32.xlu0 %v3547
    %v3549 = vpop.xlane.xlu0 %3548
    %v3550 = vsel %vm194, %v3419, -inf
    %3551 = vmax.xlane.f32.xlu0 %v3550
    %v3552 = vpop.xlane.xlu0 %3551
    %v3553 = vsel %vm194, %v3424, -inf
    %3554 = vmax.xlane.f32.xlu0 %v3553
    %v3555 = vpop.xlane.xlu0 %3554
    %v3556 = vsel %vm194, %v3502, -inf
    %3557 = vmax.xlane.f32.xlu0 %v3556
    %v3558 = vpop.xlane.xlu0 %3557
    %v3559 = vsel %vm194, %v3507, -inf
    %3560 = vmax.xlane.f32.xlu0 %v3559
    %v3561 = vpop.xlane.xlu0 %3560
    %v3562 = vsel %vm194, %v3512, -inf
    %3563 = vmax.xlane.f32.xlu0 %v3562
    %v3564 = vpop.xlane.xlu0 %3563
    %v3565 = vsel %vm194, %v3517, -inf
    %3566 = vmax.xlane.f32.xlu0 %v3565
    %v3567 = vpop.xlane.xlu0 %3566
    %v3568 = vsub.f32 %v3223, %v3522
    %v3569 = vsub.f32 %v3228, %v3525
    %v3570 = vsub.f32 %v3233, %v3528
    %v3571 = vsub.f32 %v3238, %v3531
    %v3572 = vsub.f32 %v3316, %v3534
    %v3573 = vsub.f32 %v3321, %v3537
    %v3574 = vsub.f32 %v3326, %v3540
    %v3575 = vsub.f32 %v3331, %v3543
    %v3576 = vsub.f32 %v3409, %v3546
    %v3577 = vsub.f32 %v3414, %v3549
    %v3578 = vsub.f32 %v3419, %v3552
    %v3579 = vsub.f32 %v3424, %v3555
    %v3580 = vsub.f32 %v3502, %v3558
    %v3581 = vsub.f32 %v3507, %v3561
    %v3582 = vsub.f32 %v3512, %v3564
    %v3583 = vsub.f32 %v3517, %v3567
    %v3584 = vmul.f32 %v3568, 1.442695
    %v3585 = vpow.pop %v3584
    %v3586 = vmul.f32 %v3569, 1.442695
    %v3587 = vpow.pop %v3586
    %v3588 = vmul.f32 %v3570, 1.442695
    %v3589 = vpow.pop %v3588
    %v3590 = vmul.f32 %v3571, 1.442695
    %v3591 = vpow.pop %v3590
    %v3592 = vmul.f32 %v3572, 1.442695
    %v3593 = vpow.pop %v3592
    %v3594 = vmul.f32 %v3573, 1.442695
    %v3595 = vpow.pop %v3594
    %v3596 = vmul.f32 %v3574, 1.442695
    %v3597 = vpow.pop %v3596
    %v3598 = vmul.f32 %v3575, 1.442695
    %v3599 = vpow.pop %v3598
    %v3600 = vmul.f32 %v3576, 1.442695
    %v3601 = vpow.pop %v3600
    %v3602 = vmul.f32 %v3577, 1.442695
    %v3603 = vpow.pop %v3602
    %v3604 = vmul.f32 %v3578, 1.442695
    %v3605 = vpow.pop %v3604
    %v3606 = vmul.f32 %v3579, 1.442695
    %v3607 = vpow.pop %v3606
    %v3608 = vmul.f32 %v3580, 1.442695
    %v3609 = vpow.pop %v3608
    %v3610 = vmul.f32 %v3581, 1.442695
    %v3611 = vpow.pop %v3610
    %v3612 = vmul.f32 %v3582, 1.442695
    %v3613 = vpow.pop %v3612
    %v3614 = vmul.f32 %v3583, 1.442695
    %v3615 = vpow.pop %v3614
    %v3616 = vsel %vm194, %v3585, 0.0
    %3617 = vadd.xlane.f32.xlu0 %v3616
    %v3618 = vpop.xlane.xlu0 %3617
    %v3619 = vsel %vm194, %v3587, 0.0
    %3620 = vadd.xlane.f32.xlu0 %v3619
    %v3621 = vpop.xlane.xlu0 %3620
    %v3622 = vsel %vm194, %v3589, 0.0
    %3623 = vadd.xlane.f32.xlu0 %v3622
    %v3624 = vpop.xlane.xlu0 %3623
    %v3625 = vsel %vm194, %v3591, 0.0
    %3626 = vadd.xlane.f32.xlu0 %v3625
    %v3627 = vpop.xlane.xlu0 %3626
    %v3628 = vsel %vm194, %v3593, 0.0
    %3629 = vadd.xlane.f32.xlu0 %v3628
    %v3630 = vpop.xlane.xlu0 %3629
    %v3631 = vsel %vm194, %v3595, 0.0
    %3632 = vadd.xlane.f32.xlu0 %v3631
    %v3633 = vpop.xlane.xlu0 %3632
    %v3634 = vsel %vm194, %v3597, 0.0
    %3635 = vadd.xlane.f32.xlu0 %v3634
    %v3636 = vpop.xlane.xlu0 %3635
    %v3637 = vsel %vm194, %v3599, 0.0
    %3638 = vadd.xlane.f32.xlu0 %v3637
    %v3639 = vpop.xlane.xlu0 %3638
    %v3640 = vsel %vm194, %v3601, 0.0
    %3641 = vadd.xlane.f32.xlu0 %v3640
    %v3642 = vpop.xlane.xlu0 %3641
    %v3643 = vsel %vm194, %v3603, 0.0
    %3644 = vadd.xlane.f32.xlu0 %v3643
    %v3645 = vpop.xlane.xlu0 %3644
    %v3646 = vsel %vm194, %v3605, 0.0
    %3647 = vadd.xlane.f32.xlu0 %v3646
    %v3648 = vpop.xlane.xlu0 %3647
    %v3649 = vsel %vm194, %v3607, 0.0
    %3650 = vadd.xlane.f32.xlu0 %v3649
    %v3651 = vpop.xlane.xlu0 %3650
    %v3652 = vsel %vm194, %v3609, 0.0
    %3653 = vadd.xlane.f32.xlu0 %v3652
    %v3654 = vpop.xlane.xlu0 %3653
    %v3655 = vsel %vm194, %v3611, 0.0
    %3656 = vadd.xlane.f32.xlu0 %v3655
    %v3657 = vpop.xlane.xlu0 %3656
    %v3658 = vsel %vm194, %v3613, 0.0
    %3659 = vadd.xlane.f32.xlu0 %v3658
    %v3660 = vpop.xlane.xlu0 %3659
    %v3661 = vsel %vm194, %v3615, 0.0
    %3662 = vadd.xlane.f32.xlu0 %v3661
    %v3663 = vpop.xlane.xlu0 %3662
    %v3664 = vrcp.pop %v3618
    %v3665 = vrcp.pop %v3621
    %v3666 = vrcp.pop %v3624
    %v3667 = vrcp.pop %v3627
    %v3668 = vrcp.pop %v3630
    %v3669 = vrcp.pop %v3633
    %v3670 = vrcp.pop %v3636
    %v3671 = vrcp.pop %v3639
    %v3672 = vrcp.pop %v3642
    %v3673 = vrcp.pop %v3645
    %v3674 = vrcp.pop %v3648
    %v3675 = vrcp.pop %v3651
    %v3676 = vrcp.pop %v3654
    %v3677 = vrcp.pop %v3657
    %v3678 = vrcp.pop %v3660
    %v3679 = vrcp.pop %v3663
    %v3680 = vmul.f32 %v3585, %v3664
    %v3681 = vmul.f32 %v3587, %v3665
    %v3682 = vmul.f32 %v3589, %v3666
    %v3683 = vmul.f32 %v3591, %v3667
    %v3684 = vmul.f32 %v3593, %v3668
    %v3685 = vmul.f32 %v3595, %v3669
    %v3686 = vmul.f32 %v3597, %v3670
    %v3687 = vmul.f32 %v3599, %v3671
    %v3688 = vmul.f32 %v3601, %v3672
    %v3689 = vmul.f32 %v3603, %v3673
    %v3690 = vmul.f32 %v3605, %v3674
    %v3691 = vmul.f32 %v3607, %v3675
    %v3692 = vmul.f32 %v3609, %v3676
    %v3693 = vmul.f32 %v3611, %v3677
    %v3694 = vmul.f32 %v3613, %v3678
    %v3695 = vmul.f32 %v3615, %v3679
    %3696 = vrot.lane.b32.xlu0 %v2926, 64
    %v3697 = vpop.permute.xlu0 %3696
    %3698 = vrot.lane.b32.xlu0 %v2931, 64
    %v3699 = vpop.permute.xlu0 %3698
    %3700 = vrot.lane.b32.xlu0 %v2936, 64
    %v3701 = vpop.permute.xlu0 %3700
    %3702 = vrot.lane.b32.xlu0 %v2941, 64
    %v3703 = vpop.permute.xlu0 %3702
    %3704 = vrot.lane.b32.xlu0 %v2949, 64
    %v3705 = vpop.permute.xlu0 %3704
    %3706 = vrot.lane.b32.xlu0 %v2951, 64
    %v3707 = vpop.permute.xlu0 %3706
    %3708 = vrot.lane.b32.xlu0 %v2953, 64
    %v3709 = vpop.permute.xlu0 %3708
    %3710 = vrot.lane.b32.xlu0 %v2955, 64
    %v3711 = vpop.permute.xlu0 %3710
    %3712 = vrot.lane.b32.xlu0 %v2957, 64
    %v3713 = vpop.permute.xlu0 %3712
    %3714 = vrot.lane.b32.xlu0 %v2959, 64
    %v3715 = vpop.permute.xlu0 %3714
    %3716 = vrot.lane.b32.xlu0 %v2961, 64
    %v3717 = vpop.permute.xlu0 %3716
    %3718 = vrot.lane.b32.xlu0 %v2963, 64
    %v3719 = vpop.permute.xlu0 %3718
    %3720 = vrot.lane.b32.xlu0 %v2965, 64
    %v3721 = vpop.permute.xlu0 %3720
    %3722 = vrot.lane.b32.xlu0 %v2967, 64
    %v3723 = vpop.permute.xlu0 %3722
    %3724 = vrot.lane.b32.xlu0 %v2969, 64
    %v3725 = vpop.permute.xlu0 %3724
    %3726 = vrot.lane.b32.xlu0 %v2971, 64
    %v3727 = vpop.permute.xlu0 %3726
    %3744 = vxpose.xlu0.b32.start [1/16] %v3697, 128
    %3745 = vxpose.xlu0.b32.cont [2/16] %v3699, 128
    %3746 = vxpose.xlu0.b32.cont [3/16] %v3701, 128
    %3747 = vxpose.xlu0.b32.cont [4/16] %v3703, 128
    %3748 = vxpose.xlu0.b32.cont [5/16] 0.0, 128
    %3749 = vxpose.xlu0.b32.cont [6/16] 0.0, 128
    %3750 = vxpose.xlu0.b32.cont [7/16] 0.0, 128
    %3751 = vxpose.xlu0.b32.cont [8/16] 0.0, 128
    %3752 = vxpose.xlu0.b32.cont [9/16] 0.0, 128
    %3753 = vxpose.xlu0.b32.cont [10/16] 0.0, 128
    %3754 = vxpose.xlu0.b32.cont [11/16] 0.0, 128
    %3755 = vxpose.xlu0.b32.cont [12/16] 0.0, 128
    %3756 = vxpose.xlu0.b32.cont [13/16] 0.0, 128
    %3757 = vxpose.xlu0.b32.cont [14/16] 0.0, 128
    %3758 = vxpose.xlu0.b32.cont [15/16] 0.0, 128
    %3759 = vxpose.xlu0.b32.end [16/16] 0.0, 128
    %v3760 = vpop.trf.xlu0
    %v3761 = vpop.trf.xlu0
    %v3762 = vpop.trf.xlu0
    %v3763 = vpop.trf.xlu0
    %v3764 = vpop.trf.xlu0
    %v3765 = vpop.trf.xlu0
    %v3766 = vpop.trf.xlu0
    %v3767 = vpop.trf.xlu0
    %v3768 = vpop.trf.xlu0
    %v3769 = vpop.trf.xlu0
    %v3770 = vpop.trf.xlu0
    %v3771 = vpop.trf.xlu0
    %v3772 = vpop.trf.xlu0
    %v3773 = vpop.trf.xlu0
    %v3774 = vpop.trf.xlu0
    %v3775 = vpop.trf.xlu0
    %3776 = vxpose.xlu0.b32.start [1/16] %v3705, 128
    %3777 = vxpose.xlu0.b32.cont [2/16] %v3707, 128
    %3778 = vxpose.xlu0.b32.cont [3/16] %v3709, 128
    %3779 = vxpose.xlu0.b32.cont [4/16] %v3711, 128
    %3780 = vxpose.xlu0.b32.cont [5/16] 0.0, 128
    %3781 = vxpose.xlu0.b32.cont [6/16] 0.0, 128
    %3782 = vxpose.xlu0.b32.cont [7/16] 0.0, 128
    %3783 = vxpose.xlu0.b32.cont [8/16] 0.0, 128
    %3784 = vxpose.xlu0.b32.cont [9/16] 0.0, 128
    %3785 = vxpose.xlu0.b32.cont [10/16] 0.0, 128
    %3786 = vxpose.xlu0.b32.cont [11/16] 0.0, 128
    %3787 = vxpose.xlu0.b32.cont [12/16] 0.0, 128
    %3788 = vxpose.xlu0.b32.cont [13/16] 0.0, 128
    %3789 = vxpose.xlu0.b32.cont [14/16] 0.0, 128
    %3790 = vxpose.xlu0.b32.cont [15/16] 0.0, 128
    %3791 = vxpose.xlu0.b32.end [16/16] 0.0, 128
    %v3792 = vpop.trf.xlu0
    %v3793 = vpop.trf.xlu0
    %v3794 = vpop.trf.xlu0
    %v3795 = vpop.trf.xlu0
    %v3796 = vpop.trf.xlu0
    %v3797 = vpop.trf.xlu0
    %v3798 = vpop.trf.xlu0
    %v3799 = vpop.trf.xlu0
    %v3800 = vpop.trf.xlu0
    %v3801 = vpop.trf.xlu0
    %v3802 = vpop.trf.xlu0
    %v3803 = vpop.trf.xlu0
    %v3804 = vpop.trf.xlu0
    %v3805 = vpop.trf.xlu0
    %v3806 = vpop.trf.xlu0
    %v3807 = vpop.trf.xlu0
    %3808 = vxpose.xlu0.b32.start [1/16] %v3713, 128
    %3809 = vxpose.xlu0.b32.cont [2/16] %v3715, 128
    %3810 = vxpose.xlu0.b32.cont [3/16] %v3717, 128
    %3811 = vxpose.xlu0.b32.cont [4/16] %v3719, 128
    %3812 = vxpose.xlu0.b32.cont [5/16] 0.0, 128
    %3813 = vxpose.xlu0.b32.cont [6/16] 0.0, 128
    %3814 = vxpose.xlu0.b32.cont [7/16] 0.0, 128
    %3815 = vxpose.xlu0.b32.cont [8/16] 0.0, 128
    %3816 = vxpose.xlu0.b32.cont [9/16] 0.0, 128
    %3817 = vxpose.xlu0.b32.cont [10/16] 0.0, 128
    %3818 = vxpose.xlu0.b32.cont [11/16] 0.0, 128
    %3819 = vxpose.xlu0.b32.cont [12/16] 0.0, 128
    %3820 = vxpose.xlu0.b32.cont [13/16] 0.0, 128
    %3821 = vxpose.xlu0.b32.cont [14/16] 0.0, 128
    %3822 = vxpose.xlu0.b32.cont [15/16] 0.0, 128
    %3823 = vxpose.xlu0.b32.end [16/16] 0.0, 128
    %v3824 = vpop.trf.xlu0
    %v3825 = vpop.trf.xlu0
    %v3826 = vpop.trf.xlu0
    %v3827 = vpop.trf.xlu0
    %v3828 = vpop.trf.xlu0
    %v3829 = vpop.trf.xlu0
    %v3830 = vpop.trf.xlu0
    %v3831 = vpop.trf.xlu0
    %v3832 = vpop.trf.xlu0
    %v3833 = vpop.trf.xlu0
    %v3834 = vpop.trf.xlu0
    %v3835 = vpop.trf.xlu0
    %v3836 = vpop.trf.xlu0
    %v3837 = vpop.trf.xlu0
    %v3838 = vpop.trf.xlu0
    %v3839 = vpop.trf.xlu0
    %3840 = vxpose.xlu0.b32.start [1/16] %v3721, 128
    %3841 = vxpose.xlu0.b32.cont [2/16] %v3723, 128
    %3842 = vxpose.xlu0.b32.cont [3/16] %v3725, 128
    %3843 = vxpose.xlu0.b32.cont [4/16] %v3727, 128
    %3844 = vxpose.xlu0.b32.cont [5/16] 0.0, 128
    %3845 = vxpose.xlu0.b32.cont [6/16] 0.0, 128
    %3846 = vxpose.xlu0.b32.cont [7/16] 0.0, 128
    %3847 = vxpose.xlu0.b32.cont [8/16] 0.0, 128
    %3848 = vxpose.xlu0.b32.cont [9/16] 0.0, 128
    %3849 = vxpose.xlu0.b32.cont [10/16] 0.0, 128
    %3850 = vxpose.xlu0.b32.cont [11/16] 0.0, 128
    %3851 = vxpose.xlu0.b32.cont [12/16] 0.0, 128
    %3852 = vxpose.xlu0.b32.cont [13/16] 0.0, 128
    %3853 = vxpose.xlu0.b32.cont [14/16] 0.0, 128
    %3854 = vxpose.xlu0.b32.cont [15/16] 0.0, 128
    %3855 = vxpose.xlu0.b32.end [16/16] 0.0, 128
    %v3856 = vpop.trf.xlu0
    %v3857 = vpop.trf.xlu0
    %v3858 = vpop.trf.xlu0
    %v3859 = vpop.trf.xlu0
    %v3860 = vpop.trf.xlu0
    %v3861 = vpop.trf.xlu0
    %v3862 = vpop.trf.xlu0
    %v3863 = vpop.trf.xlu0
    %v3864 = vpop.trf.xlu0
    %v3865 = vpop.trf.xlu0
    %v3866 = vpop.trf.xlu0
    %v3867 = vpop.trf.xlu0
    %v3868 = vpop.trf.xlu0
    %v3869 = vpop.trf.xlu0
    %v3870 = vpop.trf.xlu0
    %v3871 = vpop.trf.xlu0
    %v3873 = vsel %vm194, %v3760, 0
    %v3876 = vsel %vm194, %v3680, 0
    %v3879 = vsel %vm194, %v3681, 0
    %v3882 = vsel %vm194, %v3682, 0
    %v3885 = vsel %vm194, %v3683, 0
    %3887 = vmatprep.subr.mxu0 0.0
    %3888 = vmatpush1.xpose.msra.mxu0 0.0
    %3889 = vmatprep.subr.mxu0 0.0
    %3890 = vmatpush1.xpose.msra.mxu0 0.0
    %3891 = vmatprep.subr.mxu0 0.0
    %3892 = vmatpush1.xpose.msra.mxu0 0.0
    %3893 = vmatprep.subr.mxu0 0.0
    %3894 = vmatpush1.xpose.msra.mxu0 0.0
    %3895 = vmatprep.subr.mxu0 0.0
    %3896 = vmatpush1.xpose.msra.mxu0 0.0
    %3897 = vmatprep.subr.mxu0 0.0
    %3898 = vmatpush1.xpose.msra.mxu0 0.0
    %3899 = vmatprep.subr.mxu0 0.0
    %3900 = vmatpush1.xpose.msra.mxu0 0.0
    %3901 = vmatprep.subr.mxu0 0.0
    %3902 = vmatpush1.xpose.msra.mxu0 0.0
    %3903 = vmatprep.subr.mxu0 0.0
    %3904 = vmatpush1.xpose.msra.mxu0 0.0
    %3905 = vmatprep.subr.mxu0 0.0
    %3906 = vmatpush1.xpose.msra.mxu0 0.0
    %3907 = vmatprep.subr.mxu0 0.0
    %3908 = vmatpush1.xpose.msra.mxu0 0.0
    %3909 = vmatprep.subr.mxu0 0.0
    %3910 = vmatpush1.xpose.msra.mxu0 0.0
    %3911 = vmatprep.subr.mxu0 0.0
    %3912 = vmatpush1.xpose.msra.mxu0 %v3885
    %3913 = vmatprep.subr.mxu0 0.0
    %3914 = vmatpush1.xpose.msra.mxu0 %v3882
    %3915 = vmatprep.subr.mxu0 0.0
    %3916 = vmatpush1.xpose.msra.mxu0 %v3879
    %3917 = vmatprep.subr.mxu0 0.0
    %3918 = vmatpush1.xpose.msra.mxu0 %v3876
    %3919 = vmatprep.subr.mxu0 0.0
    %3920 = vmatpush2.xpose.msra.mxu0 0.0
    %3921 = vmatprep.subr.mxu0 0.0
    %3922 = vmatpush2.xpose.msra.mxu0 0.0
    %3923 = vmatprep.subr.mxu0 0.0
    %3924 = vmatpush2.xpose.msra.mxu0 0.0
    %3925 = vmatprep.subr.mxu0 0.0
    %3926 = vmatpush2.xpose.msra.mxu0 0.0
    %3927 = vmatprep.subr.mxu0 0.0
    %3928 = vmatpush2.xpose.msra.mxu0 0.0
    %3929 = vmatprep.subr.mxu0 0.0
    %3930 = vmatpush2.xpose.msra.mxu0 0.0
    %3931 = vmatprep.subr.mxu0 0.0
    %3932 = vmatpush2.xpose.msra.mxu0 0.0
    %3933 = vmatprep.subr.mxu0 0.0
    %3934 = vmatpush2.xpose.msra.mxu0 0.0
    %3935 = vmatprep.subr.mxu0 0.0
    %3936 = vmatpush2.xpose.msra.mxu0 0.0
    %3937 = vmatprep.subr.mxu0 0.0
    %3938 = vmatpush2.xpose.msra.mxu0 0.0
    %3939 = vmatprep.subr.mxu0 0.0
    %3940 = vmatpush2.xpose.msra.mxu0 0.0
    %3941 = vmatprep.subr.mxu0 0.0
    %3942 = vmatpush2.xpose.msra.mxu0 0.0
    %3943 = vmatprep.subr.mxu0 0.0
    %3944 = vmatpush2.xpose.msra.mxu0 0.0
    %3945 = vmatprep.subr.mxu0 0.0
    %3946 = vmatpush2.xpose.msra.mxu0 0.0
    %3947 = vmatprep.subr.mxu0 0.0
    %3948 = vmatpush2.xpose.msra.mxu0 0.0
    %3949 = vmatprep.subr.mxu0 0.0
    %3950 = vmatpush2.xpose.msra.mxu0 0.0
    %3951 = vmatprep.mubr.f32.mxu0 0.0
    %3952 = vmatmul.mubr.f32.gmra.mxu0 %v3873
    %v3953 = vpop.f32.mrf.mxu0
    %v3954 = vadd.f32 0.0, %v3953
    %v3955 = vpop.f32.mrf.mxu0
    %3956 = vdwg.mxu0
    %v3958 = vsel %vm194, %v3792, 0
    %v3961 = vsel %vm194, %v3684, 0
    %v3964 = vsel %vm194, %v3685, 0
    %v3967 = vsel %vm194, %v3686, 0
    %v3970 = vsel %vm194, %v3687, 0
    %3972 = vmatprep.subr.mxu0 0.0
    %3973 = vmatpush1.xpose.msra.mxu0 0.0
    %3974 = vmatprep.subr.mxu0 0.0
    %3975 = vmatpush1.xpose.msra.mxu0 0.0
    %3976 = vmatprep.subr.mxu0 0.0
    %3977 = vmatpush1.xpose.msra.mxu0 0.0
    %3978 = vmatprep.subr.mxu0 0.0
    %3979 = vmatpush1.xpose.msra.mxu0 0.0
    %3980 = vmatprep.subr.mxu0 0.0
    %3981 = vmatpush1.xpose.msra.mxu0 0.0
    %3982 = vmatprep.subr.mxu0 0.0
    %3983 = vmatpush1.xpose.msra.mxu0 0.0
    %3984 = vmatprep.subr.mxu0 0.0
    %3985 = vmatpush1.xpose.msra.mxu0 0.0
    %3986 = vmatprep.subr.mxu0 0.0
    %3987 = vmatpush1.xpose.msra.mxu0 0.0
    %3988 = vmatprep.subr.mxu0 0.0
    %3989 = vmatpush1.xpose.msra.mxu0 0.0
    %3990 = vmatprep.subr.mxu0 0.0
    %3991 = vmatpush1.xpose.msra.mxu0 0.0
    %3992 = vmatprep.subr.mxu0 0.0
    %3993 = vmatpush1.xpose.msra.mxu0 0.0
    %3994 = vmatprep.subr.mxu0 0.0
    %3995 = vmatpush1.xpose.msra.mxu0 0.0
    %3996 = vmatprep.subr.mxu0 0.0
    %3997 = vmatpush1.xpose.msra.mxu0 %v3970
    %3998 = vmatprep.subr.mxu0 0.0
    %3999 = vmatpush1.xpose.msra.mxu0 %v3967
    %4000 = vmatprep.subr.mxu0 0.0
    %4001 = vmatpush1.xpose.msra.mxu0 %v3964
    %4002 = vmatprep.subr.mxu0 0.0
    %4003 = vmatpush1.xpose.msra.mxu0 %v3961
    %4004 = vmatprep.subr.mxu0 0.0
    %4005 = vmatpush2.xpose.msra.mxu0 0.0
    %4006 = vmatprep.subr.mxu0 0.0
    %4007 = vmatpush2.xpose.msra.mxu0 0.0
    %4008 = vmatprep.subr.mxu0 0.0
    %4009 = vmatpush2.xpose.msra.mxu0 0.0
    %4010 = vmatprep.subr.mxu0 0.0
    %4011 = vmatpush2.xpose.msra.mxu0 0.0
    %4012 = vmatprep.subr.mxu0 0.0
    %4013 = vmatpush2.xpose.msra.mxu0 0.0
    %4014 = vmatprep.subr.mxu0 0.0
    %4015 = vmatpush2.xpose.msra.mxu0 0.0
    %4016 = vmatprep.subr.mxu0 0.0
    %4017 = vmatpush2.xpose.msra.mxu0 0.0
    %4018 = vmatprep.subr.mxu0 0.0
    %4019 = vmatpush2.xpose.msra.mxu0 0.0
    %4020 = vmatprep.subr.mxu0 0.0
    %4021 = vmatpush2.xpose.msra.mxu0 0.0
    %4022 = vmatprep.subr.mxu0 0.0
    %4023 = vmatpush2.xpose.msra.mxu0 0.0
    %4024 = vmatprep.subr.mxu0 0.0
    %4025 = vmatpush2.xpose.msra.mxu0 0.0
    %4026 = vmatprep.subr.mxu0 0.0
    %4027 = vmatpush2.xpose.msra.mxu0 0.0
    %4028 = vmatprep.subr.mxu0 0.0
    %4029 = vmatpush2.xpose.msra.mxu0 0.0
    %4030 = vmatprep.subr.mxu0 0.0
    %4031 = vmatpush2.xpose.msra.mxu0 0.0
    %4032 = vmatprep.subr.mxu0 0.0
    %4033 = vmatpush2.xpose.msra.mxu0 0.0
    %4034 = vmatprep.subr.mxu0 0.0
    %4035 = vmatpush2.xpose.msra.mxu0 0.0
    %4036 = vmatprep.mubr.f32.mxu0 0.0
    %4037 = vmatmul.mubr.f32.gmra.mxu0 %v3958
    %v4038 = vpop.f32.mrf.mxu0
    %v4039 = vadd.f32 0.0, %v4038
    %v4040 = vpop.f32.mrf.mxu0
    %4041 = vdwg.mxu0
    %v4043 = vsel %vm194, %v3824, 0
    %v4046 = vsel %vm194, %v3688, 0
    %v4049 = vsel %vm194, %v3689, 0
    %v4052 = vsel %vm194, %v3690, 0
    %v4055 = vsel %vm194, %v3691, 0
    %4057 = vmatprep.subr.mxu0 0.0
    %4058 = vmatpush1.xpose.msra.mxu0 0.0
    %4059 = vmatprep.subr.mxu0 0.0
    %4060 = vmatpush1.xpose.msra.mxu0 0.0
    %4061 = vmatprep.subr.mxu0 0.0
    %4062 = vmatpush1.xpose.msra.mxu0 0.0
    %4063 = vmatprep.subr.mxu0 0.0
    %4064 = vmatpush1.xpose.msra.mxu0 0.0
    %4065 = vmatprep.subr.mxu0 0.0
    %4066 = vmatpush1.xpose.msra.mxu0 0.0
    %4067 = vmatprep.subr.mxu0 0.0
    %4068 = vmatpush1.xpose.msra.mxu0 0.0
    %4069 = vmatprep.subr.mxu0 0.0
    %4070 = vmatpush1.xpose.msra.mxu0 0.0
    %4071 = vmatprep.subr.mxu0 0.0
    %4072 = vmatpush1.xpose.msra.mxu0 0.0
    %4073 = vmatprep.subr.mxu0 0.0
    %4074 = vmatpush1.xpose.msra.mxu0 0.0
    %4075 = vmatprep.subr.mxu0 0.0
    %4076 = vmatpush1.xpose.msra.mxu0 0.0
    %4077 = vmatprep.subr.mxu0 0.0
    %4078 = vmatpush1.xpose.msra.mxu0 0.0
    %4079 = vmatprep.subr.mxu0 0.0
    %4080 = vmatpush1.xpose.msra.mxu0 0.0
    %4081 = vmatprep.subr.mxu0 0.0
    %4082 = vmatpush1.xpose.msra.mxu0 %v4055
    %4083 = vmatprep.subr.mxu0 0.0
    %4084 = vmatpush1.xpose.msra.mxu0 %v4052
    %4085 = vmatprep.subr.mxu0 0.0
    %4086 = vmatpush1.xpose.msra.mxu0 %v4049
    %4087 = vmatprep.subr.mxu0 0.0
    %4088 = vmatpush1.xpose.msra.mxu0 %v4046
    %4089 = vmatprep.subr.mxu0 0.0
    %4090 = vmatpush2.xpose.msra.mxu0 0.0
    %4091 = vmatprep.subr.mxu0 0.0
    %4092 = vmatpush2.xpose.msra.mxu0 0.0
    %4093 = vmatprep.subr.mxu0 0.0
    %4094 = vmatpush2.xpose.msra.mxu0 0.0
    %4095 = vmatprep.subr.mxu0 0.0
    %4096 = vmatpush2.xpose.msra.mxu0 0.0
    %4097 = vmatprep.subr.mxu0 0.0
    %4098 = vmatpush2.xpose.msra.mxu0 0.0
    %4099 = vmatprep.subr.mxu0 0.0
    %4100 = vmatpush2.xpose.msra.mxu0 0.0
    %4101 = vmatprep.subr.mxu0 0.0
    %4102 = vmatpush2.xpose.msra.mxu0 0.0
    %4103 = vmatprep.subr.mxu0 0.0
    %4104 = vmatpush2.xpose.msra.mxu0 0.0
    %4105 = vmatprep.subr.mxu0 0.0
    %4106 = vmatpush2.xpose.msra.mxu0 0.0
    %4107 = vmatprep.subr.mxu0 0.0
    %4108 = vmatpush2.xpose.msra.mxu0 0.0
    %4109 = vmatprep.subr.mxu0 0.0
    %4110 = vmatpush2.xpose.msra.mxu0 0.0
    %4111 = vmatprep.subr.mxu0 0.0
    %4112 = vmatpush2.xpose.msra.mxu0 0.0
    %4113 = vmatprep.subr.mxu0 0.0
    %4114 = vmatpush2.xpose.msra.mxu0 0.0
    %4115 = vmatprep.subr.mxu0 0.0
    %4116 = vmatpush2.xpose.msra.mxu0 0.0
    %4117 = vmatprep.subr.mxu0 0.0
    %4118 = vmatpush2.xpose.msra.mxu0 0.0
    %4119 = vmatprep.subr.mxu0 0.0
    %4120 = vmatpush2.xpose.msra.mxu0 0.0
    %4121 = vmatprep.mubr.f32.mxu0 0.0
    %4122 = vmatmul.mubr.f32.gmra.mxu0 %v4043
    %v4123 = vpop.f32.mrf.mxu0
    %v4124 = vadd.f32 0.0, %v4123
    %v4125 = vpop.f32.mrf.mxu0
    %4126 = vdwg.mxu0
    %v4128 = vsel %vm194, %v3856, 0
    %v4131 = vsel %vm194, %v3692, 0
    %v4134 = vsel %vm194, %v3693, 0
    %v4137 = vsel %vm194, %v3694, 0
    %v4140 = vsel %vm194, %v3695, 0
    %4142 = vmatprep.subr.mxu0 0.0
    %4143 = vmatpush1.xpose.msra.mxu0 0.0
    %4144 = vmatprep.subr.mxu0 0.0
    %4145 = vmatpush1.xpose.msra.mxu0 0.0
    %4146 = vmatprep.subr.mxu0 0.0
    %4147 = vmatpush1.xpose.msra.mxu0 0.0
    %4148 = vmatprep.subr.mxu0 0.0
    %4149 = vmatpush1.xpose.msra.mxu0 0.0
    %4150 = vmatprep.subr.mxu0 0.0
    %4151 = vmatpush1.xpose.msra.mxu0 0.0
    %4152 = vmatprep.subr.mxu0 0.0
    %4153 = vmatpush1.xpose.msra.mxu0 0.0
    %4154 = vmatprep.subr.mxu0 0.0
    %4155 = vmatpush1.xpose.msra.mxu0 0.0
    %4156 = vmatprep.subr.mxu0 0.0
    %4157 = vmatpush1.xpose.msra.mxu0 0.0
    %4158 = vmatprep.subr.mxu0 0.0
    %4159 = vmatpush1.xpose.msra.mxu0 0.0
    %4160 = vmatprep.subr.mxu0 0.0
    %4161 = vmatpush1.xpose.msra.mxu0 0.0
    %4162 = vmatprep.subr.mxu0 0.0
    %4163 = vmatpush1.xpose.msra.mxu0 0.0
    %4164 = vmatprep.subr.mxu0 0.0
    %4165 = vmatpush1.xpose.msra.mxu0 0.0
    %4166 = vmatprep.subr.mxu0 0.0
    %4167 = vmatpush1.xpose.msra.mxu0 %v4140
    %4168 = vmatprep.subr.mxu0 0.0
    %4169 = vmatpush1.xpose.msra.mxu0 %v4137
    %4170 = vmatprep.subr.mxu0 0.0
    %4171 = vmatpush1.xpose.msra.mxu0 %v4134
    %4172 = vmatprep.subr.mxu0 0.0
    %4173 = vmatpush1.xpose.msra.mxu0 %v4131
    %4174 = vmatprep.subr.mxu0 0.0
    %4175 = vmatpush2.xpose.msra.mxu0 0.0
    %4176 = vmatprep.subr.mxu0 0.0
    %4177 = vmatpush2.xpose.msra.mxu0 0.0
    %4178 = vmatprep.subr.mxu0 0.0
    %4179 = vmatpush2.xpose.msra.mxu0 0.0
    %4180 = vmatprep.subr.mxu0 0.0
    %4181 = vmatpush2.xpose.msra.mxu0 0.0
    %4182 = vmatprep.subr.mxu0 0.0
    %4183 = vmatpush2.xpose.msra.mxu0 0.0
    %4184 = vmatprep.subr.mxu0 0.0
    %4185 = vmatpush2.xpose.msra.mxu0 0.0
    %4186 = vmatprep.subr.mxu0 0.0
    %4187 = vmatpush2.xpose.msra.mxu0 0.0
    %4188 = vmatprep.subr.mxu0 0.0
    %4189 = vmatpush2.xpose.msra.mxu0 0.0
    %4190 = vmatprep.subr.mxu0 0.0
    %4191 = vmatpush2.xpose.msra.mxu0 0.0
    %4192 = vmatprep.subr.mxu0 0.0
    %4193 = vmatpush2.xpose.msra.mxu0 0.0
    %4194 = vmatprep.subr.mxu0 0.0
    %4195 = vmatpush2.xpose.msra.mxu0 0.0
    %4196 = vmatprep.subr.mxu0 0.0
    %4197 = vmatpush2.xpose.msra.mxu0 0.0
    %4198 = vmatprep.subr.mxu0 0.0
    %4199 = vmatpush2.xpose.msra.mxu0 0.0
    %4200 = vmatprep.subr.mxu0 0.0
    %4201 = vmatpush2.xpose.msra.mxu0 0.0
    %4202 = vmatprep.subr.mxu0 0.0
    %4203 = vmatpush2.xpose.msra.mxu0 0.0
    %4204 = vmatprep.subr.mxu0 0.0
    %4205 = vmatpush2.xpose.msra.mxu0 0.0
    %4206 = vmatprep.mubr.f32.mxu0 0.0
    %4207 = vmatmul.mubr.f32.gmra.mxu0 %v4128
    %v4208 = vpop.f32.mrf.mxu0
    %v4209 = vadd.f32 0.0, %v4208
    %v4210 = vpop.f32.mrf.mxu0
    %4211 = vdwg.mxu0
    %4212 = vxpose.xlu0.b32.start [1/16] %v3954, 128
    %4213 = vxpose.xlu0.b32.cont [2/16] 0.0, 128
    %4214 = vxpose.xlu0.b32.cont [3/16] 0.0, 128
    %4215 = vxpose.xlu0.b32.cont [4/16] 0.0, 128
    %4216 = vxpose.xlu0.b32.cont [5/16] 0.0, 128
    %4217 = vxpose.xlu0.b32.cont [6/16] 0.0, 128
    %4218 = vxpose.xlu0.b32.cont [7/16] 0.0, 128
    %4219 = vxpose.xlu0.b32.cont [8/16] 0.0, 128
    %4220 = vxpose.xlu0.b32.cont [9/16] 0.0, 128
    %4221 = vxpose.xlu0.b32.cont [10/16] 0.0, 128
    %4222 = vxpose.xlu0.b32.cont [11/16] 0.0, 128
    %4223 = vxpose.xlu0.b32.cont [12/16] 0.0, 128
    %4224 = vxpose.xlu0.b32.cont [13/16] 0.0, 128
    %4225 = vxpose.xlu0.b32.cont [14/16] 0.0, 128
    %4226 = vxpose.xlu0.b32.cont [15/16] 0.0, 128
    %4227 = vxpose.xlu0.b32.end [16/16] 0.0, 128
    %v4228 = vpop.trf.xlu0
    %v4229 = vpop.trf.xlu0
    %v4230 = vpop.trf.xlu0
    %v4231 = vpop.trf.xlu0
    %v4232 = vpop.trf.xlu0
    %v4233 = vpop.trf.xlu0
    %v4234 = vpop.trf.xlu0
    %v4235 = vpop.trf.xlu0
    %v4236 = vpop.trf.xlu0
    %v4237 = vpop.trf.xlu0
    %v4238 = vpop.trf.xlu0
    %v4239 = vpop.trf.xlu0
    %v4240 = vpop.trf.xlu0
    %v4241 = vpop.trf.xlu0
    %v4242 = vpop.trf.xlu0
    %v4243 = vpop.trf.xlu0
    %4244 = vxpose.xlu0.b32.start [1/16] %v4039, 128
    %4245 = vxpose.xlu0.b32.cont [2/16] 0.0, 128
    %4246 = vxpose.xlu0.b32.cont [3/16] 0.0, 128
    %4247 = vxpose.xlu0.b32.cont [4/16] 0.0, 128
    %4248 = vxpose.xlu0.b32.cont [5/16] 0.0, 128
    %4249 = vxpose.xlu0.b32.cont [6/16] 0.0, 128
    %4250 = vxpose.xlu0.b32.cont [7/16] 0.0, 128
    %4251 = vxpose.xlu0.b32.cont [8/16] 0.0, 128
    %4252 = vxpose.xlu0.b32.cont [9/16] 0.0, 128
    %4253 = vxpose.xlu0.b32.cont [10/16] 0.0, 128
    %4254 = vxpose.xlu0.b32.cont [11/16] 0.0, 128
    %4255 = vxpose.xlu0.b32.cont [12/16] 0.0, 128
    %4256 = vxpose.xlu0.b32.cont [13/16] 0.0, 128
    %4257 = vxpose.xlu0.b32.cont [14/16] 0.0, 128
    %4258 = vxpose.xlu0.b32.cont [15/16] 0.0, 128
    %4259 = vxpose.xlu0.b32.end [16/16] 0.0, 128
    %v4260 = vpop.trf.xlu0
    %v4261 = vpop.trf.xlu0
    %v4262 = vpop.trf.xlu0
    %v4263 = vpop.trf.xlu0
    %v4264 = vpop.trf.xlu0
    %v4265 = vpop.trf.xlu0
    %v4266 = vpop.trf.xlu0
    %v4267 = vpop.trf.xlu0
    %v4268 = vpop.trf.xlu0
    %v4269 = vpop.trf.xlu0
    %v4270 = vpop.trf.xlu0
    %v4271 = vpop.trf.xlu0
    %v4272 = vpop.trf.xlu0
    %v4273 = vpop.trf.xlu0
    %v4274 = vpop.trf.xlu0
    %v4275 = vpop.trf.xlu0
    %4276 = vxpose.xlu0.b32.start [1/16] %v4124, 128
    %4277 = vxpose.xlu0.b32.cont [2/16] 0.0, 128
    %4278 = vxpose.xlu0.b32.cont [3/16] 0.0, 128
    %4279 = vxpose.xlu0.b32.cont [4/16] 0.0, 128
    %4280 = vxpose.xlu0.b32.cont [5/16] 0.0, 128
    %4281 = vxpose.xlu0.b32.cont [6/16] 0.0, 128
    %4282 = vxpose.xlu0.b32.cont [7/16] 0.0, 128
    %4283 = vxpose.xlu0.b32.cont [8/16] 0.0, 128
    %4284 = vxpose.xlu0.b32.cont [9/16] 0.0, 128
    %4285 = vxpose.xlu0.b32.cont [10/16] 0.0, 128
    %4286 = vxpose.xlu0.b32.cont [11/16] 0.0, 128
    %4287 = vxpose.xlu0.b32.cont [12/16] 0.0, 128
    %4288 = vxpose.xlu0.b32.cont [13/16] 0.0, 128
    %4289 = vxpose.xlu0.b32.cont [14/16] 0.0, 128
    %4290 = vxpose.xlu0.b32.cont [15/16] 0.0, 128
    %4291 = vxpose.xlu0.b32.end [16/16] 0.0, 128
    %v4292 = vpop.trf.xlu0
    %v4293 = vpop.trf.xlu0
    %v4294 = vpop.trf.xlu0
    %v4295 = vpop.trf.xlu0
    %v4296 = vpop.trf.xlu0
    %v4297 = vpop.trf.xlu0
    %v4298 = vpop.trf.xlu0
    %v4299 = vpop.trf.xlu0
    %v4300 = vpop.trf.xlu0
    %v4301 = vpop.trf.xlu0
    %v4302 = vpop.trf.xlu0
    %v4303 = vpop.trf.xlu0
    %v4304 = vpop.trf.xlu0
    %v4305 = vpop.trf.xlu0
    %v4306 = vpop.trf.xlu0
    %v4307 = vpop.trf.xlu0
    %4308 = vxpose.xlu0.b32.start [1/16] %v4209, 128
    %4309 = vxpose.xlu0.b32.cont [2/16] 0.0, 128
    %4310 = vxpose.xlu0.b32.cont [3/16] 0.0, 128
    %4311 = vxpose.xlu0.b32.cont [4/16] 0.0, 128
    %4312 = vxpose.xlu0.b32.cont [5/16] 0.0, 128
    %4313 = vxpose.xlu0.b32.cont [6/16] 0.0, 128
    %4314 = vxpose.xlu0.b32.cont [7/16] 0.0, 128
    %4315 = vxpose.xlu0.b32.cont [8/16] 0.0, 128
    %4316 = vxpose.xlu0.b32.cont [9/16] 0.0, 128
    %4317 = vxpose.xlu0.b32.cont [10/16] 0.0, 128
    %4318 = vxpose.xlu0.b32.cont [11/16] 0.0, 128
    %4319 = vxpose.xlu0.b32.cont [12/16] 0.0, 128
    %4320 = vxpose.xlu0.b32.cont [13/16] 0.0, 128
    %4321 = vxpose.xlu0.b32.cont [14/16] 0.0, 128
    %4322 = vxpose.xlu0.b32.cont [15/16] 0.0, 128
    %4323 = vxpose.xlu0.b32.end [16/16] 0.0, 128
    %v4324 = vpop.trf.xlu0
    %v4325 = vpop.trf.xlu0
    %v4326 = vpop.trf.xlu0
    %v4327 = vpop.trf.xlu0
    %v4328 = vpop.trf.xlu0
    %v4329 = vpop.trf.xlu0
    %v4330 = vpop.trf.xlu0
    %v4331 = vpop.trf.xlu0
    %v4332 = vpop.trf.xlu0
    %v4333 = vpop.trf.xlu0
    %v4334 = vpop.trf.xlu0
    %v4335 = vpop.trf.xlu0
    %v4336 = vpop.trf.xlu0
    %v4337 = vpop.trf.xlu0
    %v4338 = vpop.trf.xlu0
    %v4339 = vpop.trf.xlu0
    %v4340 = vcombine.low %v4228, %v4292
    %v4341 = vcombine.high %v4228, %v4292
    %v4343 = vunpack.c.l.s4 1983009808
    %v4344 = vunpack.c.0.s8 %v4343
    %v4345 = vlaneseq
    %v4346 = vshrl.u32 %v4345, 7
    %v4347 = vsub.s32 %v4344, %v4346
    %v4348 = vrot.slane %v4340, %v4347
    %v4350 = vunpack.c.l.s4 1983009808
    %v4351 = vunpack.c.0.s8 %v4350
    %v4352 = vlaneseq
    %v4353 = vshrl.u32 %v4352, 7
    %v4354 = vsub.s32 %v4351, %v4353
    %v4355 = vrot.slane %v4341, %v4354
    %v4356 = vcombine.low %v4260, %v4324
    %v4357 = vcombine.high %v4260, %v4324
    %v4359 = vunpack.c.l.s4 1983009808
    %v4360 = vunpack.c.0.s8 %v4359
    %v4361 = vlaneseq
    %v4362 = vshrl.u32 %v4361, 7
    %v4363 = vsub.s32 %v4360, %v4362
    %v4364 = vrot.slane %v4356, %v4363
    %v4366 = vunpack.c.l.s4 1983009808
    %v4367 = vunpack.c.0.s8 %v4366
    %v4368 = vlaneseq
    %v4369 = vshrl.u32 %v4368, 7
    %v4370 = vsub.s32 %v4367, %v4369
    %v4371 = vrot.slane %v4357, %v4370
    %v4372 = vcombine.low %v4348, %v4364
    %v4373 = vcombine.high %v4348, %v4364
    %v4375 = vunpack.c.l.s4 1934713408
    %v4376 = vunpack.c.0.s8 %v4375
    %v4377 = vlaneseq
    %v4378 = vshrl.u32 %v4377, 7
    %v4379 = vsub.s32 %v4376, %v4378
    %v4380 = vrot.slane %v4372, %v4379
    %v4382 = vunpack.c.l.s4 1934713408
    %v4383 = vunpack.c.0.s8 %v4382
    %v4384 = vlaneseq
    %v4385 = vshrl.u32 %v4384, 7
    %v4386 = vsub.s32 %v4383, %v4385
    %v4387 = vrot.slane %v4373, %v4386
    %v4388 = vcombine.low %v4355, %v4371
    %v4389 = vcombine.high %v4355, %v4371
    %v4391 = vunpack.c.l.s4 1934713408
    %v4392 = vunpack.c.0.s8 %v4391
    %v4393 = vlaneseq
    %v4394 = vshrl.u32 %v4393, 7
    %v4395 = vsub.s32 %v4392, %v4394
    %v4396 = vrot.slane %v4388, %v4395
    %v4398 = vunpack.c.l.s4 1934713408
    %v4399 = vunpack.c.0.s8 %v4398
    %v4400 = vlaneseq
    %v4401 = vshrl.u32 %v4400, 7
    %v4402 = vsub.s32 %v4399, %v4401
    %v4403 = vrot.slane %v4389, %v4402
    %v4404 = vcombine.high %v4380, 0.0
    %v4405 = vcombine.high %v4387, 0.0
    %v4406 = vcombine.high %v4396, 0.0
    %v4407 = vcombine.high %v4403, 0.0
    %v4408 = vcombine.low %v4229, %v4293
    %v4409 = vcombine.high %v4229, %v4293
    %v4411 = vunpack.c.l.s4 1983009808
    %v4412 = vunpack.c.0.s8 %v4411
    %v4413 = vlaneseq
    %v4414 = vshrl.u32 %v4413, 7
    %v4415 = vsub.s32 %v4412, %v4414
    %v4416 = vrot.slane %v4408, %v4415
    %v4418 = vunpack.c.l.s4 1983009808
    %v4419 = vunpack.c.0.s8 %v4418
    %v4420 = vlaneseq
    %v4421 = vshrl.u32 %v4420, 7
    %v4422 = vsub.s32 %v4419, %v4421
    %v4423 = vrot.slane %v4409, %v4422
    %v4424 = vcombine.low %v4261, %v4325
    %v4425 = vcombine.high %v4261, %v4325
    %v4427 = vunpack.c.l.s4 1983009808
    %v4428 = vunpack.c.0.s8 %v4427
    %v4429 = vlaneseq
    %v4430 = vshrl.u32 %v4429, 7
    %v4431 = vsub.s32 %v4428, %v4430
    %v4432 = vrot.slane %v4424, %v4431
    %v4434 = vunpack.c.l.s4 1983009808
    %v4435 = vunpack.c.0.s8 %v4434
    %v4436 = vlaneseq
    %v4437 = vshrl.u32 %v4436, 7
    %v4438 = vsub.s32 %v4435, %v4437
    %v4439 = vrot.slane %v4425, %v4438
    %v4440 = vcombine.low %v4416, %v4432
    %v4441 = vcombine.high %v4416, %v4432
    %v4443 = vunpack.c.l.s4 1934713408
    %v4444 = vunpack.c.0.s8 %v4443
    %v4445 = vlaneseq
    %v4446 = vshrl.u32 %v4445, 7
    %v4447 = vsub.s32 %v4444, %v4446
    %v4448 = vrot.slane %v4440, %v4447
    %v4450 = vunpack.c.l.s4 1934713408
    %v4451 = vunpack.c.0.s8 %v4450
    %v4452 = vlaneseq
    %v4453 = vshrl.u32 %v4452, 7
    %v4454 = vsub.s32 %v4451, %v4453
    %v4455 = vrot.slane %v4441, %v4454
    %v4456 = vcombine.low %v4423, %v4439
    %v4457 = vcombine.high %v4423, %v4439
    %v4459 = vunpack.c.l.s4 1934713408
    %v4460 = vunpack.c.0.s8 %v4459
    %v4461 = vlaneseq
    %v4462 = vshrl.u32 %v4461, 7
    %v4463 = vsub.s32 %v4460, %v4462
    %v4464 = vrot.slane %v4456, %v4463
    %v4466 = vunpack.c.l.s4 1934713408
    %v4467 = vunpack.c.0.s8 %v4466
    %v4468 = vlaneseq
    %v4469 = vshrl.u32 %v4468, 7
    %v4470 = vsub.s32 %v4467, %v4469
    %v4471 = vrot.slane %v4457, %v4470
    %v4472 = vcombine.high %v4448, 0.0
    %v4473 = vcombine.high %v4455, 0.0
    %v4474 = vcombine.high %v4464, 0.0
    %v4475 = vcombine.high %v4471, 0.0
    %v4476 = vcombine.low %v4230, %v4294
    %v4477 = vcombine.high %v4230, %v4294
    %v4479 = vunpack.c.l.s4 1983009808
    %v4480 = vunpack.c.0.s8 %v4479
    %v4481 = vlaneseq
    %v4482 = vshrl.u32 %v4481, 7
    %v4483 = vsub.s32 %v4480, %v4482
    %v4484 = vrot.slane %v4476, %v4483
    %v4486 = vunpack.c.l.s4 1983009808
    %v4487 = vunpack.c.0.s8 %v4486
    %v4488 = vlaneseq
    %v4489 = vshrl.u32 %v4488, 7
    %v4490 = vsub.s32 %v4487, %v4489
    %v4491 = vrot.slane %v4477, %v4490
    %v4492 = vcombine.low %v4262, %v4326
    %v4493 = vcombine.high %v4262, %v4326
    %v4495 = vunpack.c.l.s4 1983009808
    %v4496 = vunpack.c.0.s8 %v4495
    %v4497 = vlaneseq
    %v4498 = vshrl.u32 %v4497, 7
    %v4499 = vsub.s32 %v4496, %v4498
    %v4500 = vrot.slane %v4492, %v4499
    %v4502 = vunpack.c.l.s4 1983009808
    %v4503 = vunpack.c.0.s8 %v4502
    %v4504 = vlaneseq
    %v4505 = vshrl.u32 %v4504, 7
    %v4506 = vsub.s32 %v4503, %v4505
    %v4507 = vrot.slane %v4493, %v4506
    %v4508 = vcombine.low %v4484, %v4500
    %v4509 = vcombine.high %v4484, %v4500
    %v4511 = vunpack.c.l.s4 1934713408
    %v4512 = vunpack.c.0.s8 %v4511
    %v4513 = vlaneseq
    %v4514 = vshrl.u32 %v4513, 7
    %v4515 = vsub.s32 %v4512, %v4514
    %v4516 = vrot.slane %v4508, %v4515
    %v4518 = vunpack.c.l.s4 1934713408
    %v4519 = vunpack.c.0.s8 %v4518
    %v4520 = vlaneseq
    %v4521 = vshrl.u32 %v4520, 7
    %v4522 = vsub.s32 %v4519, %v4521
    %v4523 = vrot.slane %v4509, %v4522
    %v4524 = vcombine.low %v4491, %v4507
    %v4525 = vcombine.high %v4491, %v4507
    %v4527 = vunpack.c.l.s4 1934713408
    %v4528 = vunpack.c.0.s8 %v4527
    %v4529 = vlaneseq
    %v4530 = vshrl.u32 %v4529, 7
    %v4531 = vsub.s32 %v4528, %v4530
    %v4532 = vrot.slane %v4524, %v4531
    %v4534 = vunpack.c.l.s4 1934713408
    %v4535 = vunpack.c.0.s8 %v4534
    %v4536 = vlaneseq
    %v4537 = vshrl.u32 %v4536, 7
    %v4538 = vsub.s32 %v4535, %v4537
    %v4539 = vrot.slane %v4525, %v4538
    %v4540 = vcombine.high %v4516, 0.0
    %v4541 = vcombine.high %v4523, 0.0
    %v4542 = vcombine.high %v4532, 0.0
    %v4543 = vcombine.high %v4539, 0.0
    %v4544 = vcombine.low %v4231, %v4295
    %v4545 = vcombine.high %v4231, %v4295
    %v4547 = vunpack.c.l.s4 1983009808
    %v4548 = vunpack.c.0.s8 %v4547
    %v4549 = vlaneseq
    %v4550 = vshrl.u32 %v4549, 7
    %v4551 = vsub.s32 %v4548, %v4550
    %v4552 = vrot.slane %v4544, %v4551
    %v4554 = vunpack.c.l.s4 1983009808
    %v4555 = vunpack.c.0.s8 %v4554
    %v4556 = vlaneseq
    %v4557 = vshrl.u32 %v4556, 7
    %v4558 = vsub.s32 %v4555, %v4557
    %v4559 = vrot.slane %v4545, %v4558
    %v4560 = vcombine.low %v4263, %v4327
    %v4561 = vcombine.high %v4263, %v4327
    %v4563 = vunpack.c.l.s4 1983009808
    %v4564 = vunpack.c.0.s8 %v4563
    %v4565 = vlaneseq
    %v4566 = vshrl.u32 %v4565, 7
    %v4567 = vsub.s32 %v4564, %v4566
    %v4568 = vrot.slane %v4560, %v4567
    %v4570 = vunpack.c.l.s4 1983009808
    %v4571 = vunpack.c.0.s8 %v4570
    %v4572 = vlaneseq
    %v4573 = vshrl.u32 %v4572, 7
    %v4574 = vsub.s32 %v4571, %v4573
    %v4575 = vrot.slane %v4561, %v4574
    %v4576 = vcombine.low %v4552, %v4568
    %v4577 = vcombine.high %v4552, %v4568
    %v4579 = vunpack.c.l.s4 1934713408
    %v4580 = vunpack.c.0.s8 %v4579
    %v4581 = vlaneseq
    %v4582 = vshrl.u32 %v4581, 7
    %v4583 = vsub.s32 %v4580, %v4582
    %v4584 = vrot.slane %v4576, %v4583
    %v4586 = vunpack.c.l.s4 1934713408
    %v4587 = vunpack.c.0.s8 %v4586
    %v4588 = vlaneseq
    %v4589 = vshrl.u32 %v4588, 7
    %v4590 = vsub.s32 %v4587, %v4589
    %v4591 = vrot.slane %v4577, %v4590
    %v4592 = vcombine.low %v4559, %v4575
    %v4593 = vcombine.high %v4559, %v4575
    %v4595 = vunpack.c.l.s4 1934713408
    %v4596 = vunpack.c.0.s8 %v4595
    %v4597 = vlaneseq
    %v4598 = vshrl.u32 %v4597, 7
    %v4599 = vsub.s32 %v4596, %v4598
    %v4600 = vrot.slane %v4592, %v4599
    %v4602 = vunpack.c.l.s4 1934713408
    %v4603 = vunpack.c.0.s8 %v4602
    %v4604 = vlaneseq
    %v4605 = vshrl.u32 %v4604, 7
    %v4606 = vsub.s32 %v4603, %v4605
    %v4607 = vrot.slane %v4593, %v4606
    %v4608 = vcombine.high %v4584, 0.0
    %v4609 = vcombine.high %v4591, 0.0
    %v4610 = vcombine.high %v4600, 0.0
    %v4611 = vcombine.high %v4607, 0.0
    %v4612 = vcombine.low %v4380, %v4387
    %v4614 = vunpack.c.l.s4 1983009808
    %v4615 = vunpack.c.0.s8 %v4614
    %v4616 = vlaneseq
    %v4617 = vshrl.u32 %v4616, 7
    %v4618 = vsub.s32 %v4615, %v4617
    %v4619 = vrot.slane %v4612, %v4618
    %v4620 = vcombine.low %v4404, %v4405
    %v4622 = vunpack.c.l.s4 1983009808
    %v4623 = vunpack.c.0.s8 %v4622
    %v4624 = vlaneseq
    %v4625 = vshrl.u32 %v4624, 7
    %v4626 = vsub.s32 %v4623, %v4625
    %v4627 = vrot.slane %v4620, %v4626
    %v4628 = vcombine.low %v4396, %v4403
    %v4630 = vunpack.c.l.s4 1983009808
    %v4631 = vunpack.c.0.s8 %v4630
    %v4632 = vlaneseq
    %v4633 = vshrl.u32 %v4632, 7
    %v4634 = vsub.s32 %v4631, %v4633
    %v4635 = vrot.slane %v4628, %v4634
    %v4636 = vcombine.low %v4406, %v4407
    %v4638 = vunpack.c.l.s4 1983009808
    %v4639 = vunpack.c.0.s8 %v4638
    %v4640 = vlaneseq
    %v4641 = vshrl.u32 %v4640, 7
    %v4642 = vsub.s32 %v4639, %v4641
    %v4643 = vrot.slane %v4636, %v4642
    %v4644 = vcombine.low %v4619, %v4627
    %v4645 = vcombine.high %v4619, %v4627
    %v4647 = vunpack.c.l.s4 1934713408
    %v4648 = vunpack.c.0.s8 %v4647
    %v4649 = vlaneseq
    %v4650 = vshrl.u32 %v4649, 7
    %v4651 = vsub.s32 %v4648, %v4650
    %v4652 = vrot.slane %v4644, %v4651
    %v4654 = vunpack.c.l.s4 1934713408
    %v4655 = vunpack.c.0.s8 %v4654
    %v4656 = vlaneseq
    %v4657 = vshrl.u32 %v4656, 7
    %v4658 = vsub.s32 %v4655, %v4657
    %v4659 = vrot.slane %v4645, %v4658
    %v4660 = vcombine.low %v4635, %v4643
    %v4661 = vcombine.high %v4635, %v4643
    %v4663 = vunpack.c.l.s4 1934713408
    %v4664 = vunpack.c.0.s8 %v4663
    %v4665 = vlaneseq
    %v4666 = vshrl.u32 %v4665, 7
    %v4667 = vsub.s32 %v4664, %v4666
    %v4668 = vrot.slane %v4660, %v4667
    %v4670 = vunpack.c.l.s4 1934713408
    %v4671 = vunpack.c.0.s8 %v4670
    %v4672 = vlaneseq
    %v4673 = vshrl.u32 %v4672, 7
    %v4674 = vsub.s32 %v4671, %v4673
    %v4675 = vrot.slane %v4661, %v4674
    %v4676 = vcombine.low %v4652, %v4668
    %v4677 = vcombine.high %v4652, %v4668
    %v4678 = vcombine.low %v4659, %v4675
    %v4679 = vcombine.high %v4659, %v4675
    %v4680 = vcombine.low %v4448, %v4455
    %v4682 = vunpack.c.l.s4 1983009808
    %v4683 = vunpack.c.0.s8 %v4682
    %v4684 = vlaneseq
    %v4685 = vshrl.u32 %v4684, 7
    %v4686 = vsub.s32 %v4683, %v4685
    %v4687 = vrot.slane %v4680, %v4686
    %v4688 = vcombine.low %v4472, %v4473
    %v4690 = vunpack.c.l.s4 1983009808
    %v4691 = vunpack.c.0.s8 %v4690
    %v4692 = vlaneseq
    %v4693 = vshrl.u32 %v4692, 7
    %v4694 = vsub.s32 %v4691, %v4693
    %v4695 = vrot.slane %v4688, %v4694
    %v4696 = vcombine.low %v4464, %v4471
    %v4698 = vunpack.c.l.s4 1983009808
    %v4699 = vunpack.c.0.s8 %v4698
    %v4700 = vlaneseq
    %v4701 = vshrl.u32 %v4700, 7
    %v4702 = vsub.s32 %v4699, %v4701
    %v4703 = vrot.slane %v4696, %v4702
    %v4704 = vcombine.low %v4474, %v4475
    %v4706 = vunpack.c.l.s4 1983009808
    %v4707 = vunpack.c.0.s8 %v4706
    %v4708 = vlaneseq
    %v4709 = vshrl.u32 %v4708, 7
    %v4710 = vsub.s32 %v4707, %v4709
    %v4711 = vrot.slane %v4704, %v4710
    %v4712 = vcombine.low %v4687, %v4695
    %v4713 = vcombine.high %v4687, %v4695
    %v4715 = vunpack.c.l.s4 1934713408
    %v4716 = vunpack.c.0.s8 %v4715
    %v4717 = vlaneseq
    %v4718 = vshrl.u32 %v4717, 7
    %v4719 = vsub.s32 %v4716, %v4718
    %v4720 = vrot.slane %v4712, %v4719
    %v4722 = vunpack.c.l.s4 1934713408
    %v4723 = vunpack.c.0.s8 %v4722
    %v4724 = vlaneseq
    %v4725 = vshrl.u32 %v4724, 7
    %v4726 = vsub.s32 %v4723, %v4725
    %v4727 = vrot.slane %v4713, %v4726
    %v4728 = vcombine.low %v4703, %v4711
    %v4729 = vcombine.high %v4703, %v4711
    %v4731 = vunpack.c.l.s4 1934713408
    %v4732 = vunpack.c.0.s8 %v4731
    %v4733 = vlaneseq
    %v4734 = vshrl.u32 %v4733, 7
    %v4735 = vsub.s32 %v4732, %v4734
    %v4736 = vrot.slane %v4728, %v4735
    %v4738 = vunpack.c.l.s4 1934713408
    %v4739 = vunpack.c.0.s8 %v4738
    %v4740 = vlaneseq
    %v4741 = vshrl.u32 %v4740, 7
    %v4742 = vsub.s32 %v4739, %v4741
    %v4743 = vrot.slane %v4729, %v4742
    %v4744 = vcombine.low %v4720, %v4736
    %v4745 = vcombine.high %v4720, %v4736
    %v4746 = vcombine.low %v4727, %v4743
    %v4747 = vcombine.high %v4727, %v4743
    %v4748 = vcombine.low %v4516, %v4523
    %v4750 = vunpack.c.l.s4 1983009808
    %v4751 = vunpack.c.0.s8 %v4750
    %v4752 = vlaneseq
    %v4753 = vshrl.u32 %v4752, 7
    %v4754 = vsub.s32 %v4751, %v4753
    %v4755 = vrot.slane %v4748, %v4754
    %v4756 = vcombine.low %v4540, %v4541
    %v4758 = vunpack.c.l.s4 1983009808
    %v4759 = vunpack.c.0.s8 %v4758
    %v4760 = vlaneseq
    %v4761 = vshrl.u32 %v4760, 7
    %v4762 = vsub.s32 %v4759, %v4761
    %v4763 = vrot.slane %v4756, %v4762
    %v4764 = vcombine.low %v4532, %v4539
    %v4766 = vunpack.c.l.s4 1983009808
    %v4767 = vunpack.c.0.s8 %v4766
    %v4768 = vlaneseq
    %v4769 = vshrl.u32 %v4768, 7
    %v4770 = vsub.s32 %v4767, %v4769
    %v4771 = vrot.slane %v4764, %v4770
    %v4772 = vcombine.low %v4542, %v4543
    %v4774 = vunpack.c.l.s4 1983009808
    %v4775 = vunpack.c.0.s8 %v4774
    %v4776 = vlaneseq
    %v4777 = vshrl.u32 %v4776, 7
    %v4778 = vsub.s32 %v4775, %v4777
    %v4779 = vrot.slane %v4772, %v4778
    %v4780 = vcombine.low %v4755, %v4763
    %v4781 = vcombine.high %v4755, %v4763
    %v4783 = vunpack.c.l.s4 1934713408
    %v4784 = vunpack.c.0.s8 %v4783
    %v4785 = vlaneseq
    %v4786 = vshrl.u32 %v4785, 7
    %v4787 = vsub.s32 %v4784, %v4786
    %v4788 = vrot.slane %v4780, %v4787
    %v4790 = vunpack.c.l.s4 1934713408
    %v4791 = vunpack.c.0.s8 %v4790
    %v4792 = vlaneseq
    %v4793 = vshrl.u32 %v4792, 7
    %v4794 = vsub.s32 %v4791, %v4793
    %v4795 = vrot.slane %v4781, %v4794
    %v4796 = vcombine.low %v4771, %v4779
    %v4797 = vcombine.high %v4771, %v4779
    %v4799 = vunpack.c.l.s4 1934713408
    %v4800 = vunpack.c.0.s8 %v4799
    %v4801 = vlaneseq
    %v4802 = vshrl.u32 %v4801, 7
    %v4803 = vsub.s32 %v4800, %v4802
    %v4804 = vrot.slane %v4796, %v4803
    %v4806 = vunpack.c.l.s4 1934713408
    %v4807 = vunpack.c.0.s8 %v4806
    %v4808 = vlaneseq
    %v4809 = vshrl.u32 %v4808, 7
    %v4810 = vsub.s32 %v4807, %v4809
    %v4811 = vrot.slane %v4797, %v4810
    %v4812 = vcombine.low %v4788, %v4804
    %v4813 = vcombine.high %v4788, %v4804
    %v4814 = vcombine.low %v4795, %v4811
    %v4815 = vcombine.high %v4795, %v4811
    %v4816 = vcombine.low %v4584, %v4591
    %v4818 = vunpack.c.l.s4 1983009808
    %v4819 = vunpack.c.0.s8 %v4818
    %v4820 = vlaneseq
    %v4821 = vshrl.u32 %v4820, 7
    %v4822 = vsub.s32 %v4819, %v4821
    %v4823 = vrot.slane %v4816, %v4822
    %v4824 = vcombine.low %v4608, %v4609
    %v4826 = vunpack.c.l.s4 1983009808
    %v4827 = vunpack.c.0.s8 %v4826
    %v4828 = vlaneseq
    %v4829 = vshrl.u32 %v4828, 7
    %v4830 = vsub.s32 %v4827, %v4829
    %v4831 = vrot.slane %v4824, %v4830
    %v4832 = vcombine.low %v4600, %v4607
    %v4834 = vunpack.c.l.s4 1983009808
    %v4835 = vunpack.c.0.s8 %v4834
    %v4836 = vlaneseq
    %v4837 = vshrl.u32 %v4836, 7
    %v4838 = vsub.s32 %v4835, %v4837
    %v4839 = vrot.slane %v4832, %v4838
    %v4840 = vcombine.low %v4610, %v4611
    %v4842 = vunpack.c.l.s4 1983009808
    %v4843 = vunpack.c.0.s8 %v4842
    %v4844 = vlaneseq
    %v4845 = vshrl.u32 %v4844, 7
    %v4846 = vsub.s32 %v4843, %v4845
    %v4847 = vrot.slane %v4840, %v4846
    %v4848 = vcombine.low %v4823, %v4831
    %v4849 = vcombine.high %v4823, %v4831
    %v4851 = vunpack.c.l.s4 1934713408
    %v4852 = vunpack.c.0.s8 %v4851
    %v4853 = vlaneseq
    %v4854 = vshrl.u32 %v4853, 7
    %v4855 = vsub.s32 %v4852, %v4854
    %v4856 = vrot.slane %v4848, %v4855
    %v4858 = vunpack.c.l.s4 1934713408
    %v4859 = vunpack.c.0.s8 %v4858
    %v4860 = vlaneseq
    %v4861 = vshrl.u32 %v4860, 7
    %v4862 = vsub.s32 %v4859, %v4861
    %v4863 = vrot.slane %v4849, %v4862
    %v4864 = vcombine.low %v4839, %v4847
    %v4865 = vcombine.high %v4839, %v4847
    %v4867 = vunpack.c.l.s4 1934713408
    %v4868 = vunpack.c.0.s8 %v4867
    %v4869 = vlaneseq
    %v4870 = vshrl.u32 %v4869, 7
    %v4871 = vsub.s32 %v4868, %v4870
    %v4872 = vrot.slane %v4864, %v4871
    %v4874 = vunpack.c.l.s4 1934713408
    %v4875 = vunpack.c.0.s8 %v4874
    %v4876 = vlaneseq
    %v4877 = vshrl.u32 %v4876, 7
    %v4878 = vsub.s32 %v4875, %v4877
    %v4879 = vrot.slane %v4865, %v4878
    %v4880 = vcombine.low %v4856, %v4872
    %v4881 = vcombine.high %v4856, %v4872
    %v4882 = vcombine.low %v4863, %v4879
    %v4883 = vcombine.high %v4863, %v4879
    %4888 = vrot.lane.b32.xlu0 %v4677, 8
    %v4889 = vpop.permute.xlu0 %4888
    %4890 = vrot.lane.b32.xlu0 %v4745, 8
    %v4891 = vpop.permute.xlu0 %4890
    %4892 = vrot.lane.b32.xlu0 %v4813, 8
    %v4893 = vpop.permute.xlu0 %4892
    %4894 = vrot.lane.b32.xlu0 %v4881, 8
    %v4895 = vpop.permute.xlu0 %4894
    %4904 = vrot.lane.b32.xlu0 %v4678, 16
    %v4905 = vpop.permute.xlu0 %4904
    %4906 = vrot.lane.b32.xlu0 %v4746, 16
    %v4907 = vpop.permute.xlu0 %4906
    %4908 = vrot.lane.b32.xlu0 %v4814, 16
    %v4909 = vpop.permute.xlu0 %4908
    %4910 = vrot.lane.b32.xlu0 %v4882, 16
    %v4911 = vpop.permute.xlu0 %4910
    %4920 = vrot.lane.b32.xlu0 %v4679, 24
    %v4921 = vpop.permute.xlu0 %4920
    %4922 = vrot.lane.b32.xlu0 %v4747, 24
    %v4923 = vpop.permute.xlu0 %4922
    %4924 = vrot.lane.b32.xlu0 %v4815, 24
    %v4925 = vpop.permute.xlu0 %4924
    %4926 = vrot.lane.b32.xlu0 %v4883, 24
    %v4927 = vpop.permute.xlu0 %4926
    %v4932 = vsel %vm569, %v4676, %v4889
    %v4933 = vsel %vm569, %v4744, %v4891
    %v4934 = vsel %vm569, %v4812, %v4893
    %v4935 = vsel %vm569, %v4880, %v4895
    %v4936 = vsel %vm2358, %v4932, %v4905
    %v4937 = vsel %vm2358, %v4933, %v4907
    %v4938 = vsel %vm2358, %v4934, %v4909
    %v4939 = vsel %vm2358, %v4935, %v4911
    %v4940 = vsel %vm2363, %v4936, %v4921
    %v4941 = vsel %vm2363, %v4937, %v4923
    %v4942 = vsel %vm2363, %v4938, %v4925
    %v4943 = vsel %vm2363, %v4939, %v4927
    %s4944 = scalar_lea.vmem %s4, 32
    %v4945 = vld [vmem:[%s4944] sm:$0xff]
    %v4946 = vld [vmem:[%s4944 + $0x8] sm:$0xff]
    %v4947 = vld [vmem:[%s4944 + $0x10] sm:$0xff]
    %v4948 = vld [vmem:[%s4944 + $0x18] sm:$0xff]
    %v4949 = vld [vmem:[%s8 + $0x9] sm:$0x1]
    %v4950 = vlaneseq
    %v4951 = vshrl.u32 %v4950, 7
    %v4952 = vsub.s32 0, %v4951
    %v4953 = vrot.slane %v4949, %v4952
    %v4955 = vsel %vm194, %v4940, 0
    %v4958 = vsel %vm194, %v4941, 0
    %v4961 = vsel %vm194, %v4942, 0
    %v4964 = vsel %vm194, %v4943, 0
    %4966 = vmatprep.subr.mxu0 0.0
    %4967 = vmatpush1.msra.mxu0 0.0
    %4968 = vmatprep.subr.mxu0 0.0
    %4969 = vmatpush1.msra.mxu0 0.0
    %4970 = vmatprep.subr.mxu0 0.0
    %4971 = vmatpush1.msra.mxu0 0.0
    %4972 = vmatprep.subr.mxu0 0.0
    %4973 = vmatpush1.msra.mxu0 0.0
    %4974 = vmatprep.subr.mxu0 0.0
    %4975 = vmatpush1.msra.mxu0 0.0
    %4976 = vmatprep.subr.mxu0 0.0
    %4977 = vmatpush1.msra.mxu0 0.0
    %4978 = vmatprep.subr.mxu0 0.0
    %4979 = vmatpush1.msra.mxu0 0.0
    %4980 = vmatprep.subr.mxu0 0.0
    %4981 = vmatpush1.msra.mxu0 0.0
    %4982 = vmatprep.subr.mxu0 0.0
    %4983 = vmatpush1.msra.mxu0 0.0
    %4984 = vmatprep.subr.mxu0 0.0
    %4985 = vmatpush1.msra.mxu0 0.0
    %4986 = vmatprep.subr.mxu0 0.0
    %4987 = vmatpush1.msra.mxu0 0.0
    %4988 = vmatprep.subr.mxu0 0.0
    %4989 = vmatpush1.msra.mxu0 0.0
    %4990 = vmatprep.subr.mxu0 0.0
    %4991 = vmatpush1.msra.mxu0 %v4948
    %4992 = vmatprep.subr.mxu0 0.0
    %4993 = vmatpush1.msra.mxu0 %v4947
    %4994 = vmatprep.subr.mxu0 0.0
    %4995 = vmatpush1.msra.mxu0 %v4946
    %4996 = vmatprep.subr.mxu0 0.0
    %4997 = vmatpush1.msra.mxu0 %v4945
    %4998 = vmatprep.subr.mxu0 0.0
    %4999 = vmatpush2.msra.mxu0 0.0
    %5000 = vmatprep.subr.mxu0 0.0
    %5001 = vmatpush2.msra.mxu0 0.0
    %5002 = vmatprep.subr.mxu0 0.0
    %5003 = vmatpush2.msra.mxu0 0.0
    %5004 = vmatprep.subr.mxu0 0.0
    %5005 = vmatpush2.msra.mxu0 0.0
    %5006 = vmatprep.subr.mxu0 0.0
    %5007 = vmatpush2.msra.mxu0 0.0
    %5008 = vmatprep.subr.mxu0 0.0
    %5009 = vmatpush2.msra.mxu0 0.0
    %5010 = vmatprep.subr.mxu0 0.0
    %5011 = vmatpush2.msra.mxu0 0.0
    %5012 = vmatprep.subr.mxu0 0.0
    %5013 = vmatpush2.msra.mxu0 0.0
    %5014 = vmatprep.subr.mxu0 0.0
    %5015 = vmatpush2.msra.mxu0 0.0
    %5016 = vmatprep.subr.mxu0 0.0
    %5017 = vmatpush2.msra.mxu0 0.0
    %5018 = vmatprep.subr.mxu0 0.0
    %5019 = vmatpush2.msra.mxu0 0.0
    %5020 = vmatprep.subr.mxu0 0.0
    %5021 = vmatpush2.msra.mxu0 0.0
    %5022 = vmatprep.subr.mxu0 0.0
    %5023 = vmatpush2.msra.mxu0 0.0
    %5024 = vmatprep.subr.mxu0 0.0
    %5025 = vmatpush2.msra.mxu0 0.0
    %5026 = vmatprep.subr.mxu0 0.0
    %5027 = vmatpush2.msra.mxu0 0.0
    %5028 = vmatprep.subr.mxu0 0.0
    %5029 = vmatpush2.msra.mxu0 0.0
    %5030 = vmatprep.mubr.f32.mxu0 0.0
    %5031 = vmatmul.mubr.f32.gmra.mxu0 %v4955
    %v5032 = vpop.f32.mrf.mxu0
    %v5033 = vadd.f32 %v4953, %v5032
    %v5034 = vpop.f32.mrf.mxu0
    %5035 = vmatprep.mubr.f32.mxu0 0.0
    %5036 = vmatmul.mubr.f32.gmra.mxu0 %v4958
    %v5037 = vpop.f32.mrf.mxu0
    %v5038 = vadd.f32 %v4953, %v5037
    %v5039 = vpop.f32.mrf.mxu0
    %5040 = vmatprep.mubr.f32.mxu0 0.0
    %5041 = vmatmul.mubr.f32.gmra.mxu0 %v4961
    %v5042 = vpop.f32.mrf.mxu0
    %v5043 = vadd.f32 %v4953, %v5042
    %v5044 = vpop.f32.mrf.mxu0
    %5045 = vmatprep.mubr.f32.mxu0 0.0
    %5046 = vmatmul.mubr.f32.gmra.mxu0 %v4964
    %v5047 = vpop.f32.mrf.mxu0
    %v5048 = vadd.f32 %v4953, %v5047
    %v5049 = vpop.f32.mrf.mxu0
    %5050 = vdwg.mxu0
    %v5051 = vadd.f32 %v2768, %v5033
    %v5052 = vadd.f32 %v2769, %v5038
    %v5053 = vadd.f32 %v2770, %v5043
    %v5054 = vadd.f32 %v2771, %v5048
    %v5055 = vld [vmem:[%s8 + $0xa] sm:$0x1]
    %v5056 = vld [vmem:[%s8 + $0xb] sm:$0x1]
    %v5057 = vsel %vm194, %v5051, 0.0
    %5058 = vadd.xlane.f32.xlu0 %v5057
    %v5059 = vpop.xlane.xlu0 %5058
    %v5060 = vsel %vm194, %v5052, 0.0
    %5061 = vadd.xlane.f32.xlu0 %v5060
    %v5062 = vpop.xlane.xlu0 %5061
    %v5063 = vsel %vm194, %v5053, 0.0
    %5064 = vadd.xlane.f32.xlu0 %v5063
    %v5065 = vpop.xlane.xlu0 %5064
    %v5066 = vsel %vm194, %v5054, 0.0
    %5067 = vadd.xlane.f32.xlu0 %v5066
    %v5068 = vpop.xlane.xlu0 %5067
    %v5069 = vmul.f32 %v5059, %v207
    %v5070 = vmul.f32 %v5062, %v207
    %v5071 = vmul.f32 %v5065, %v207
    %v5072 = vmul.f32 %v5068, %v207
    %v5073 = vsub.f32 %v5051, %v5069
    %v5074 = vsub.f32 %v5052, %v5070
    %v5075 = vsub.f32 %v5053, %v5071
    %v5076 = vsub.f32 %v5054, %v5072
    %v5077 = vmul.f32 %v5073, %v5073
    %v5078 = vmul.f32 %v5074, %v5074
    %v5079 = vmul.f32 %v5075, %v5075
    %v5080 = vmul.f32 %v5076, %v5076
    %v5081 = vsel %vm194, %v5077, 0.0
    %5082 = vadd.xlane.f32.xlu0 %v5081
    %v5083 = vpop.xlane.xlu0 %5082
    %v5084 = vsel %vm194, %v5078, 0.0
    %5085 = vadd.xlane.f32.xlu0 %v5084
    %v5086 = vpop.xlane.xlu0 %5085
    %v5087 = vsel %vm194, %v5079, 0.0
    %5088 = vadd.xlane.f32.xlu0 %v5087
    %v5089 = vpop.xlane.xlu0 %5088
    %v5090 = vsel %vm194, %v5080, 0.0
    %5091 = vadd.xlane.f32.xlu0 %v5090
    %v5092 = vpop.xlane.xlu0 %5091
    %v5093 = vmul.f32 %v5083, %v207
    %v5094 = vmul.f32 %v5086, %v207
    %v5095 = vmul.f32 %v5089, %v207
    %v5096 = vmul.f32 %v5092, %v207
    %v5097 = vadd.f32 %v5093, 1e-05
    %v5098 = vadd.f32 %v5094, 1e-05
    %v5099 = vadd.f32 %v5095, 1e-05
    %v5100 = vadd.f32 %v5096, 1e-05
    %v5101 = vrsqrt.pop %v5097
    %v5102 = vrsqrt.pop %v5098
    %v5103 = vrsqrt.pop %v5099
    %v5104 = vrsqrt.pop %v5100
    %v5105 = vmul.f32 %v5073, %v5101
    %v5106 = vmul.f32 %v5074, %v5102
    %v5107 = vmul.f32 %v5075, %v5103
    %v5108 = vmul.f32 %v5076, %v5104
    %v5109 = vlaneseq
    %v5110 = vshrl.u32 %v5109, 7
    %v5111 = vsub.s32 0, %v5110
    %v5112 = vrot.slane %v5055, %v5111
    %v5113 = vmul.f32 %v5105, %v5112
    %v5114 = vmul.f32 %v5106, %v5112
    %v5115 = vmul.f32 %v5107, %v5112
    %v5116 = vmul.f32 %v5108, %v5112
    %v5117 = vlaneseq
    %v5118 = vshrl.u32 %v5117, 7
    %v5119 = vsub.s32 0, %v5118
    %v5120 = vrot.slane %v5056, %v5119
    %v5121 = vadd.f32 %v5113, %v5120
    %v5122 = vadd.f32 %v5114, %v5120
    %v5123 = vadd.f32 %v5115, %v5120
    %v5124 = vadd.f32 %v5116, %v5120
    %s5125 = scalar_lea.vmem %s5, 32
    %v5126 = vld [vmem:[%s5125] sm:$0xff]
    %v5127 = vld [vmem:[%s5125 + $0x8] sm:$0xff]
    %v5128 = vld [vmem:[%s5125 + $0x10] sm:$0xff]
    %v5129 = vld [vmem:[%s5125 + $0x18] sm:$0xff]
    %v5130 = vld [vmem:[%s8 + $0xc] sm:$0x1]
    %v5131 = vlaneseq
    %v5132 = vshrl.u32 %v5131, 7
    %v5133 = vsub.s32 0, %v5132
    %v5134 = vrot.slane %v5130, %v5133
    %v5136 = vsel %vm194, %v5121, 0
    %v5139 = vsel %vm194, %v5122, 0
    %v5142 = vsel %vm194, %v5123, 0
    %v5145 = vsel %vm194, %v5124, 0
    %5147 = vmatprep.subr.mxu0 0.0
    %5148 = vmatpush1.msra.mxu0 0.0
    %5149 = vmatprep.subr.mxu0 0.0
    %5150 = vmatpush1.msra.mxu0 0.0
    %5151 = vmatprep.subr.mxu0 0.0
    %5152 = vmatpush1.msra.mxu0 0.0
    %5153 = vmatprep.subr.mxu0 0.0
    %5154 = vmatpush1.msra.mxu0 0.0
    %5155 = vmatprep.subr.mxu0 0.0
    %5156 = vmatpush1.msra.mxu0 0.0
    %5157 = vmatprep.subr.mxu0 0.0
    %5158 = vmatpush1.msra.mxu0 0.0
    %5159 = vmatprep.subr.mxu0 0.0
    %5160 = vmatpush1.msra.mxu0 0.0
    %5161 = vmatprep.subr.mxu0 0.0
    %5162 = vmatpush1.msra.mxu0 0.0
    %5163 = vmatprep.subr.mxu0 0.0
    %5164 = vmatpush1.msra.mxu0 0.0
    %5165 = vmatprep.subr.mxu0 0.0
    %5166 = vmatpush1.msra.mxu0 0.0
    %5167 = vmatprep.subr.mxu0 0.0
    %5168 = vmatpush1.msra.mxu0 0.0
    %5169 = vmatprep.subr.mxu0 0.0
    %5170 = vmatpush1.msra.mxu0 0.0
    %5171 = vmatprep.subr.mxu0 0.0
    %5172 = vmatpush1.msra.mxu0 %v5129
    %5173 = vmatprep.subr.mxu0 0.0
    %5174 = vmatpush1.msra.mxu0 %v5128
    %5175 = vmatprep.subr.mxu0 0.0
    %5176 = vmatpush1.msra.mxu0 %v5127
    %5177 = vmatprep.subr.mxu0 0.0
    %5178 = vmatpush1.msra.mxu0 %v5126
    %5179 = vmatprep.subr.mxu0 0.0
    %5180 = vmatpush2.msra.mxu0 0.0
    %5181 = vmatprep.subr.mxu0 0.0
    %5182 = vmatpush2.msra.mxu0 0.0
    %5183 = vmatprep.subr.mxu0 0.0
    %5184 = vmatpush2.msra.mxu0 0.0
    %5185 = vmatprep.subr.mxu0 0.0
    %5186 = vmatpush2.msra.mxu0 0.0
    %5187 = vmatprep.subr.mxu0 0.0
    %5188 = vmatpush2.msra.mxu0 0.0
    %5189 = vmatprep.subr.mxu0 0.0
    %5190 = vmatpush2.msra.mxu0 0.0
    %5191 = vmatprep.subr.mxu0 0.0
    %5192 = vmatpush2.msra.mxu0 0.0
    %5193 = vmatprep.subr.mxu0 0.0
    %5194 = vmatpush2.msra.mxu0 0.0
    %5195 = vmatprep.subr.mxu0 0.0
    %5196 = vmatpush2.msra.mxu0 0.0
    %5197 = vmatprep.subr.mxu0 0.0
    %5198 = vmatpush2.msra.mxu0 0.0
    %5199 = vmatprep.subr.mxu0 0.0
    %5200 = vmatpush2.msra.mxu0 0.0
    %5201 = vmatprep.subr.mxu0 0.0
    %5202 = vmatpush2.msra.mxu0 0.0
    %5203 = vmatprep.subr.mxu0 0.0
    %5204 = vmatpush2.msra.mxu0 0.0
    %5205 = vmatprep.subr.mxu0 0.0
    %5206 = vmatpush2.msra.mxu0 0.0
    %5207 = vmatprep.subr.mxu0 0.0
    %5208 = vmatpush2.msra.mxu0 0.0
    %5209 = vmatprep.subr.mxu0 0.0
    %5210 = vmatpush2.msra.mxu0 0.0
    %5211 = vmatprep.mubr.f32.mxu0 0.0
    %5212 = vmatmul.mubr.f32.gmra.mxu0 %v5136
    %v5213 = vpop.f32.mrf.mxu0
    %v5214 = vadd.f32 %v5134, %v5213
    %v5215 = vpop.f32.mrf.mxu0
    %5216 = vmatprep.mubr.f32.mxu0 0.0
    %5217 = vmatmul.mubr.f32.gmra.mxu0 %v5139
    %v5218 = vpop.f32.mrf.mxu0
    %v5219 = vadd.f32 %v5134, %v5218
    %v5220 = vpop.f32.mrf.mxu0
    %5221 = vmatprep.mubr.f32.mxu0 0.0
    %5222 = vmatmul.mubr.f32.gmra.mxu0 %v5142
    %v5223 = vpop.f32.mrf.mxu0
    %v5224 = vadd.f32 %v5134, %v5223
    %v5225 = vpop.f32.mrf.mxu0
    %5226 = vmatprep.mubr.f32.mxu0 0.0
    %5227 = vmatmul.mubr.f32.gmra.mxu0 %v5145
    %v5228 = vpop.f32.mrf.mxu0
    %v5229 = vadd.f32 %v5134, %v5228
    %v5230 = vpop.f32.mrf.mxu0
    %5231 = vdwg.mxu0
    %v5232 = vmax.f32 %v5214, 0.0
    %v5233 = vmax.f32 %v5219, 0.0
    %v5234 = vmax.f32 %v5224, 0.0
    %v5235 = vmax.f32 %v5229, 0.0
    %s5236 = scalar_lea.vmem %s6, 128
    %v5237 = vld [vmem:[%s5236] sm:$0xff]
    %v5238 = vld [vmem:[%s5236 + $0x8] sm:$0xff]
    %v5239 = vld [vmem:[%s5236 + $0x10] sm:$0xff]
    %v5240 = vld [vmem:[%s5236 + $0x18] sm:$0xff]
    %v5241 = vld [vmem:[%s5236 + $0x20] sm:$0xff]
    %v5242 = vld [vmem:[%s5236 + $0x28] sm:$0xff]
    %v5243 = vld [vmem:[%s5236 + $0x30] sm:$0xff]
    %v5244 = vld [vmem:[%s5236 + $0x38] sm:$0xff]
    %v5245 = vld [vmem:[%s5236 + $0x40] sm:$0xff]
    %v5246 = vld [vmem:[%s5236 + $0x48] sm:$0xff]
    %v5247 = vld [vmem:[%s5236 + $0x50] sm:$0xff]
    %v5248 = vld [vmem:[%s5236 + $0x58] sm:$0xff]
    %v5249 = vld [vmem:[%s5236 + $0x60] sm:$0xff]
    %v5250 = vld [vmem:[%s5236 + $0x68] sm:$0xff]
    %v5251 = vld [vmem:[%s5236 + $0x70] sm:$0xff]
    %v5252 = vld [vmem:[%s5236 + $0x78] sm:$0xff]
    %5253 = vmatprep.subr.mxu0 0.0
    %5254 = vmatpush1.msra.mxu0 %v5252
    %5255 = vmatprep.subr.mxu0 0.0
    %5256 = vmatpush1.msra.mxu0 %v5251
    %5257 = vmatprep.subr.mxu0 0.0
    %5258 = vmatpush1.msra.mxu0 %v5250
    %5259 = vmatprep.subr.mxu0 0.0
    %5260 = vmatpush1.msra.mxu0 %v5249
    %5261 = vmatprep.subr.mxu0 0.0
    %5262 = vmatpush1.msra.mxu0 %v5248
    %5263 = vmatprep.subr.mxu0 0.0
    %5264 = vmatpush1.msra.mxu0 %v5247
    %5265 = vmatprep.subr.mxu0 0.0
    %5266 = vmatpush1.msra.mxu0 %v5246
    %5267 = vmatprep.subr.mxu0 0.0
    %5268 = vmatpush1.msra.mxu0 %v5245
    %5269 = vmatprep.subr.mxu0 0.0
    %5270 = vmatpush1.msra.mxu0 %v5244
    %5271 = vmatprep.subr.mxu0 0.0
    %5272 = vmatpush1.msra.mxu0 %v5243
    %5273 = vmatprep.subr.mxu0 0.0
    %5274 = vmatpush1.msra.mxu0 %v5242
    %5275 = vmatprep.subr.mxu0 0.0
    %5276 = vmatpush1.msra.mxu0 %v5241
    %5277 = vmatprep.subr.mxu0 0.0
    %5278 = vmatpush1.msra.mxu0 %v5240
    %5279 = vmatprep.subr.mxu0 0.0
    %5280 = vmatpush1.msra.mxu0 %v5239
    %5281 = vmatprep.subr.mxu0 0.0
    %5282 = vmatpush1.msra.mxu0 %v5238
    %5283 = vmatprep.subr.mxu0 0.0
    %5284 = vmatpush1.msra.mxu0 %v5237
    %5285 = vmatprep.subr.mxu0 0.0
    %5286 = vmatpush2.msra.mxu0 0.0
    %5287 = vmatprep.subr.mxu0 0.0
    %5288 = vmatpush2.msra.mxu0 0.0
    %5289 = vmatprep.subr.mxu0 0.0
    %5290 = vmatpush2.msra.mxu0 0.0
    %5291 = vmatprep.subr.mxu0 0.0
    %5292 = vmatpush2.msra.mxu0 0.0
    %5293 = vmatprep.subr.mxu0 0.0
    %5294 = vmatpush2.msra.mxu0 0.0
    %5295 = vmatprep.subr.mxu0 0.0
    %5296 = vmatpush2.msra.mxu0 0.0
    %5297 = vmatprep.subr.mxu0 0.0
    %5298 = vmatpush2.msra.mxu0 0.0
    %5299 = vmatprep.subr.mxu0 0.0
    %5300 = vmatpush2.msra.mxu0 0.0
    %5301 = vmatprep.subr.mxu0 0.0
    %5302 = vmatpush2.msra.mxu0 0.0
    %5303 = vmatprep.subr.mxu0 0.0
    %5304 = vmatpush2.msra.mxu0 0.0
    %5305 = vmatprep.subr.mxu0 0.0
    %5306 = vmatpush2.msra.mxu0 0.0
    %5307 = vmatprep.subr.mxu0 0.0
    %5308 = vmatpush2.msra.mxu0 0.0
    %5309 = vmatprep.subr.mxu0 0.0
    %5310 = vmatpush2.msra.mxu0 0.0
    %5311 = vmatprep.subr.mxu0 0.0
    %5312 = vmatpush2.msra.mxu0 0.0
    %5313 = vmatprep.subr.mxu0 0.0
    %5314 = vmatpush2.msra.mxu0 0.0
    %5315 = vmatprep.subr.mxu0 0.0
    %5316 = vmatpush2.msra.mxu0 0.0
    %5317 = vmatprep.mubr.f32.mxu0 0.0
    %5318 = vmatmul.mubr.f32.gmra.mxu0 %v5232
    %v5319 = vpop.f32.mrf.mxu0
    %v5320 = vadd.f32 0.0, %v5319
    %v5321 = vpop.f32.mrf.mxu0
    %5322 = vmatprep.mubr.f32.mxu0 0.0
    %5323 = vmatmul.mubr.f32.gmra.mxu0 %v5233
    %v5324 = vpop.f32.mrf.mxu0
    %v5325 = vadd.f32 0.0, %v5324
    %v5326 = vpop.f32.mrf.mxu0
    %5327 = vmatprep.mubr.f32.mxu0 0.0
    %5328 = vmatmul.mubr.f32.gmra.mxu0 %v5234
    %v5329 = vpop.f32.mrf.mxu0
    %v5330 = vadd.f32 0.0, %v5329
    %v5331 = vpop.f32.mrf.mxu0
    %5332 = vmatprep.mubr.f32.mxu0 0.0
    %5333 = vmatmul.mubr.f32.gmra.mxu0 %v5235
    %v5334 = vpop.f32.mrf.mxu0
    %v5335 = vadd.f32 0.0, %v5334
    %v5336 = vpop.f32.mrf.mxu0
    %5337 = vdwg.mxu0
    %v5338 = vadd.f32 %v5051, %v5320
    %v5339 = vadd.f32 %v5052, %v5325
    %v5340 = vadd.f32 %v5053, %v5330
    %v5341 = vadd.f32 %v5054, %v5335
    %v5342 = vld [vmem:[%s8 + $0xd] sm:$0x1]
    %v5343 = vlaneseq
    %v5344 = vshrl.u32 %v5343, 7
    %v5345 = vsub.s32 0, %v5344
    %v5346 = vrot.slane %v5342, %v5345
    %v5347 = vadd.f32 %v5338, %v5346
    %v5348 = vadd.f32 %v5339, %v5346
    %v5349 = vadd.f32 %v5340, %v5346
    %v5350 = vadd.f32 %v5341, %v5346
    %v5351 = vld [vmem:[%s8 + $0xe] sm:$0x1]
    %v5352 = vld [vmem:[%s8 + $0xf] sm:$0x1]
    %v5353 = vsel %vm194, %v5347, 0.0
    %5354 = vadd.xlane.f32.xlu0 %v5353
    %v5355 = vpop.xlane.xlu0 %5354
    %v5356 = vsel %vm194, %v5348, 0.0
    %5357 = vadd.xlane.f32.xlu0 %v5356
    %v5358 = vpop.xlane.xlu0 %5357
    %v5359 = vsel %vm194, %v5349, 0.0
    %5360 = vadd.xlane.f32.xlu0 %v5359
    %v5361 = vpop.xlane.xlu0 %5360
    %v5362 = vsel %vm194, %v5350, 0.0
    %5363 = vadd.xlane.f32.xlu0 %v5362
    %v5364 = vpop.xlane.xlu0 %5363
    %v5365 = vmul.f32 %v5355, %v207
    %v5366 = vmul.f32 %v5358, %v207
    %v5367 = vmul.f32 %v5361, %v207
    %v5368 = vmul.f32 %v5364, %v207
    %v5369 = vsub.f32 %v5347, %v5365
    %v5370 = vsub.f32 %v5348, %v5366
    %v5371 = vsub.f32 %v5349, %v5367
    %v5372 = vsub.f32 %v5350, %v5368
    %v5373 = vmul.f32 %v5369, %v5369
    %v5374 = vmul.f32 %v5370, %v5370
    %v5375 = vmul.f32 %v5371, %v5371
    %v5376 = vmul.f32 %v5372, %v5372
    %v5377 = vsel %vm194, %v5373, 0.0
    %5378 = vadd.xlane.f32.xlu0 %v5377
    %v5379 = vpop.xlane.xlu0 %5378
    %v5380 = vsel %vm194, %v5374, 0.0
    %5381 = vadd.xlane.f32.xlu0 %v5380
    %v5382 = vpop.xlane.xlu0 %5381
    %v5383 = vsel %vm194, %v5375, 0.0
    %5384 = vadd.xlane.f32.xlu0 %v5383
    %v5385 = vpop.xlane.xlu0 %5384
    %v5386 = vsel %vm194, %v5376, 0.0
    %5387 = vadd.xlane.f32.xlu0 %v5386
    %v5388 = vpop.xlane.xlu0 %5387
    %v5389 = vmul.f32 %v5379, %v207
    %v5390 = vmul.f32 %v5382, %v207
    %v5391 = vmul.f32 %v5385, %v207
    %v5392 = vmul.f32 %v5388, %v207
    %v5393 = vadd.f32 %v5389, 1e-05
    %v5394 = vadd.f32 %v5390, 1e-05
    %v5395 = vadd.f32 %v5391, 1e-05
    %v5396 = vadd.f32 %v5392, 1e-05
    %v5397 = vrsqrt.pop %v5393
    %v5398 = vrsqrt.pop %v5394
    %v5399 = vrsqrt.pop %v5395
    %v5400 = vrsqrt.pop %v5396
    %v5401 = vmul.f32 %v5369, %v5397
    %v5402 = vmul.f32 %v5370, %v5398
    %v5403 = vmul.f32 %v5371, %v5399
    %v5404 = vmul.f32 %v5372, %v5400
    %v5405 = vlaneseq
    %v5406 = vshrl.u32 %v5405, 7
    %v5407 = vsub.s32 0, %v5406
    %v5408 = vrot.slane %v5351, %v5407
    %v5409 = vmul.f32 %v5401, %v5408
    %v5410 = vmul.f32 %v5402, %v5408
    %v5411 = vmul.f32 %v5403, %v5408
    %v5412 = vmul.f32 %v5404, %v5408
    %v5413 = vlaneseq
    %v5414 = vshrl.u32 %v5413, 7
    %v5415 = vsub.s32 0, %v5414
    %v5416 = vrot.slane %v5352, %v5415
    %v5417 = vadd.f32 %v5409, %v5416
    %v5418 = vadd.f32 %v5410, %v5416
    %v5419 = vadd.f32 %v5411, %v5416
    %v5420 = vadd.f32 %v5412, %v5416
    %v5421 = vld [vmem:[%s7] sm:$0xff]
    %v5422 = vld [vmem:[%s7 + $0x8] sm:$0xff]
    %v5423 = vld [vmem:[%s7 + $0x10] sm:$0xff]
    %v5424 = vld [vmem:[%s7 + $0x18] sm:$0xff]
    %v5425 = vld [vmem:[%s8 + $0x10] sm:$0x1]
    %v5426 = vlaneseq
    %v5427 = vshrl.u32 %v5426, 7
    %v5428 = vsub.s32 0, %v5427
    %v5429 = vrot.slane %v5425, %v5428
    %v5431 = vsel %vm194, %v5417, 0
    %v5434 = vsel %vm194, %v5418, 0
    %v5437 = vsel %vm194, %v5419, 0
    %v5440 = vsel %vm194, %v5420, 0
    %5442 = vmatprep.subr.mxu0 0.0
    %5443 = vmatpush1.msra.mxu0 0.0
    %5444 = vmatprep.subr.mxu0 0.0
    %5445 = vmatpush1.msra.mxu0 0.0
    %5446 = vmatprep.subr.mxu0 0.0
    %5447 = vmatpush1.msra.mxu0 0.0
    %5448 = vmatprep.subr.mxu0 0.0
    %5449 = vmatpush1.msra.mxu0 0.0
    %5450 = vmatprep.subr.mxu0 0.0
    %5451 = vmatpush1.msra.mxu0 0.0
    %5452 = vmatprep.subr.mxu0 0.0
    %5453 = vmatpush1.msra.mxu0 0.0
    %5454 = vmatprep.subr.mxu0 0.0
    %5455 = vmatpush1.msra.mxu0 0.0
    %5456 = vmatprep.subr.mxu0 0.0
    %5457 = vmatpush1.msra.mxu0 0.0
    %5458 = vmatprep.subr.mxu0 0.0
    %5459 = vmatpush1.msra.mxu0 0.0
    %5460 = vmatprep.subr.mxu0 0.0
    %5461 = vmatpush1.msra.mxu0 0.0
    %5462 = vmatprep.subr.mxu0 0.0
    %5463 = vmatpush1.msra.mxu0 0.0
    %5464 = vmatprep.subr.mxu0 0.0
    %5465 = vmatpush1.msra.mxu0 0.0
    %5466 = vmatprep.subr.mxu0 0.0
    %5467 = vmatpush1.msra.mxu0 %v5424
    %5468 = vmatprep.subr.mxu0 0.0
    %5469 = vmatpush1.msra.mxu0 %v5423
    %5470 = vmatprep.subr.mxu0 0.0
    %5471 = vmatpush1.msra.mxu0 %v5422
    %5472 = vmatprep.subr.mxu0 0.0
    %5473 = vmatpush1.msra.mxu0 %v5421
    %5474 = vmatprep.subr.mxu0 0.0
    %5475 = vmatpush2.msra.mxu0 0.0
    %5476 = vmatprep.subr.mxu0 0.0
    %5477 = vmatpush2.msra.mxu0 0.0
    %5478 = vmatprep.subr.mxu0 0.0
    %5479 = vmatpush2.msra.mxu0 0.0
    %5480 = vmatprep.subr.mxu0 0.0
    %5481 = vmatpush2.msra.mxu0 0.0
    %5482 = vmatprep.subr.mxu0 0.0
    %5483 = vmatpush2.msra.mxu0 0.0
    %5484 = vmatprep.subr.mxu0 0.0
    %5485 = vmatpush2.msra.mxu0 0.0
    %5486 = vmatprep.subr.mxu0 0.0
    %5487 = vmatpush2.msra.mxu0 0.0
    %5488 = vmatprep.subr.mxu0 0.0
    %5489 = vmatpush2.msra.mxu0 0.0
    %5490 = vmatprep.subr.mxu0 0.0
    %5491 = vmatpush2.msra.mxu0 0.0
    %5492 = vmatprep.subr.mxu0 0.0
    %5493 = vmatpush2.msra.mxu0 0.0
    %5494 = vmatprep.subr.mxu0 0.0
    %5495 = vmatpush2.msra.mxu0 0.0
    %5496 = vmatprep.subr.mxu0 0.0
    %5497 = vmatpush2.msra.mxu0 0.0
    %5498 = vmatprep.subr.mxu0 0.0
    %5499 = vmatpush2.msra.mxu0 0.0
    %5500 = vmatprep.subr.mxu0 0.0
    %5501 = vmatpush2.msra.mxu0 0.0
    %5502 = vmatprep.subr.mxu0 0.0
    %5503 = vmatpush2.msra.mxu0 0.0
    %5504 = vmatprep.subr.mxu0 0.0
    %5505 = vmatpush2.msra.mxu0 0.0
    %5506 = vmatprep.mubr.f32.mxu0 0.0
    %5507 = vmatmul.mubr.f32.gmra.mxu0 %v5431
    %v5508 = vpop.f32.mrf.mxu0
    %v5509 = vadd.f32 %v5429, %v5508
    %v5510 = vpop.f32.mrf.mxu0
    %5511 = vmatprep.mubr.f32.mxu0 0.0
    %5512 = vmatmul.mubr.f32.gmra.mxu0 %v5434
    %v5513 = vpop.f32.mrf.mxu0
    %v5514 = vadd.f32 %v5429, %v5513
    %v5515 = vpop.f32.mrf.mxu0
    %5516 = vmatprep.mubr.f32.mxu0 0.0
    %5517 = vmatmul.mubr.f32.gmra.mxu0 %v5437
    %v5518 = vpop.f32.mrf.mxu0
    %v5519 = vadd.f32 %v5429, %v5518
    %v5520 = vpop.f32.mrf.mxu0
    %5521 = vmatprep.mubr.f32.mxu0 0.0
    %5522 = vmatmul.mubr.f32.gmra.mxu0 %v5440
    %v5523 = vpop.f32.mrf.mxu0
    %v5524 = vadd.f32 %v5429, %v5523
    %v5525 = vpop.f32.mrf.mxu0
    %5526 = vdwg.mxu0
    %5527 = vst [vmem:[#allocation2] sm:$0xff] %v5509
    %5528 = vst [vmem:[#allocation2 + $0x8] sm:$0xff] %v5514
    %5529 = vst [vmem:[#allocation2 + $0x10] sm:$0xff] %v5519
    %5530 = vst [vmem:[#allocation2 + $0x18] sm:$0xff] %v5524
    // Predicated region
    $region38: #{forward.1} parent=1 // pred_check
      _
    $region39: #{forward.1} parent=1 // pred_check_branch
      %5532 = sbr.rel (0) target = $region41
    $region40: #{forward.1} parent=1 // pred_region
      %s5534 = ssub.s32 512, 512
      %5535 = vsyncadd [#allocation3], %s5534
      %s5536 = sshll.u32 [#allocation2], 4
      %s5537 = int_to_ptr.vmem [resolvable:$true] %s5536
      %5542 = dma.vmem_to_hbm [thread:$0]  %s5537, 512, %s9, [#allocation3], 128, 128, 8
    $region41: #{forward.1} parent=1 // pred_fallthru
      _
    // Predicated region
    $region42: #{forward.1} parent=1 // pred_check
      _
    $region43: #{forward.1} parent=1 // pred_check_branch
      %5544 = sbr.rel (0) target = $region45
    $region44: #{forward.1} parent=1 // pred_region
      %5545 = dma.done [#allocation3], 512
    $region45: #{forward.1} parent=1 // pred_fallthru
      _
    %5546 = vsyncpa [#allocation3], 1

</llo_original>
